<compile_context>
chip_gen: v7x
topology: tpu7x:2x2x1
jax: 0.10.0
libtpu: 0.0.40
codegen_flags: <defaults>
</compile_context>

<pallas_src>
import math

import jax
import jax.numpy as jnp
from jax import lax
from jax.experimental import pallas as pl
from jax.experimental.pallas import tpu as pltpu

# ----------------------------- small config ---------------------------------
BATCH = 2
SEQ = 32                      # must be > 29 so indices [17..29] exist
HIDDEN = 32                   # (real ERNIE uses 768)
NUM_HEADS = 2
HEAD_DIM = HIDDEN // NUM_HEADS
QH = NUM_HEADS * HEAD_DIM     # 32
FFN = 64
NUM_LAYERS = 2
NUM_LN = 1 + 2 * NUM_LAYERS   # emb LN + (post-attn, post-ffn) per layer
VOCAB = 50
SEL_IDX = (17, 19, 21, 23, 25, 27, 29)
NUM_SEL = len(SEL_IDX)
LN_EPS = 1e-12
NEG_INF = -1e9


# ------------------------------- kernel -------------------------------------
def _ln(x, idx, lnp_ref):
    """LayerNorm with packed gamma/beta: lnp[0, idx] = gamma, lnp[1, idx] = beta."""
    g = lnp_ref[0, idx]                           # [1, H]
    b = lnp_ref[1, idx]                           # [1, H]
    mu = jnp.mean(x, axis=-1, keepdims=True)
    var = jnp.mean((x - mu) ** 2, axis=-1, keepdims=True)
    return (x - mu) * lax.rsqrt(var + LN_EPS) * g + b


def ernie_mrc_kernel(x_ref, bias_ref, lnp_ref,
                     wqkv_ref, bqkv_ref, wo_ref, bout_ref,
                     w1_ref, b1_ref, w2_ref,
                     wqa0_ref, sel_ref,
                     out_ref):
    x = x_ref[...]                                # [B*S, H]  (batch folded into rows)
    bias = bias_ref[...]                          # [B*S, B*S] block-diag + key-mask bias
    x = _ln(x, 0, lnp_ref)

    scale = 1.0 / math.sqrt(HEAD_DIM)
    for l in range(NUM_LAYERS):
        # Fused QKV: one MXU push per layer, one bias broadcast.
        qkv = (jnp.dot(x, wqkv_ref[l], preferred_element_type=jnp.float32)
               + bqkv_ref[l])                     # [B*S, 3*QH]
        ctxs = []
        for h in range(NUM_HEADS):
            q = qkv[:, h * HEAD_DIM:(h + 1) * HEAD_DIM]
            k = qkv[:, QH + h * HEAD_DIM:QH + (h + 1) * HEAD_DIM]
            v = qkv[:, 2 * QH + h * HEAD_DIM:2 * QH + (h + 1) * HEAD_DIM]
            # scores = q @ k^T (contract last dims; no explicit transpose)
            s = lax.dot_general(q, k, (((1,), (1,)), ((), ())),
                                preferred_element_type=jnp.float32)
            s = s * scale + bias                  # [B*S, B*S]
            m = jnp.max(s, axis=-1, keepdims=True)
            p = jnp.exp(s - m)
            inv = pl.reciprocal(jnp.sum(p, axis=-1, keepdims=True), approx=True)
            p = p * inv
            ctxs.append(jnp.dot(p, v, preferred_element_type=jnp.float32))   # [B*S, HD]
        ctx = jnp.concatenate(ctxs, axis=-1)      # [B*S, QH]
        attn = (jnp.dot(ctx, wo_ref[l], preferred_element_type=jnp.float32)
                + bout_ref[0, l])
        x = _ln(x + attn, 1 + 2 * l, lnp_ref)

        h1 = jax.nn.gelu(jnp.dot(x, w1_ref[l], preferred_element_type=jnp.float32)
                         + b1_ref[l], approximate=True)
        ff = jnp.dot(h1, w2_ref[l], preferred_element_type=jnp.float32) + bout_ref[1, l]
        x = _ln(x + ff, 2 + 2 * l, lnp_ref)

    # QA head + gather + log-softmax (lane-dense output [B, NUM_SEL]).
    # Gather the 7 selected tokens first, then project with the start column.
    # The QA start bias is a constant over the selected logits and cancels in
    # log-softmax, so it is not applied here.
    rows = []
    for b in range(BATCH):
        xb = x[b * SEQ:(b + 1) * SEQ, :]                                       # [S, H]
        sel_x = jnp.dot(sel_ref[...], xb, preferred_element_type=jnp.float32)  # [7, H]
        logits = lax.dot_general(wqa0_ref[...], sel_x, (((1,), (1,)), ((), ())),
                                 preferred_element_type=jnp.float32)           # [1, 7]
        m = jnp.max(logits, axis=-1, keepdims=True)
        z = logits - m
        lse = jnp.log(jnp.sum(jnp.exp(z), axis=-1, keepdims=True))
        rows.append(z - lse)
    out_ref[...] = jnp.concatenate(rows, axis=0)                               # [B, 7]


# ------------------------------ wrapper --------------------------------------
def ernie_mrc_forward(input_ids, token_type_ids, attention_mask, params):
    B, S = input_ids.shape
    # Embedding lookups (data-dependent gathers) stay in plain JAX glue.
    x_emb = (params["word_emb"][input_ids]
             + params["pos_emb"][jnp.arange(S)][None, :, :]
             + params["type_emb"][token_type_ids]).astype(jnp.float32)
    x_flat = x_emb.reshape(B * S, HIDDEN)

    # Additive attention bias over the folded [B*S, B*S] score matrix:
    # cross-batch pairs and masked key tokens get -1e9.
    att = attention_mask.astype(jnp.float32).reshape(-1)          # [B*S] key mask
    batch_ids = jnp.repeat(jnp.arange(B), S)                      # [B*S]
    same_batch = (batch_ids[:, None] == batch_ids[None, :]).astype(jnp.float32)
    allowed = same_batch * att[None, :]
    bias_full = (1.0 - allowed) * NEG_INF                         # [B*S, B*S]

    args = (x_flat, bias_full, params["lnp"],
            params["wqkv"], params["bqkv"], params["wo"], params["bout"],
            params["w1"], params["b1"], params["w2"],
            params["wqa0"], params["sel_onehot"])

    def full(shape):
        return pl.BlockSpec(shape, lambda i, _n=len(shape): (0,) * _n)

    in_specs = [full(a.shape) for a in args]

    out = pl.pallas_call(
        ernie_mrc_kernel,
        out_shape=jax.ShapeDtypeStruct((B, NUM_SEL), jnp.float32),
        grid_spec=pltpu.PrefetchScalarGridSpec(
            num_scalar_prefetch=0,
            grid=(1,),
            in_specs=in_specs,
            out_specs=pl.BlockSpec((B, NUM_SEL), lambda i: (0, 0)),
        ),
        compiler_params=pltpu.CompilerParams(dimension_semantics=("arbitrary",)),
    )(*args)
    # The PyTorch module returns the same tensor twice.
    return out, out


# ------------------------- params / reference --------------------------------
def init_params(key):
    keys = iter(jax.random.split(key, 20))

    def n(shape, s=0.02):
        return jax.random.normal(next(keys), shape, jnp.float32) * s

    sel_onehot = jnp.zeros((NUM_SEL, SEQ), jnp.float32)
    sel_onehot = sel_onehot.at[jnp.arange(NUM_SEL), jnp.array(SEL_IDX)].set(1.0)

    # Packed LayerNorm params: lnp[0] = gammas, lnp[1] = betas, [2, NUM_LN, 1, H]
    lng = 1.0 + n((NUM_LN, 1, HIDDEN), 0.05)
    lnb = n((NUM_LN, 1, HIDDEN), 0.05)
    lnp = jnp.stack([lng, lnb], axis=0)

    wqa = n((HIDDEN, 2))
    bqa = n((1, 2))

    params = dict(
        word_emb=n((VOCAB, HIDDEN)),
        pos_emb=n((SEQ, HIDDEN)),
        type_emb=n((2, HIDDEN)),
        lnp=lnp,
        # Fused QKV weights/biases: columns [Q_h0|Q_h1|K_h0|K_h1|V_h0|V_h1].
        wqkv=n((NUM_LAYERS, HIDDEN, 3 * QH)),
        bqkv=n((NUM_LAYERS, 1, 3 * QH)),
        wo=n((NUM_LAYERS, QH, HIDDEN)),
        # Packed output-proj / FFN-out biases: bout[0,l]=attn-out, bout[1,l]=ffn-out.
        bout=n((2, NUM_LAYERS, 1, HIDDEN)),
        w1=n((NUM_LAYERS, HIDDEN, FFN)),
        b1=n((NUM_LAYERS, 1, FFN)),
        w2=n((NUM_LAYERS, FFN, HIDDEN)),
        wqa=wqa, bqa=bqa,
        wqa0=wqa[:, 0].reshape(1, HIDDEN),      # start-logit column, row-major
        sel_onehot=sel_onehot,
    )
    return {k: v.astype(jnp.float32) for k, v in params.items()}


def reference_forward(input_ids, token_type_ids, attention_mask, params):
    """Pure-jnp reference of the same synthetic ERNIE-QA forward."""
    B, S = input_ids.shape
    x = (params["word_emb"][input_ids]
         + params["pos_emb"][jnp.arange(S)][None]
         + params["type_emb"][token_type_ids])
    bias = ((1.0 - attention_mask.astype(jnp.float32)) * NEG_INF)[:, None, None, :]

    def ln(x, idx):
        g = params["lnp"][0, idx, 0]
        b = params["lnp"][1, idx, 0]
        mu = jnp.mean(x, axis=-1, keepdims=True)
        var = jnp.mean((x - mu) ** 2, axis=-1, keepdims=True)
        return (x - mu) / jnp.sqrt(var + LN_EPS) * g + b

    x = ln(x, 0)
    scale = 1.0 / math.sqrt(HEAD_DIM)
    for l in range(NUM_LAYERS):
        qkv = x @ params["wqkv"][l] + params["bqkv"][l]            # [B, S, 3*QH]
        q = qkv[..., :QH].reshape(B, S, NUM_HEADS, HEAD_DIM)
        k = qkv[..., QH:2 * QH].reshape(B, S, NUM_HEADS, HEAD_DIM)
        v = qkv[..., 2 * QH:].reshape(B, S, NUM_HEADS, HEAD_DIM)
        s = jnp.einsum("bqnd,bknd->bnqk", q, k) * scale + bias
        p = jax.nn.softmax(s, axis=-1)
        ctx = jnp.einsum("bnqk,bknd->bqnd", p, v).reshape(B, S, QH)
        attn = ctx @ params["wo"][l] + params["bout"][0, l]
        x = ln(x + attn, 1 + 2 * l)
        h1 = jax.nn.gelu(x @ params["w1"][l] + params["b1"][l], approximate=True)
        x = ln(x + h1 @ params["w2"][l] + params["bout"][1, l], 2 + 2 * l)

    logits = x @ params["wqa"] + params["bqa"]        # [B, S, 2]
    start = logits[..., 0]                            # start_logits [B, S]
    sel = start[:, jnp.array(SEL_IDX)]                # [B, 7]
    return jax.nn.log_softmax(sel, axis=1)


# -------------------------------- main ---------------------------------------
if __name__ == "__main__":
    key = jax.random.PRNGKey(0)
    kp, ki = jax.random.split(key, 2)
    params = init_params(kp)

    input_ids = jax.random.randint(ki, (BATCH, SEQ), 0, VOCAB, dtype=jnp.int32)
    token_type_ids = jnp.concatenate(
        [jnp.zeros((BATCH, SEQ // 2), jnp.int32),
         jnp.ones((BATCH, SEQ // 2), jnp.int32)], axis=1)
    attention_mask = jnp.ones((BATCH, SEQ), jnp.int32).at[1, SEQ - 2:].set(0)

    out, out_again = ernie_mrc_forward(input_ids, token_type_ids, attention_mask, params)
    out = jax.block_until_ready(out)

    ref = reference_forward(input_ids, token_type_ids, attention_mask, params)
    assert out.shape == (BATCH, NUM_SEL)
    assert bool(jnp.allclose(out, ref, atol=1e-3, rtol=1e-3)), (out, ref)
    assert bool(jnp.allclose(jnp.sum(jnp.exp(out), axis=1), 1.0, atol=1e-4))
    print("KERNEL_OK")
</pallas_src>

<mosaic_0001>
module attributes {stable_mosaic.version = 11 : i64} {
  func.func @ernie_mrc_kernel(%arg0: i32, %arg1: memref<64x32xf32, #tpu.memory_space<vmem>>, %arg2: memref<64x64xf32, #tpu.memory_space<vmem>>, %arg3: memref<2x5x1x32xf32, #tpu.memory_space<vmem>>, %arg4: memref<2x32x96xf32, #tpu.memory_space<vmem>>, %arg5: memref<2x1x96xf32, #tpu.memory_space<vmem>>, %arg6: memref<2x32x32xf32, #tpu.memory_space<vmem>>, %arg7: memref<2x2x1x32xf32, #tpu.memory_space<vmem>>, %arg8: memref<2x32x64xf32, #tpu.memory_space<vmem>>, %arg9: memref<2x1x64xf32, #tpu.memory_space<vmem>>, %arg10: memref<2x64x32xf32, #tpu.memory_space<vmem>>, %arg11: memref<1x32xf32, #tpu.memory_space<vmem>>, %arg12: memref<7x32xf32, #tpu.memory_space<vmem>>, %arg13: memref<2x7xf32, #tpu.memory_space<vmem>>) attributes {dimension_semantics = [#tpu.dimension_semantics<arbitrary>], iteration_bounds = array<i64: 1>, scalar_prefetch = 0 : i64, scratch_operands = 0 : i64, tpu.core_type = #tpu.core_type<tc>, window_params = [{pipeline_mode = #tpu.pipeline_mode<synchronous>, transform_indices = @transform_0, window_bounds = array<i64: 64, 32>}, {pipeline_mode = #tpu.pipeline_mode<synchronous>, transform_indices = @transform_1, window_bounds = array<i64: 64, 64>}, {pipeline_mode = #tpu.pipeline_mode<synchronous>, transform_indices = @transform_2, window_bounds = array<i64: 2, 5, 1, 32>}, {pipeline_mode = #tpu.pipeline_mode<synchronous>, transform_indices = @transform_3, window_bounds = array<i64: 2, 32, 96>}, {pipeline_mode = #tpu.pipeline_mode<synchronous>, transform_indices = @transform_4, window_bounds = array<i64: 2, 1, 96>}, {pipeline_mode = #tpu.pipeline_mode<synchronous>, transform_indices = @transform_5, window_bounds = array<i64: 2, 32, 32>}, {pipeline_mode = #tpu.pipeline_mode<synchronous>, transform_indices = @transform_6, window_bounds = array<i64: 2, 2, 1, 32>}, {pipeline_mode = #tpu.pipeline_mode<synchronous>, transform_indices = @transform_7, window_bounds = array<i64: 2, 32, 64>}, {pipeline_mode = #tpu.pipeline_mode<synchronous>, transform_indices = @transform_8, window_bounds = array<i64: 2, 1, 64>}, {pipeline_mode = #tpu.pipeline_mode<synchronous>, transform_indices = @transform_9, window_bounds = array<i64: 2, 64, 32>}, {pipeline_mode = #tpu.pipeline_mode<synchronous>, transform_indices = @transform_10, window_bounds = array<i64: 1, 32>}, {pipeline_mode = #tpu.pipeline_mode<synchronous>, transform_indices = @transform_11, window_bounds = array<i64: 7, 32>}, {pipeline_mode = #tpu.pipeline_mode<synchronous>, transform_indices = @transform_12, window_bounds = array<i64: 2, 7>}]} {
    %c0 = arith.constant 0 : index
    %c0_0 = arith.constant 0 : index
    %0 = vector.load %arg1[%c0, %c0_0] : memref<64x32xf32, #tpu.memory_space<vmem>>, vector<64x32xf32>
    %c0_1 = arith.constant 0 : index
    %c0_2 = arith.constant 0 : index
    %1 = vector.load %arg2[%c0_1, %c0_2] : memref<64x64xf32, #tpu.memory_space<vmem>>, vector<64x64xf32>
    %c0_3 = arith.constant 0 : index
    %c0_4 = arith.constant 0 : index
    %c0_5 = arith.constant 0 : index
    %c0_6 = arith.constant 0 : index
    %2 = vector.load %arg3[%c0_3, %c0_4, %c0_5, %c0_6] : memref<2x5x1x32xf32, #tpu.memory_space<vmem>>, vector<1x1x1x32xf32>
    %3 = vector.shape_cast %2 : vector<1x1x1x32xf32> to vector<1x32xf32>
    %c1 = arith.constant 1 : index
    %c0_7 = arith.constant 0 : index
    %c0_8 = arith.constant 0 : index
    %c0_9 = arith.constant 0 : index
    %4 = vector.load %arg3[%c1, %c0_7, %c0_8, %c0_9] : memref<2x5x1x32xf32, #tpu.memory_space<vmem>>, vector<1x1x1x32xf32>
    %5 = vector.shape_cast %4 : vector<1x1x1x32xf32> to vector<1x32xf32>
    %cst = arith.constant dense<0.000000e+00> : vector<64xf32>
    %6 = vector.multi_reduction <add>, %0, %cst [1] : vector<64x32xf32> to vector<64xf32>
    %7 = vector.shape_cast %6 : vector<64xf32> to vector<64x1xf32>
    %cst_10 = arith.constant 3.200000e+01 : f32
    %8 = vector.broadcast %cst_10 : f32 to vector<64x1xf32>
    %9 = arith.divf %7, %8 : vector<64x1xf32>
    %10 = vector.broadcast %9 : vector<64x1xf32> to vector<64x32xf32>
    %11 = arith.subf %0, %10 : vector<64x32xf32>
    %12 = arith.mulf %11, %11 : vector<64x32xf32>
    %cst_11 = arith.constant dense<0.000000e+00> : vector<64xf32>
    %13 = vector.multi_reduction <add>, %12, %cst_11 [1] : vector<64x32xf32> to vector<64xf32>
    %14 = vector.shape_cast %13 : vector<64xf32> to vector<64x1xf32>
    %cst_12 = arith.constant 3.200000e+01 : f32
    %15 = vector.broadcast %cst_12 : f32 to vector<64x1xf32>
    %16 = arith.divf %14, %15 : vector<64x1xf32>
    %17 = vector.broadcast %9 : vector<64x1xf32> to vector<64x32xf32>
    %18 = arith.subf %0, %17 : vector<64x32xf32>
    %cst_13 = arith.constant 9.99999996E-13 : f32
    %19 = vector.broadcast %cst_13 : f32 to vector<64x1xf32>
    %20 = arith.addf %16, %19 : vector<64x1xf32>
    %21 = math.rsqrt %20 : vector<64x1xf32>
    %22 = vector.broadcast %21 : vector<64x1xf32> to vector<64x32xf32>
    %23 = arith.mulf %18, %22 : vector<64x32xf32>
    %24 = vector.broadcast %3 : vector<1x32xf32> to vector<64x32xf32>
    %25 = arith.mulf %23, %24 : vector<64x32xf32>
    %26 = vector.broadcast %5 : vector<1x32xf32> to vector<64x32xf32>
    %27 = arith.addf %25, %26 : vector<64x32xf32>
    %c0_14 = arith.constant 0 : index
    %c0_15 = arith.constant 0 : index
    %c0_16 = arith.constant 0 : index
    %28 = vector.load %arg4[%c0_14, %c0_15, %c0_16] : memref<2x32x96xf32, #tpu.memory_space<vmem>>, vector<1x32x96xf32>
    %29 = vector.shape_cast %28 : vector<1x32x96xf32> to vector<32x96xf32>
    %cst_17 = arith.constant dense<0.000000e+00> : vector<64x96xf32>
    %30 = tpu.matmul %27, %29, %cst_17 {dimension_numbers = #tpu.dot_dimension_numbers<[1], [0], [0], [1], [0, 0, 1, 1], [], []>} : vector<64x32xf32>, vector<32x96xf32>, vector<64x96xf32> -> vector<64x96xf32>
    %c0_18 = arith.constant 0 : index
    %c0_19 = arith.constant 0 : index
    %c0_20 = arith.constant 0 : index
    %31 = vector.load %arg5[%c0_18, %c0_19, %c0_20] : memref<2x1x96xf32, #tpu.memory_space<vmem>>, vector<1x1x96xf32>
    %32 = vector.shape_cast %31 : vector<1x1x96xf32> to vector<1x96xf32>
    %33 = vector.broadcast %32 : vector<1x96xf32> to vector<64x96xf32>
    %34 = arith.addf %30, %33 : vector<64x96xf32>
    %35 = vector.extract_strided_slice %34 {offsets = [0, 0], sizes = [64, 16], strides = [1, 1]} : vector<64x96xf32> to vector<64x16xf32>
    %36 = vector.extract_strided_slice %34 {offsets = [0, 32], sizes = [64, 16], strides = [1, 1]} : vector<64x96xf32> to vector<64x16xf32>
    %37 = vector.extract_strided_slice %34 {offsets = [0, 64], sizes = [64, 16], strides = [1, 1]} : vector<64x96xf32> to vector<64x16xf32>
    %cst_21 = arith.constant dense<0.000000e+00> : vector<64x64xf32>
    %38 = tpu.matmul %35, %36, %cst_21 {dimension_numbers = #tpu.dot_dimension_numbers<[1], [1], [0], [0], [0, 0, 1, 0], [], []>} : vector<64x16xf32>, vector<64x16xf32>, vector<64x64xf32> -> vector<64x64xf32>
    %cst_22 = arith.constant 2.500000e-01 : f32
    %39 = vector.broadcast %cst_22 : f32 to vector<64x64xf32>
    %40 = arith.mulf %38, %39 : vector<64x64xf32>
    %41 = arith.addf %40, %1 : vector<64x64xf32>
    %cst_23 = arith.constant dense<0xFF800000> : vector<64xf32>
    %42 = vector.multi_reduction <maximumf>, %41, %cst_23 [1] : vector<64x64xf32> to vector<64xf32>
    %43 = vector.shape_cast %42 : vector<64xf32> to vector<64x1xf32>
    %44 = vector.broadcast %43 : vector<64x1xf32> to vector<64x64xf32>
    %45 = arith.subf %41, %44 : vector<64x64xf32>
    %46 = math.exp %45 : vector<64x64xf32>
    %cst_24 = arith.constant dense<0.000000e+00> : vector<64xf32>
    %47 = vector.multi_reduction <add>, %46, %cst_24 [1] : vector<64x64xf32> to vector<64xf32>
    %48 = vector.shape_cast %47 : vector<64xf32> to vector<64x1xf32>
    %49 = tpu.reciprocal %48 {approx = true} : vector<64x1xf32> -> vector<64x1xf32>
    %50 = vector.broadcast %49 : vector<64x1xf32> to vector<64x64xf32>
    %51 = arith.mulf %46, %50 : vector<64x64xf32>
    %cst_25 = arith.constant dense<0.000000e+00> : vector<64x16xf32>
    %52 = tpu.matmul %51, %37, %cst_25 {dimension_numbers = #tpu.dot_dimension_numbers<[1], [0], [0], [1], [0, 0, 1, 1], [], []>} : vector<64x64xf32>, vector<64x16xf32>, vector<64x16xf32> -> vector<64x16xf32>
    %53 = vector.extract_strided_slice %34 {offsets = [0, 16], sizes = [64, 16], strides = [1, 1]} : vector<64x96xf32> to vector<64x16xf32>
    %54 = vector.extract_strided_slice %34 {offsets = [0, 48], sizes = [64, 16], strides = [1, 1]} : vector<64x96xf32> to vector<64x16xf32>
    %55 = vector.extract_strided_slice %34 {offsets = [0, 80], sizes = [64, 16], strides = [1, 1]} : vector<64x96xf32> to vector<64x16xf32>
    %cst_26 = arith.constant dense<0.000000e+00> : vector<64x64xf32>
    %56 = tpu.matmul %53, %54, %cst_26 {dimension_numbers = #tpu.dot_dimension_numbers<[1], [1], [0], [0], [0, 0, 1, 0], [], []>} : vector<64x16xf32>, vector<64x16xf32>, vector<64x64xf32> -> vector<64x64xf32>
    %cst_27 = arith.constant 2.500000e-01 : f32
    %57 = vector.broadcast %cst_27 : f32 to vector<64x64xf32>
    %58 = arith.mulf %56, %57 : vector<64x64xf32>
    %59 = arith.addf %58, %1 : vector<64x64xf32>
    %cst_28 = arith.constant dense<0xFF800000> : vector<64xf32>
    %60 = vector.multi_reduction <maximumf>, %59, %cst_28 [1] : vector<64x64xf32> to vector<64xf32>
    %61 = vector.shape_cast %60 : vector<64xf32> to vector<64x1xf32>
    %62 = vector.broadcast %61 : vector<64x1xf32> to vector<64x64xf32>
    %63 = arith.subf %59, %62 : vector<64x64xf32>
    %64 = math.exp %63 : vector<64x64xf32>
    %cst_29 = arith.constant dense<0.000000e+00> : vector<64xf32>
    %65 = vector.multi_reduction <add>, %64, %cst_29 [1] : vector<64x64xf32> to vector<64xf32>
    %66 = vector.shape_cast %65 : vector<64xf32> to vector<64x1xf32>
    %67 = tpu.reciprocal %66 {approx = true} : vector<64x1xf32> -> vector<64x1xf32>
    %68 = vector.broadcast %67 : vector<64x1xf32> to vector<64x64xf32>
    %69 = arith.mulf %64, %68 : vector<64x64xf32>
    %cst_30 = arith.constant dense<0.000000e+00> : vector<64x16xf32>
    %70 = tpu.matmul %69, %55, %cst_30 {dimension_numbers = #tpu.dot_dimension_numbers<[1], [0], [0], [1], [0, 0, 1, 1], [], []>} : vector<64x64xf32>, vector<64x16xf32>, vector<64x16xf32> -> vector<64x16xf32>
    %71 = tpu.concatenate %52, %70 in 1 : vector<64x16xf32>, vector<64x16xf32> -> vector<64x32xf32>
    %c0_31 = arith.constant 0 : index
    %c0_32 = arith.constant 0 : index
    %c0_33 = arith.constant 0 : index
    %72 = vector.load %arg6[%c0_31, %c0_32, %c0_33] : memref<2x32x32xf32, #tpu.memory_space<vmem>>, vector<1x32x32xf32>
    %73 = vector.shape_cast %72 : vector<1x32x32xf32> to vector<32x32xf32>
    %cst_34 = arith.constant dense<0.000000e+00> : vector<64x32xf32>
    %74 = tpu.matmul %71, %73, %cst_34 {dimension_numbers = #tpu.dot_dimension_numbers<[1], [0], [0], [1], [0, 0, 1, 1], [], []>} : vector<64x32xf32>, vector<32x32xf32>, vector<64x32xf32> -> vector<64x32xf32>
    %c0_35 = arith.constant 0 : index
    %c0_36 = arith.constant 0 : index
    %c0_37 = arith.constant 0 : index
    %c0_38 = arith.constant 0 : index
    %75 = vector.load %arg7[%c0_35, %c0_36, %c0_37, %c0_38] : memref<2x2x1x32xf32, #tpu.memory_space<vmem>>, vector<1x1x1x32xf32>
    %76 = vector.shape_cast %75 : vector<1x1x1x32xf32> to vector<1x32xf32>
    %77 = vector.broadcast %76 : vector<1x32xf32> to vector<64x32xf32>
    %78 = arith.addf %74, %77 : vector<64x32xf32>
    %79 = arith.addf %27, %78 : vector<64x32xf32>
    %c0_39 = arith.constant 0 : index
    %c1_40 = arith.constant 1 : index
    %c0_41 = arith.constant 0 : index
    %c0_42 = arith.constant 0 : index
    %80 = vector.load %arg3[%c0_39, %c1_40, %c0_41, %c0_42] : memref<2x5x1x32xf32, #tpu.memory_space<vmem>>, vector<1x1x1x32xf32>
    %81 = vector.shape_cast %80 : vector<1x1x1x32xf32> to vector<1x32xf32>
    %c1_43 = arith.constant 1 : index
    %c1_44 = arith.constant 1 : index
    %c0_45 = arith.constant 0 : index
    %c0_46 = arith.constant 0 : index
    %82 = vector.load %arg3[%c1_43, %c1_44, %c0_45, %c0_46] : memref<2x5x1x32xf32, #tpu.memory_space<vmem>>, vector<1x1x1x32xf32>
    %83 = vector.shape_cast %82 : vector<1x1x1x32xf32> to vector<1x32xf32>
    %cst_47 = arith.constant dense<0.000000e+00> : vector<64xf32>
    %84 = vector.multi_reduction <add>, %79, %cst_47 [1] : vector<64x32xf32> to vector<64xf32>
    %85 = vector.shape_cast %84 : vector<64xf32> to vector<64x1xf32>
    %cst_48 = arith.constant 3.200000e+01 : f32
    %86 = vector.broadcast %cst_48 : f32 to vector<64x1xf32>
    %87 = arith.divf %85, %86 : vector<64x1xf32>
    %88 = vector.broadcast %87 : vector<64x1xf32> to vector<64x32xf32>
    %89 = arith.subf %79, %88 : vector<64x32xf32>
    %90 = arith.mulf %89, %89 : vector<64x32xf32>
    %cst_49 = arith.constant dense<0.000000e+00> : vector<64xf32>
    %91 = vector.multi_reduction <add>, %90, %cst_49 [1] : vector<64x32xf32> to vector<64xf32>
    %92 = vector.shape_cast %91 : vector<64xf32> to vector<64x1xf32>
    %cst_50 = arith.constant 3.200000e+01 : f32
    %93 = vector.broadcast %cst_50 : f32 to vector<64x1xf32>
    %94 = arith.divf %92, %93 : vector<64x1xf32>
    %95 = vector.broadcast %87 : vector<64x1xf32> to vector<64x32xf32>
    %96 = arith.subf %79, %95 : vector<64x32xf32>
    %cst_51 = arith.constant 9.99999996E-13 : f32
    %97 = vector.broadcast %cst_51 : f32 to vector<64x1xf32>
    %98 = arith.addf %94, %97 : vector<64x1xf32>
    %99 = math.rsqrt %98 : vector<64x1xf32>
    %100 = vector.broadcast %99 : vector<64x1xf32> to vector<64x32xf32>
    %101 = arith.mulf %96, %100 : vector<64x32xf32>
    %102 = vector.broadcast %81 : vector<1x32xf32> to vector<64x32xf32>
    %103 = arith.mulf %101, %102 : vector<64x32xf32>
    %104 = vector.broadcast %83 : vector<1x32xf32> to vector<64x32xf32>
    %105 = arith.addf %103, %104 : vector<64x32xf32>
    %c0_52 = arith.constant 0 : index
    %c0_53 = arith.constant 0 : index
    %c0_54 = arith.constant 0 : index
    %106 = vector.load %arg8[%c0_52, %c0_53, %c0_54] : memref<2x32x64xf32, #tpu.memory_space<vmem>>, vector<1x32x64xf32>
    %107 = vector.shape_cast %106 : vector<1x32x64xf32> to vector<32x64xf32>
    %cst_55 = arith.constant dense<0.000000e+00> : vector<64x64xf32>
    %108 = tpu.matmul %105, %107, %cst_55 {dimension_numbers = #tpu.dot_dimension_numbers<[1], [0], [0], [1], [0, 0, 1, 1], [], []>} : vector<64x32xf32>, vector<32x64xf32>, vector<64x64xf32> -> vector<64x64xf32>
    %c0_56 = arith.constant 0 : index
    %c0_57 = arith.constant 0 : index
    %c0_58 = arith.constant 0 : index
    %109 = vector.load %arg9[%c0_56, %c0_57, %c0_58] : memref<2x1x64xf32, #tpu.memory_space<vmem>>, vector<1x1x64xf32>
    %110 = vector.shape_cast %109 : vector<1x1x64xf32> to vector<1x64xf32>
    %111 = vector.broadcast %110 : vector<1x64xf32> to vector<64x64xf32>
    %112 = arith.addf %108, %111 : vector<64x64xf32>
    %113 = arith.mulf %112, %112 : vector<64x64xf32>
    %114 = arith.mulf %112, %113 : vector<64x64xf32>
    %cst_59 = arith.constant 4.471500e-02 : f32
    %115 = vector.broadcast %cst_59 : f32 to vector<64x64xf32>
    %116 = arith.mulf %115, %114 : vector<64x64xf32>
    %117 = arith.addf %112, %116 : vector<64x64xf32>
    %cst_60 = arith.constant 0.797884583 : f32
    %118 = vector.broadcast %cst_60 : f32 to vector<64x64xf32>
    %119 = arith.mulf %118, %117 : vector<64x64xf32>
    %120 = math.tanh %119 : vector<64x64xf32>
    %cst_61 = arith.constant 1.000000e+00 : f32
    %121 = vector.broadcast %cst_61 : f32 to vector<64x64xf32>
    %122 = arith.addf %121, %120 : vector<64x64xf32>
    %cst_62 = arith.constant 5.000000e-01 : f32
    %123 = vector.broadcast %cst_62 : f32 to vector<64x64xf32>
    %124 = arith.mulf %123, %122 : vector<64x64xf32>
    %125 = arith.mulf %112, %124 : vector<64x64xf32>
    %c0_63 = arith.constant 0 : index
    %c0_64 = arith.constant 0 : index
    %c0_65 = arith.constant 0 : index
    %126 = vector.load %arg10[%c0_63, %c0_64, %c0_65] : memref<2x64x32xf32, #tpu.memory_space<vmem>>, vector<1x64x32xf32>
    %127 = vector.shape_cast %126 : vector<1x64x32xf32> to vector<64x32xf32>
    %cst_66 = arith.constant dense<0.000000e+00> : vector<64x32xf32>
    %128 = tpu.matmul %125, %127, %cst_66 {dimension_numbers = #tpu.dot_dimension_numbers<[1], [0], [0], [1], [0, 0, 1, 1], [], []>} : vector<64x64xf32>, vector<64x32xf32>, vector<64x32xf32> -> vector<64x32xf32>
    %c1_67 = arith.constant 1 : index
    %c0_68 = arith.constant 0 : index
    %c0_69 = arith.constant 0 : index
    %c0_70 = arith.constant 0 : index
    %129 = vector.load %arg7[%c1_67, %c0_68, %c0_69, %c0_70] : memref<2x2x1x32xf32, #tpu.memory_space<vmem>>, vector<1x1x1x32xf32>
    %130 = vector.shape_cast %129 : vector<1x1x1x32xf32> to vector<1x32xf32>
    %131 = vector.broadcast %130 : vector<1x32xf32> to vector<64x32xf32>
    %132 = arith.addf %128, %131 : vector<64x32xf32>
    %133 = arith.addf %105, %132 : vector<64x32xf32>
    %c0_71 = arith.constant 0 : index
    %c2 = arith.constant 2 : index
    %c0_72 = arith.constant 0 : index
    %c0_73 = arith.constant 0 : index
    %134 = vector.load %arg3[%c0_71, %c2, %c0_72, %c0_73] : memref<2x5x1x32xf32, #tpu.memory_space<vmem>>, vector<1x1x1x32xf32>
    %135 = vector.shape_cast %134 : vector<1x1x1x32xf32> to vector<1x32xf32>
    %c1_74 = arith.constant 1 : index
    %c2_75 = arith.constant 2 : index
    %c0_76 = arith.constant 0 : index
    %c0_77 = arith.constant 0 : index
    %136 = vector.load %arg3[%c1_74, %c2_75, %c0_76, %c0_77] : memref<2x5x1x32xf32, #tpu.memory_space<vmem>>, vector<1x1x1x32xf32>
    %137 = vector.shape_cast %136 : vector<1x1x1x32xf32> to vector<1x32xf32>
    %cst_78 = arith.constant dense<0.000000e+00> : vector<64xf32>
    %138 = vector.multi_reduction <add>, %133, %cst_78 [1] : vector<64x32xf32> to vector<64xf32>
    %139 = vector.shape_cast %138 : vector<64xf32> to vector<64x1xf32>
    %cst_79 = arith.constant 3.200000e+01 : f32
    %140 = vector.broadcast %cst_79 : f32 to vector<64x1xf32>
    %141 = arith.divf %139, %140 : vector<64x1xf32>
    %142 = vector.broadcast %141 : vector<64x1xf32> to vector<64x32xf32>
    %143 = arith.subf %133, %142 : vector<64x32xf32>
    %144 = arith.mulf %143, %143 : vector<64x32xf32>
    %cst_80 = arith.constant dense<0.000000e+00> : vector<64xf32>
    %145 = vector.multi_reduction <add>, %144, %cst_80 [1] : vector<64x32xf32> to vector<64xf32>
    %146 = vector.shape_cast %145 : vector<64xf32> to vector<64x1xf32>
    %cst_81 = arith.constant 3.200000e+01 : f32
    %147 = vector.broadcast %cst_81 : f32 to vector<64x1xf32>
    %148 = arith.divf %146, %147 : vector<64x1xf32>
    %149 = vector.broadcast %141 : vector<64x1xf32> to vector<64x32xf32>
    %150 = arith.subf %133, %149 : vector<64x32xf32>
    %cst_82 = arith.constant 9.99999996E-13 : f32
    %151 = vector.broadcast %cst_82 : f32 to vector<64x1xf32>
    %152 = arith.addf %148, %151 : vector<64x1xf32>
    %153 = math.rsqrt %152 : vector<64x1xf32>
    %154 = vector.broadcast %153 : vector<64x1xf32> to vector<64x32xf32>
    %155 = arith.mulf %150, %154 : vector<64x32xf32>
    %156 = vector.broadcast %135 : vector<1x32xf32> to vector<64x32xf32>
    %157 = arith.mulf %155, %156 : vector<64x32xf32>
    %158 = vector.broadcast %137 : vector<1x32xf32> to vector<64x32xf32>
    %159 = arith.addf %157, %158 : vector<64x32xf32>
    %c1_83 = arith.constant 1 : index
    %c0_84 = arith.constant 0 : index
    %c0_85 = arith.constant 0 : index
    %160 = vector.load %arg4[%c1_83, %c0_84, %c0_85] : memref<2x32x96xf32, #tpu.memory_space<vmem>>, vector<1x32x96xf32>
    %161 = vector.shape_cast %160 : vector<1x32x96xf32> to vector<32x96xf32>
    %cst_86 = arith.constant dense<0.000000e+00> : vector<64x96xf32>
    %162 = tpu.matmul %159, %161, %cst_86 {dimension_numbers = #tpu.dot_dimension_numbers<[1], [0], [0], [1], [0, 0, 1, 1], [], []>} : vector<64x32xf32>, vector<32x96xf32>, vector<64x96xf32> -> vector<64x96xf32>
    %c1_87 = arith.constant 1 : index
    %c0_88 = arith.constant 0 : index
    %c0_89 = arith.constant 0 : index
    %163 = vector.load %arg5[%c1_87, %c0_88, %c0_89] : memref<2x1x96xf32, #tpu.memory_space<vmem>>, vector<1x1x96xf32>
    %164 = vector.shape_cast %163 : vector<1x1x96xf32> to vector<1x96xf32>
    %165 = vector.broadcast %164 : vector<1x96xf32> to vector<64x96xf32>
    %166 = arith.addf %162, %165 : vector<64x96xf32>
    %167 = vector.extract_strided_slice %166 {offsets = [0, 0], sizes = [64, 16], strides = [1, 1]} : vector<64x96xf32> to vector<64x16xf32>
    %168 = vector.extract_strided_slice %166 {offsets = [0, 32], sizes = [64, 16], strides = [1, 1]} : vector<64x96xf32> to vector<64x16xf32>
    %169 = vector.extract_strided_slice %166 {offsets = [0, 64], sizes = [64, 16], strides = [1, 1]} : vector<64x96xf32> to vector<64x16xf32>
    %cst_90 = arith.constant dense<0.000000e+00> : vector<64x64xf32>
    %170 = tpu.matmul %167, %168, %cst_90 {dimension_numbers = #tpu.dot_dimension_numbers<[1], [1], [0], [0], [0, 0, 1, 0], [], []>} : vector<64x16xf32>, vector<64x16xf32>, vector<64x64xf32> -> vector<64x64xf32>
    %cst_91 = arith.constant 2.500000e-01 : f32
    %171 = vector.broadcast %cst_91 : f32 to vector<64x64xf32>
    %172 = arith.mulf %170, %171 : vector<64x64xf32>
    %173 = arith.addf %172, %1 : vector<64x64xf32>
    %cst_92 = arith.constant dense<0xFF800000> : vector<64xf32>
    %174 = vector.multi_reduction <maximumf>, %173, %cst_92 [1] : vector<64x64xf32> to vector<64xf32>
    %175 = vector.shape_cast %174 : vector<64xf32> to vector<64x1xf32>
    %176 = vector.broadcast %175 : vector<64x1xf32> to vector<64x64xf32>
    %177 = arith.subf %173, %176 : vector<64x64xf32>
    %178 = math.exp %177 : vector<64x64xf32>
    %cst_93 = arith.constant dense<0.000000e+00> : vector<64xf32>
    %179 = vector.multi_reduction <add>, %178, %cst_93 [1] : vector<64x64xf32> to vector<64xf32>
    %180 = vector.shape_cast %179 : vector<64xf32> to vector<64x1xf32>
    %181 = tpu.reciprocal %180 {approx = true} : vector<64x1xf32> -> vector<64x1xf32>
    %182 = vector.broadcast %181 : vector<64x1xf32> to vector<64x64xf32>
    %183 = arith.mulf %178, %182 : vector<64x64xf32>
    %cst_94 = arith.constant dense<0.000000e+00> : vector<64x16xf32>
    %184 = tpu.matmul %183, %169, %cst_94 {dimension_numbers = #tpu.dot_dimension_numbers<[1], [0], [0], [1], [0, 0, 1, 1], [], []>} : vector<64x64xf32>, vector<64x16xf32>, vector<64x16xf32> -> vector<64x16xf32>
    %185 = vector.extract_strided_slice %166 {offsets = [0, 16], sizes = [64, 16], strides = [1, 1]} : vector<64x96xf32> to vector<64x16xf32>
    %186 = vector.extract_strided_slice %166 {offsets = [0, 48], sizes = [64, 16], strides = [1, 1]} : vector<64x96xf32> to vector<64x16xf32>
    %187 = vector.extract_strided_slice %166 {offsets = [0, 80], sizes = [64, 16], strides = [1, 1]} : vector<64x96xf32> to vector<64x16xf32>
    %cst_95 = arith.constant dense<0.000000e+00> : vector<64x64xf32>
    %188 = tpu.matmul %185, %186, %cst_95 {dimension_numbers = #tpu.dot_dimension_numbers<[1], [1], [0], [0], [0, 0, 1, 0], [], []>} : vector<64x16xf32>, vector<64x16xf32>, vector<64x64xf32> -> vector<64x64xf32>
    %cst_96 = arith.constant 2.500000e-01 : f32
    %189 = vector.broadcast %cst_96 : f32 to vector<64x64xf32>
    %190 = arith.mulf %188, %189 : vector<64x64xf32>
    %191 = arith.addf %190, %1 : vector<64x64xf32>
    %cst_97 = arith.constant dense<0xFF800000> : vector<64xf32>
    %192 = vector.multi_reduction <maximumf>, %191, %cst_97 [1] : vector<64x64xf32> to vector<64xf32>
    %193 = vector.shape_cast %192 : vector<64xf32> to vector<64x1xf32>
    %194 = vector.broadcast %193 : vector<64x1xf32> to vector<64x64xf32>
    %195 = arith.subf %191, %194 : vector<64x64xf32>
    %196 = math.exp %195 : vector<64x64xf32>
    %cst_98 = arith.constant dense<0.000000e+00> : vector<64xf32>
    %197 = vector.multi_reduction <add>, %196, %cst_98 [1] : vector<64x64xf32> to vector<64xf32>
    %198 = vector.shape_cast %197 : vector<64xf32> to vector<64x1xf32>
    %199 = tpu.reciprocal %198 {approx = true} : vector<64x1xf32> -> vector<64x1xf32>
    %200 = vector.broadcast %199 : vector<64x1xf32> to vector<64x64xf32>
    %201 = arith.mulf %196, %200 : vector<64x64xf32>
    %cst_99 = arith.constant dense<0.000000e+00> : vector<64x16xf32>
    %202 = tpu.matmul %201, %187, %cst_99 {dimension_numbers = #tpu.dot_dimension_numbers<[1], [0], [0], [1], [0, 0, 1, 1], [], []>} : vector<64x64xf32>, vector<64x16xf32>, vector<64x16xf32> -> vector<64x16xf32>
    %203 = tpu.concatenate %184, %202 in 1 : vector<64x16xf32>, vector<64x16xf32> -> vector<64x32xf32>
    %c1_100 = arith.constant 1 : index
    %c0_101 = arith.constant 0 : index
    %c0_102 = arith.constant 0 : index
    %204 = vector.load %arg6[%c1_100, %c0_101, %c0_102] : memref<2x32x32xf32, #tpu.memory_space<vmem>>, vector<1x32x32xf32>
    %205 = vector.shape_cast %204 : vector<1x32x32xf32> to vector<32x32xf32>
    %cst_103 = arith.constant dense<0.000000e+00> : vector<64x32xf32>
    %206 = tpu.matmul %203, %205, %cst_103 {dimension_numbers = #tpu.dot_dimension_numbers<[1], [0], [0], [1], [0, 0, 1, 1], [], []>} : vector<64x32xf32>, vector<32x32xf32>, vector<64x32xf32> -> vector<64x32xf32>
    %c0_104 = arith.constant 0 : index
    %c1_105 = arith.constant 1 : index
    %c0_106 = arith.constant 0 : index
    %c0_107 = arith.constant 0 : index
    %207 = vector.load %arg7[%c0_104, %c1_105, %c0_106, %c0_107] : memref<2x2x1x32xf32, #tpu.memory_space<vmem>>, vector<1x1x1x32xf32>
    %208 = vector.shape_cast %207 : vector<1x1x1x32xf32> to vector<1x32xf32>
    %209 = vector.broadcast %208 : vector<1x32xf32> to vector<64x32xf32>
    %210 = arith.addf %206, %209 : vector<64x32xf32>
    %211 = arith.addf %159, %210 : vector<64x32xf32>
    %c0_108 = arith.constant 0 : index
    %c3 = arith.constant 3 : index
    %c0_109 = arith.constant 0 : index
    %c0_110 = arith.constant 0 : index
    %212 = vector.load %arg3[%c0_108, %c3, %c0_109, %c0_110] : memref<2x5x1x32xf32, #tpu.memory_space<vmem>>, vector<1x1x1x32xf32>
    %213 = vector.shape_cast %212 : vector<1x1x1x32xf32> to vector<1x32xf32>
    %c1_111 = arith.constant 1 : index
    %c3_112 = arith.constant 3 : index
    %c0_113 = arith.constant 0 : index
    %c0_114 = arith.constant 0 : index
    %214 = vector.load %arg3[%c1_111, %c3_112, %c0_113, %c0_114] : memref<2x5x1x32xf32, #tpu.memory_space<vmem>>, vector<1x1x1x32xf32>
    %215 = vector.shape_cast %214 : vector<1x1x1x32xf32> to vector<1x32xf32>
    %cst_115 = arith.constant dense<0.000000e+00> : vector<64xf32>
    %216 = vector.multi_reduction <add>, %211, %cst_115 [1] : vector<64x32xf32> to vector<64xf32>
    %217 = vector.shape_cast %216 : vector<64xf32> to vector<64x1xf32>
    %cst_116 = arith.constant 3.200000e+01 : f32
    %218 = vector.broadcast %cst_116 : f32 to vector<64x1xf32>
    %219 = arith.divf %217, %218 : vector<64x1xf32>
    %220 = vector.broadcast %219 : vector<64x1xf32> to vector<64x32xf32>
    %221 = arith.subf %211, %220 : vector<64x32xf32>
    %222 = arith.mulf %221, %221 : vector<64x32xf32>
    %cst_117 = arith.constant dense<0.000000e+00> : vector<64xf32>
    %223 = vector.multi_reduction <add>, %222, %cst_117 [1] : vector<64x32xf32> to vector<64xf32>
    %224 = vector.shape_cast %223 : vector<64xf32> to vector<64x1xf32>
    %cst_118 = arith.constant 3.200000e+01 : f32
    %225 = vector.broadcast %cst_118 : f32 to vector<64x1xf32>
    %226 = arith.divf %224, %225 : vector<64x1xf32>
    %227 = vector.broadcast %219 : vector<64x1xf32> to vector<64x32xf32>
    %228 = arith.subf %211, %227 : vector<64x32xf32>
    %cst_119 = arith.constant 9.99999996E-13 : f32
    %229 = vector.broadcast %cst_119 : f32 to vector<64x1xf32>
    %230 = arith.addf %226, %229 : vector<64x1xf32>
    %231 = math.rsqrt %230 : vector<64x1xf32>
    %232 = vector.broadcast %231 : vector<64x1xf32> to vector<64x32xf32>
    %233 = arith.mulf %228, %232 : vector<64x32xf32>
    %234 = vector.broadcast %213 : vector<1x32xf32> to vector<64x32xf32>
    %235 = arith.mulf %233, %234 : vector<64x32xf32>
    %236 = vector.broadcast %215 : vector<1x32xf32> to vector<64x32xf32>
    %237 = arith.addf %235, %236 : vector<64x32xf32>
    %c1_120 = arith.constant 1 : index
    %c0_121 = arith.constant 0 : index
    %c0_122 = arith.constant 0 : index
    %238 = vector.load %arg8[%c1_120, %c0_121, %c0_122] : memref<2x32x64xf32, #tpu.memory_space<vmem>>, vector<1x32x64xf32>
    %239 = vector.shape_cast %238 : vector<1x32x64xf32> to vector<32x64xf32>
    %cst_123 = arith.constant dense<0.000000e+00> : vector<64x64xf32>
    %240 = tpu.matmul %237, %239, %cst_123 {dimension_numbers = #tpu.dot_dimension_numbers<[1], [0], [0], [1], [0, 0, 1, 1], [], []>} : vector<64x32xf32>, vector<32x64xf32>, vector<64x64xf32> -> vector<64x64xf32>
    %c1_124 = arith.constant 1 : index
    %c0_125 = arith.constant 0 : index
    %c0_126 = arith.constant 0 : index
    %241 = vector.load %arg9[%c1_124, %c0_125, %c0_126] : memref<2x1x64xf32, #tpu.memory_space<vmem>>, vector<1x1x64xf32>
    %242 = vector.shape_cast %241 : vector<1x1x64xf32> to vector<1x64xf32>
    %243 = vector.broadcast %242 : vector<1x64xf32> to vector<64x64xf32>
    %244 = arith.addf %240, %243 : vector<64x64xf32>
    %245 = arith.mulf %244, %244 : vector<64x64xf32>
    %246 = arith.mulf %244, %245 : vector<64x64xf32>
    %cst_127 = arith.constant 4.471500e-02 : f32
    %247 = vector.broadcast %cst_127 : f32 to vector<64x64xf32>
    %248 = arith.mulf %247, %246 : vector<64x64xf32>
    %249 = arith.addf %244, %248 : vector<64x64xf32>
    %cst_128 = arith.constant 0.797884583 : f32
    %250 = vector.broadcast %cst_128 : f32 to vector<64x64xf32>
    %251 = arith.mulf %250, %249 : vector<64x64xf32>
    %252 = math.tanh %251 : vector<64x64xf32>
    %cst_129 = arith.constant 1.000000e+00 : f32
    %253 = vector.broadcast %cst_129 : f32 to vector<64x64xf32>
    %254 = arith.addf %253, %252 : vector<64x64xf32>
    %cst_130 = arith.constant 5.000000e-01 : f32
    %255 = vector.broadcast %cst_130 : f32 to vector<64x64xf32>
    %256 = arith.mulf %255, %254 : vector<64x64xf32>
    %257 = arith.mulf %244, %256 : vector<64x64xf32>
    %c1_131 = arith.constant 1 : index
    %c0_132 = arith.constant 0 : index
    %c0_133 = arith.constant 0 : index
    %258 = vector.load %arg10[%c1_131, %c0_132, %c0_133] : memref<2x64x32xf32, #tpu.memory_space<vmem>>, vector<1x64x32xf32>
    %259 = vector.shape_cast %258 : vector<1x64x32xf32> to vector<64x32xf32>
    %cst_134 = arith.constant dense<0.000000e+00> : vector<64x32xf32>
    %260 = tpu.matmul %257, %259, %cst_134 {dimension_numbers = #tpu.dot_dimension_numbers<[1], [0], [0], [1], [0, 0, 1, 1], [], []>} : vector<64x64xf32>, vector<64x32xf32>, vector<64x32xf32> -> vector<64x32xf32>
    %c1_135 = arith.constant 1 : index
    %c1_136 = arith.constant 1 : index
    %c0_137 = arith.constant 0 : index
    %c0_138 = arith.constant 0 : index
    %261 = vector.load %arg7[%c1_135, %c1_136, %c0_137, %c0_138] : memref<2x2x1x32xf32, #tpu.memory_space<vmem>>, vector<1x1x1x32xf32>
    %262 = vector.shape_cast %261 : vector<1x1x1x32xf32> to vector<1x32xf32>
    %263 = vector.broadcast %262 : vector<1x32xf32> to vector<64x32xf32>
    %264 = arith.addf %260, %263 : vector<64x32xf32>
    %265 = arith.addf %237, %264 : vector<64x32xf32>
    %c0_139 = arith.constant 0 : index
    %c4 = arith.constant 4 : index
    %c0_140 = arith.constant 0 : index
    %c0_141 = arith.constant 0 : index
    %266 = vector.load %arg3[%c0_139, %c4, %c0_140, %c0_141] : memref<2x5x1x32xf32, #tpu.memory_space<vmem>>, vector<1x1x1x32xf32>
    %267 = vector.shape_cast %266 : vector<1x1x1x32xf32> to vector<1x32xf32>
    %c1_142 = arith.constant 1 : index
    %c4_143 = arith.constant 4 : index
    %c0_144 = arith.constant 0 : index
    %c0_145 = arith.constant 0 : index
    %268 = vector.load %arg3[%c1_142, %c4_143, %c0_144, %c0_145] : memref<2x5x1x32xf32, #tpu.memory_space<vmem>>, vector<1x1x1x32xf32>
    %269 = vector.shape_cast %268 : vector<1x1x1x32xf32> to vector<1x32xf32>
    %cst_146 = arith.constant dense<0.000000e+00> : vector<64xf32>
    %270 = vector.multi_reduction <add>, %265, %cst_146 [1] : vector<64x32xf32> to vector<64xf32>
    %271 = vector.shape_cast %270 : vector<64xf32> to vector<64x1xf32>
    %cst_147 = arith.constant 3.200000e+01 : f32
    %272 = vector.broadcast %cst_147 : f32 to vector<64x1xf32>
    %273 = arith.divf %271, %272 : vector<64x1xf32>
    %274 = vector.broadcast %273 : vector<64x1xf32> to vector<64x32xf32>
    %275 = arith.subf %265, %274 : vector<64x32xf32>
    %276 = arith.mulf %275, %275 : vector<64x32xf32>
    %cst_148 = arith.constant dense<0.000000e+00> : vector<64xf32>
    %277 = vector.multi_reduction <add>, %276, %cst_148 [1] : vector<64x32xf32> to vector<64xf32>
    %278 = vector.shape_cast %277 : vector<64xf32> to vector<64x1xf32>
    %cst_149 = arith.constant 3.200000e+01 : f32
    %279 = vector.broadcast %cst_149 : f32 to vector<64x1xf32>
    %280 = arith.divf %278, %279 : vector<64x1xf32>
    %281 = vector.broadcast %273 : vector<64x1xf32> to vector<64x32xf32>
    %282 = arith.subf %265, %281 : vector<64x32xf32>
    %cst_150 = arith.constant 9.99999996E-13 : f32
    %283 = vector.broadcast %cst_150 : f32 to vector<64x1xf32>
    %284 = arith.addf %280, %283 : vector<64x1xf32>
    %285 = math.rsqrt %284 : vector<64x1xf32>
    %286 = vector.broadcast %285 : vector<64x1xf32> to vector<64x32xf32>
    %287 = arith.mulf %282, %286 : vector<64x32xf32>
    %288 = vector.broadcast %267 : vector<1x32xf32> to vector<64x32xf32>
    %289 = arith.mulf %287, %288 : vector<64x32xf32>
    %290 = vector.broadcast %269 : vector<1x32xf32> to vector<64x32xf32>
    %291 = arith.addf %289, %290 : vector<64x32xf32>
    %292 = vector.extract_strided_slice %291 {offsets = [0, 0], sizes = [32, 32], strides = [1, 1]} : vector<64x32xf32> to vector<32x32xf32>
    %c0_151 = arith.constant 0 : index
    %c0_152 = arith.constant 0 : index
    %293 = vector.load %arg12[%c0_151, %c0_152] : memref<7x32xf32, #tpu.memory_space<vmem>>, vector<7x32xf32>
    %cst_153 = arith.constant dense<0.000000e+00> : vector<7x32xf32>
    %294 = tpu.matmul %293, %292, %cst_153 {dimension_numbers = #tpu.dot_dimension_numbers<[1], [0], [0], [1], [0, 0, 1, 1], [], []>} : vector<7x32xf32>, vector<32x32xf32>, vector<7x32xf32> -> vector<7x32xf32>
    %c0_154 = arith.constant 0 : index
    %c0_155 = arith.constant 0 : index
    %295 = vector.load %arg11[%c0_154, %c0_155] : memref<1x32xf32, #tpu.memory_space<vmem>>, vector<1x32xf32>
    %cst_156 = arith.constant dense<0.000000e+00> : vector<1x7xf32>
    %296 = tpu.matmul %295, %294, %cst_156 {dimension_numbers = #tpu.dot_dimension_numbers<[1], [1], [0], [0], [0, 0, 1, 0], [], []>} : vector<1x32xf32>, vector<7x32xf32>, vector<1x7xf32> -> vector<1x7xf32>
    %cst_157 = arith.constant dense<0xFF800000> : vector<1xf32>
    %297 = vector.multi_reduction <maximumf>, %296, %cst_157 [1] : vector<1x7xf32> to vector<1xf32>
    %298 = vector.shape_cast %297 : vector<1xf32> to vector<1x1xf32>
    %299 = vector.broadcast %298 : vector<1x1xf32> to vector<1x7xf32>
    %300 = arith.subf %296, %299 : vector<1x7xf32>
    %301 = math.exp %300 : vector<1x7xf32>
    %cst_158 = arith.constant dense<0.000000e+00> : vector<1xf32>
    %302 = vector.multi_reduction <add>, %301, %cst_158 [1] : vector<1x7xf32> to vector<1xf32>
    %303 = vector.shape_cast %302 : vector<1xf32> to vector<1x1xf32>
    %304 = math.log %303 : vector<1x1xf32>
    %305 = vector.broadcast %304 : vector<1x1xf32> to vector<1x7xf32>
    %306 = arith.subf %300, %305 : vector<1x7xf32>
    %307 = vector.extract_strided_slice %291 {offsets = [32, 0], sizes = [32, 32], strides = [1, 1]} : vector<64x32xf32> to vector<32x32xf32>
    %c0_159 = arith.constant 0 : index
    %c0_160 = arith.constant 0 : index
    %308 = vector.load %arg12[%c0_159, %c0_160] : memref<7x32xf32, #tpu.memory_space<vmem>>, vector<7x32xf32>
    %cst_161 = arith.constant dense<0.000000e+00> : vector<7x32xf32>
    %309 = tpu.matmul %308, %307, %cst_161 {dimension_numbers = #tpu.dot_dimension_numbers<[1], [0], [0], [1], [0, 0, 1, 1], [], []>} : vector<7x32xf32>, vector<32x32xf32>, vector<7x32xf32> -> vector<7x32xf32>
    %c0_162 = arith.constant 0 : index
    %c0_163 = arith.constant 0 : index
    %310 = vector.load %arg11[%c0_162, %c0_163] : memref<1x32xf32, #tpu.memory_space<vmem>>, vector<1x32xf32>
    %cst_164 = arith.constant dense<0.000000e+00> : vector<1x7xf32>
    %311 = tpu.matmul %310, %309, %cst_164 {dimension_numbers = #tpu.dot_dimension_numbers<[1], [1], [0], [0], [0, 0, 1, 0], [], []>} : vector<1x32xf32>, vector<7x32xf32>, vector<1x7xf32> -> vector<1x7xf32>
    %cst_165 = arith.constant dense<0xFF800000> : vector<1xf32>
    %312 = vector.multi_reduction <maximumf>, %311, %cst_165 [1] : vector<1x7xf32> to vector<1xf32>
    %313 = vector.shape_cast %312 : vector<1xf32> to vector<1x1xf32>
    %314 = vector.broadcast %313 : vector<1x1xf32> to vector<1x7xf32>
    %315 = arith.subf %311, %314 : vector<1x7xf32>
    %316 = math.exp %315 : vector<1x7xf32>
    %cst_166 = arith.constant dense<0.000000e+00> : vector<1xf32>
    %317 = vector.multi_reduction <add>, %316, %cst_166 [1] : vector<1x7xf32> to vector<1xf32>
    %318 = vector.shape_cast %317 : vector<1xf32> to vector<1x1xf32>
    %319 = math.log %318 : vector<1x1xf32>
    %320 = vector.broadcast %319 : vector<1x1xf32> to vector<1x7xf32>
    %321 = arith.subf %315, %320 : vector<1x7xf32>
    %322 = tpu.concatenate %306, %321 in 0 : vector<1x7xf32>, vector<1x7xf32> -> vector<2x7xf32>
    %c0_167 = arith.constant 0 : index
    %c0_168 = arith.constant 0 : index
    %323 = vector.load %arg13[%c0_167, %c0_168] : memref<2x7xf32, #tpu.memory_space<vmem>>, vector<2x7xf32>
    tpu.vector_store %arg13[%c0_167, %c0_168], %322 {strides = array<i32>} : memref<2x7xf32, #tpu.memory_space<vmem>>, vector<2x7xf32>,
    return
  }
  func.func @transform_0(%arg0: i32) -> (i32, i32) {
    %c0_i32 = arith.constant 0 : i32
    %c0_i32_0 = arith.constant 0 : i32
    %c0_i32_1 = arith.constant 0 : i32
    return %c0_i32, %c0_i32_0 : i32, i32
  }
  func.func @transform_1(%arg0: i32) -> (i32, i32) {
    %c0_i32 = arith.constant 0 : i32
    %c0_i32_0 = arith.constant 0 : i32
    %c0_i32_1 = arith.constant 0 : i32
    return %c0_i32, %c0_i32_0 : i32, i32
  }
  func.func @transform_2(%arg0: i32) -> (i32, i32, i32, i32) {
    %c0_i32 = arith.constant 0 : i32
    %c0_i32_0 = arith.constant 0 : i32
    %c0_i32_1 = arith.constant 0 : i32
    %c0_i32_2 = arith.constant 0 : i32
    %c0_i32_3 = arith.constant 0 : i32
    return %c0_i32, %c0_i32_0, %c0_i32_1, %c0_i32_2 : i32, i32, i32, i32
  }
  func.func @transform_3(%arg0: i32) -> (i32, i32, i32) {
    %c0_i32 = arith.constant 0 : i32
    %c0_i32_0 = arith.constant 0 : i32
    %c0_i32_1 = arith.constant 0 : i32
    %c0_i32_2 = arith.constant 0 : i32
    return %c0_i32, %c0_i32_0, %c0_i32_1 : i32, i32, i32
  }
  func.func @transform_4(%arg0: i32) -> (i32, i32, i32) {
    %c0_i32 = arith.constant 0 : i32
    %c0_i32_0 = arith.constant 0 : i32
    %c0_i32_1 = arith.constant 0 : i32
    %c0_i32_2 = arith.constant 0 : i32
    return %c0_i32, %c0_i32_0, %c0_i32_1 : i32, i32, i32
  }
  func.func @transform_5(%arg0: i32) -> (i32, i32, i32) {
    %c0_i32 = arith.constant 0 : i32
    %c0_i32_0 = arith.constant 0 : i32
    %c0_i32_1 = arith.constant 0 : i32
    %c0_i32_2 = arith.constant 0 : i32
    return %c0_i32, %c0_i32_0, %c0_i32_1 : i32, i32, i32
  }
  func.func @transform_6(%arg0: i32) -> (i32, i32, i32, i32) {
    %c0_i32 = arith.constant 0 : i32
    %c0_i32_0 = arith.constant 0 : i32
    %c0_i32_1 = arith.constant 0 : i32
    %c0_i32_2 = arith.constant 0 : i32
    %c0_i32_3 = arith.constant 0 : i32
    return %c0_i32, %c0_i32_0, %c0_i32_1, %c0_i32_2 : i32, i32, i32, i32
  }
  func.func @transform_7(%arg0: i32) -> (i32, i32, i32) {
    %c0_i32 = arith.constant 0 : i32
    %c0_i32_0 = arith.constant 0 : i32
    %c0_i32_1 = arith.constant 0 : i32
    %c0_i32_2 = arith.constant 0 : i32
    return %c0_i32, %c0_i32_0, %c0_i32_1 : i32, i32, i32
  }
  func.func @transform_8(%arg0: i32) -> (i32, i32, i32) {
    %c0_i32 = arith.constant 0 : i32
    %c0_i32_0 = arith.constant 0 : i32
    %c0_i32_1 = arith.constant 0 : i32
    %c0_i32_2 = arith.constant 0 : i32
    return %c0_i32, %c0_i32_0, %c0_i32_1 : i32, i32, i32
  }
  func.func @transform_9(%arg0: i32) -> (i32, i32, i32) {
    %c0_i32 = arith.constant 0 : i32
    %c0_i32_0 = arith.constant 0 : i32
    %c0_i32_1 = arith.constant 0 : i32
    %c0_i32_2 = arith.constant 0 : i32
    return %c0_i32, %c0_i32_0, %c0_i32_1 : i32, i32, i32
  }
  func.func @transform_10(%arg0: i32) -> (i32, i32) {
    %c0_i32 = arith.constant 0 : i32
    %c0_i32_0 = arith.constant 0 : i32
    %c0_i32_1 = arith.constant 0 : i32
    return %c0_i32, %c0_i32_0 : i32, i32
  }
  func.func @transform_11(%arg0: i32) -> (i32, i32) {
    %c0_i32 = arith.constant 0 : i32
    %c0_i32_0 = arith.constant 0 : i32
    %c0_i32_1 = arith.constant 0 : i32
    return %c0_i32, %c0_i32_0 : i32, i32
  }
  func.func @transform_12(%arg0: i32) -> (i32, i32) {
    %c0_i32 = arith.constant 0 : i32
    %c0_i32_0 = arith.constant 0 : i32
    %c0_i32_1 = arith.constant 0 : i32
    return %c0_i32, %c0_i32_0 : i32, i32
  }
}

</mosaic_0001>

<llo_original>
// kernel: tpu_custom_call.1
$region0: #{tpu_custom_call.1}
  #allocation0 [shape = 'u32[]', space=smem, size = 0x4, offset = 0x4, fixed_abs, tag = 'smem constant byte address 0x4 - core index']
  #allocation1 [shape = 'u32[144,128]{1,0:T(1,128)}', space=vmem, size = 0x12000, scoped, tag = 'internal scratch']
  %s0 = inlined_call_operand.vmem [shape: f32[64,32], index: 0, kind: input, shape index: {}]
  %s1 = inlined_call_operand.vmem [shape: f32[64,64], index: 1, kind: input, shape index: {}]
  %s2 = inlined_call_operand.vmem [shape: f32[2,5,1,32], index: 2, kind: input, shape index: {}]
  %s3 = inlined_call_operand.vmem [shape: f32[2,32,96], index: 3, kind: input, shape index: {}]
  %s4 = inlined_call_operand.vmem [shape: f32[2,1,96], index: 4, kind: input, shape index: {}]
  %s5 = inlined_call_operand.vmem [shape: f32[2,32,32], index: 5, kind: input, shape index: {}]
  %s6 = inlined_call_operand.vmem [shape: f32[2,2,1,32], index: 6, kind: input, shape index: {}]
  %s7 = inlined_call_operand.hbm [shape: f32[2,32,64], index: 7, kind: input, shape index: {}]
  %s8 = inlined_call_operand.vmem [shape: f32[2,1,64], index: 8, kind: input, shape index: {}]
  %s9 = inlined_call_operand.vmem [shape: f32[2,64,32], index: 9, kind: input, shape index: {}]
  %s10 = inlined_call_operand.vmem [shape: f32[1,32], index: 10, kind: input, shape index: {}]
  %s11 = inlined_call_operand.vmem [shape: f32[7,32], index: 11, kind: input, shape index: {}]
  %s12 = inlined_call_operand.hbm [shape: f32[2,7], index: 12, kind: output, shape index: {}]
  %s13 = sld [smem:[#allocation0]]
  $region62: #{tpu_custom_call.1} parent=0
    _
  %s15 = ssub.s32 1, %s13
  %s16 = scalar_select 0, %s15, %s13
  $region1: #{tpu_custom_call.1} parent=0
    #allocation2 [shape = 'u8[32768]{0}', space=vmem, size = 0x8000, scoped, tag = 'input window, operand 7, single buffered']
    #allocation3 [shape = 's32[1]{0}', space=sflag, size = 0x4, scoped, tag = 'scoped memory for tpu_custom_call.1']
    #allocation4 [shape = 's32[1]{0}', space=sflag, size = 0x4, scoped, tag = 'scoped memory for tpu_custom_call.1']
    #allocation5 [shape = 'u8[1024]{0}', space=vmem, size = 0x400, scoped, tag = 'output window, operand 0, single buffered']
    %17 = vsyncpa [#allocation3], 0
    %18 = vsyncpa [#allocation4], 0
    // Predicated region
    $region2: #{tpu_custom_call.1} parent=1 // pred_check
      _
    $region3: #{tpu_custom_call.1} parent=1 // pred_check_branch
      %20 = sbr.rel (0) target = $region5
    $region4: #{tpu_custom_call.1} parent=1 // pred_region
      _
    $region5: #{tpu_custom_call.1} parent=1 // pred_fallthru
      _
    // Predicated region
    $region6: #{tpu_custom_call.1} parent=1 // pred_check
      _
    $region7: #{tpu_custom_call.1} parent=1 // pred_check_branch
      %22 = sbr.rel (0) target = $region9
    $region8: #{tpu_custom_call.1} parent=1 // pred_region
      _
    $region9: #{tpu_custom_call.1} parent=1 // pred_fallthru
      _
    // Predicated region
    $region10: #{tpu_custom_call.1} parent=1 // pred_check
      _
    $region11: #{tpu_custom_call.1} parent=1 // pred_check_branch
      %24 = sbr.rel (0) target = $region13
    $region12: #{tpu_custom_call.1} parent=1 // pred_region
      _
    $region13: #{tpu_custom_call.1} parent=1 // pred_fallthru
      _
    // Predicated region
    $region14: #{tpu_custom_call.1} parent=1 // pred_check
      _
    $region15: #{tpu_custom_call.1} parent=1 // pred_check_branch
      %26 = sbr.rel (0) target = $region17
    $region16: #{tpu_custom_call.1} parent=1 // pred_region
      _
    $region17: #{tpu_custom_call.1} parent=1 // pred_fallthru
      _
    // Predicated region
    $region18: #{tpu_custom_call.1} parent=1 // pred_check
      _
    $region19: #{tpu_custom_call.1} parent=1 // pred_check_branch
      %28 = sbr.rel (0) target = $region21
    $region20: #{tpu_custom_call.1} parent=1 // pred_region
      _
    $region21: #{tpu_custom_call.1} parent=1 // pred_fallthru
      _
    // Predicated region
    $region22: #{tpu_custom_call.1} parent=1 // pred_check
      _
    $region23: #{tpu_custom_call.1} parent=1 // pred_check_branch
      %30 = sbr.rel (0) target = $region25
    $region24: #{tpu_custom_call.1} parent=1 // pred_region
      _
    $region25: #{tpu_custom_call.1} parent=1 // pred_fallthru
      _
    // Predicated region
    $region26: #{tpu_custom_call.1} parent=1 // pred_check
      _
    $region27: #{tpu_custom_call.1} parent=1 // pred_check_branch
      %32 = sbr.rel (0) target = $region29
    $region28: #{tpu_custom_call.1} parent=1 // pred_region
      _
    $region29: #{tpu_custom_call.1} parent=1 // pred_fallthru
      _
    // Predicated region
    $region30: #{tpu_custom_call.1} parent=1 // pred_check
      _
    $region31: #{tpu_custom_call.1} parent=1 // pred_check_branch
      %34 = sbr.rel (0) target = $region33
    $region32: #{tpu_custom_call.1} parent=1 // pred_region
      %s36 = ssub.s32 1024, 1024
      %37 = vsyncadd [#allocation3], %s36
      %s38 = sshll.u32 [#allocation2], 4
      %s39 = int_to_ptr.vmem [resolvable:$true] %s38
      %44 = dma.hbm_to_vmem [thread:$0]  %s7, 1024, %s39, [#allocation3], 128, 128, 8
    $region33: #{tpu_custom_call.1} parent=1 // pred_fallthru
      _
    // Predicated region
    $region34: #{tpu_custom_call.1} parent=1 // pred_check
      _
    $region35: #{tpu_custom_call.1} parent=1 // pred_check_branch
      %46 = sbr.rel (0) target = $region37
    $region36: #{tpu_custom_call.1} parent=1 // pred_region
      _
    $region37: #{tpu_custom_call.1} parent=1 // pred_fallthru
      _
    // Predicated region
    $region38: #{tpu_custom_call.1} parent=1 // pred_check
      _
    $region39: #{tpu_custom_call.1} parent=1 // pred_check_branch
      %48 = sbr.rel (0) target = $region41
    $region40: #{tpu_custom_call.1} parent=1 // pred_region
      _
    $region41: #{tpu_custom_call.1} parent=1 // pred_fallthru
      _
    // Predicated region
    $region42: #{tpu_custom_call.1} parent=1 // pred_check
      _
    $region43: #{tpu_custom_call.1} parent=1 // pred_check_branch
      %50 = sbr.rel (0) target = $region45
    $region44: #{tpu_custom_call.1} parent=1 // pred_region
      _
    $region45: #{tpu_custom_call.1} parent=1 // pred_fallthru
      _
    // Predicated region
    $region46: #{tpu_custom_call.1} parent=1 // pred_check
      _
    $region47: #{tpu_custom_call.1} parent=1 // pred_check_branch
      %52 = sbr.rel (0) target = $region49
    $region48: #{tpu_custom_call.1} parent=1 // pred_region
      _
    $region49: #{tpu_custom_call.1} parent=1 // pred_fallthru
      _
    // Predicated region
    $region50: #{tpu_custom_call.1} parent=1 // pred_check
      _
    $region51: #{tpu_custom_call.1} parent=1 // pred_check_branch
      %54 = sbr.rel (0) target = $region53
    $region52: #{tpu_custom_call.1} parent=1 // pred_region
      %55 = dma.done [#allocation3], 1024
    $region53: #{tpu_custom_call.1} parent=1 // pred_fallthru
      _
    %v56 = vld [vmem:[%s0] sm:$0xff]
    %v57 = vld [vmem:[%s0 + $0x8] sm:$0xff]
    %v58 = vld [vmem:[%s0 + $0x10] sm:$0xff]
    %v59 = vld [vmem:[%s0 + $0x18] sm:$0xff]
    %v60 = vld [vmem:[%s0 + $0x20] sm:$0xff]
    %v61 = vld [vmem:[%s0 + $0x28] sm:$0xff]
    %v62 = vld [vmem:[%s0 + $0x30] sm:$0xff]
    %v63 = vld [vmem:[%s0 + $0x38] sm:$0xff]
    %v64 = vld [vmem:[%s1] sm:$0xff]
    %v65 = vld [vmem:[%s1 + $0x8] sm:$0xff]
    %v66 = vld [vmem:[%s1 + $0x10] sm:$0xff]
    %v67 = vld [vmem:[%s1 + $0x18] sm:$0xff]
    %v68 = vld [vmem:[%s1 + $0x20] sm:$0xff]
    %v69 = vld [vmem:[%s1 + $0x28] sm:$0xff]
    %v70 = vld [vmem:[%s1 + $0x30] sm:$0xff]
    %v71 = vld [vmem:[%s1 + $0x38] sm:$0xff]
    %v72 = vld [vmem:[%s2] sm:$0x1]
    %s73 = scalar_lea.vmem %s2, 5
    %v74 = vld [vmem:[%s73] sm:$0x1]
    %vm75 = vcmask 261120
    %v76 = vsel %vm75, %v56, 0.0
    %77 = vadd.xlane.f32.xlu0 %v76
    %v78 = vpop.xlane.xlu0 %77
    %v79 = vsel %vm75, %v57, 0.0
    %80 = vadd.xlane.f32.xlu0 %v79
    %v81 = vpop.xlane.xlu0 %80
    %v82 = vsel %vm75, %v58, 0.0
    %83 = vadd.xlane.f32.xlu0 %v82
    %v84 = vpop.xlane.xlu0 %83
    %v85 = vsel %vm75, %v59, 0.0
    %86 = vadd.xlane.f32.xlu0 %v85
    %v87 = vpop.xlane.xlu0 %86
    %v88 = vsel %vm75, %v60, 0.0
    %89 = vadd.xlane.f32.xlu0 %v88
    %v90 = vpop.xlane.xlu0 %89
    %v91 = vsel %vm75, %v61, 0.0
    %92 = vadd.xlane.f32.xlu0 %v91
    %v93 = vpop.xlane.xlu0 %92
    %v94 = vsel %vm75, %v62, 0.0
    %95 = vadd.xlane.f32.xlu0 %v94
    %v96 = vpop.xlane.xlu0 %95
    %v97 = vsel %vm75, %v63, 0.0
    %98 = vadd.xlane.f32.xlu0 %v97
    %v99 = vpop.xlane.xlu0 %98
    %v100 = vrcp.pop 32.0
    %v101 = vmul.f32 %v78, %v100
    %v102 = vmul.f32 %v81, %v100
    %v103 = vmul.f32 %v84, %v100
    %v104 = vmul.f32 %v87, %v100
    %v105 = vmul.f32 %v90, %v100
    %v106 = vmul.f32 %v93, %v100
    %v107 = vmul.f32 %v96, %v100
    %v108 = vmul.f32 %v99, %v100
    %v109 = vsub.f32 %v56, %v101
    %v110 = vsub.f32 %v57, %v102
    %v111 = vsub.f32 %v58, %v103
    %v112 = vsub.f32 %v59, %v104
    %v113 = vsub.f32 %v60, %v105
    %v114 = vsub.f32 %v61, %v106
    %v115 = vsub.f32 %v62, %v107
    %v116 = vsub.f32 %v63, %v108
    %v117 = vmul.f32 %v109, %v109
    %v118 = vmul.f32 %v110, %v110
    %v119 = vmul.f32 %v111, %v111
    %v120 = vmul.f32 %v112, %v112
    %v121 = vmul.f32 %v113, %v113
    %v122 = vmul.f32 %v114, %v114
    %v123 = vmul.f32 %v115, %v115
    %v124 = vmul.f32 %v116, %v116
    %v125 = vsel %vm75, %v117, 0.0
    %126 = vadd.xlane.f32.xlu0 %v125
    %v127 = vpop.xlane.xlu0 %126
    %v128 = vsel %vm75, %v118, 0.0
    %129 = vadd.xlane.f32.xlu0 %v128
    %v130 = vpop.xlane.xlu0 %129
    %v131 = vsel %vm75, %v119, 0.0
    %132 = vadd.xlane.f32.xlu0 %v131
    %v133 = vpop.xlane.xlu0 %132
    %v134 = vsel %vm75, %v120, 0.0
    %135 = vadd.xlane.f32.xlu0 %v134
    %v136 = vpop.xlane.xlu0 %135
    %v137 = vsel %vm75, %v121, 0.0
    %138 = vadd.xlane.f32.xlu0 %v137
    %v139 = vpop.xlane.xlu0 %138
    %v140 = vsel %vm75, %v122, 0.0
    %141 = vadd.xlane.f32.xlu0 %v140
    %v142 = vpop.xlane.xlu0 %141
    %v143 = vsel %vm75, %v123, 0.0
    %144 = vadd.xlane.f32.xlu0 %v143
    %v145 = vpop.xlane.xlu0 %144
    %v146 = vsel %vm75, %v124, 0.0
    %147 = vadd.xlane.f32.xlu0 %v146
    %v148 = vpop.xlane.xlu0 %147
    %v149 = vmul.f32 %v127, %v100
    %v150 = vmul.f32 %v130, %v100
    %v151 = vmul.f32 %v133, %v100
    %v152 = vmul.f32 %v136, %v100
    %v153 = vmul.f32 %v139, %v100
    %v154 = vmul.f32 %v142, %v100
    %v155 = vmul.f32 %v145, %v100
    %v156 = vmul.f32 %v148, %v100
    %v157 = vadd.f32 %v149, 1e-12
    %v158 = vadd.f32 %v150, 1e-12
    %v159 = vadd.f32 %v151, 1e-12
    %v160 = vadd.f32 %v152, 1e-12
    %v161 = vadd.f32 %v153, 1e-12
    %v162 = vadd.f32 %v154, 1e-12
    %v163 = vadd.f32 %v155, 1e-12
    %v164 = vadd.f32 %v156, 1e-12
    %v165 = vrsqrt.pop %v157
    %v166 = vrsqrt.pop %v158
    %v167 = vrsqrt.pop %v159
    %v168 = vrsqrt.pop %v160
    %v169 = vrsqrt.pop %v161
    %v170 = vrsqrt.pop %v162
    %v171 = vrsqrt.pop %v163
    %v172 = vrsqrt.pop %v164
    %v173 = vmul.f32 %v109, %v165
    %v174 = vmul.f32 %v110, %v166
    %v175 = vmul.f32 %v111, %v167
    %v176 = vmul.f32 %v112, %v168
    %v177 = vmul.f32 %v113, %v169
    %v178 = vmul.f32 %v114, %v170
    %v179 = vmul.f32 %v115, %v171
    %v180 = vmul.f32 %v116, %v172
    %v182 = vlaneseq
    %v183 = vshrl.u32 %v182, 7
    %v184 = vsub.s32 0, %v183
    %v185 = vrot.slane %v72, %v184
    %v187 = vmul.f32 %v173, %v185
    %v188 = vmul.f32 %v174, %v185
    %v189 = vmul.f32 %v175, %v185
    %v190 = vmul.f32 %v176, %v185
    %v191 = vmul.f32 %v177, %v185
    %v192 = vmul.f32 %v178, %v185
    %v193 = vmul.f32 %v179, %v185
    %v194 = vmul.f32 %v180, %v185
    %v196 = vlaneseq
    %v197 = vshrl.u32 %v196, 7
    %v198 = vsub.s32 0, %v197
    %v199 = vrot.slane %v74, %v198
    %v201 = vadd.f32 %v187, %v199
    %v202 = vadd.f32 %v188, %v199
    %v203 = vadd.f32 %v189, %v199
    %v204 = vadd.f32 %v190, %v199
    %v205 = vadd.f32 %v191, %v199
    %v206 = vadd.f32 %v192, %v199
    %v207 = vadd.f32 %v193, %v199
    %v208 = vadd.f32 %v194, %v199
    %v209 = vld [vmem:[%s3] sm:$0xff]
    %v210 = vld [vmem:[%s3 + $0x8] sm:$0xff]
    %v211 = vld [vmem:[%s3 + $0x10] sm:$0xff]
    %v212 = vld [vmem:[%s3 + $0x18] sm:$0xff]
    %v213 = vld [vmem:[%s4] sm:$0x1]
    %v215 = vlaneseq
    %v216 = vshrl.u32 %v215, 7
    %v217 = vsub.s32 0, %v216
    %v218 = vrot.slane %v213, %v217
    %v221 = vsel %vm75, %v201, 0
    %v224 = vsel %vm75, %v202, 0
    %v227 = vsel %vm75, %v203, 0
    %v230 = vsel %vm75, %v204, 0
    %v233 = vsel %vm75, %v205, 0
    %v236 = vsel %vm75, %v206, 0
    %v239 = vsel %vm75, %v207, 0
    %v242 = vsel %vm75, %v208, 0
    %244 = vmatprep.subr.mxu0 0.0
    %245 = vmatpush1.msra.mxu0 %v209
    %246 = vmatprep.subr.mxu0 0.0
    %247 = vmatpush1.msra.mxu0 %v210
    %248 = vmatprep.subr.mxu0 0.0
    %249 = vmatpush1.msra.mxu0 %v211
    %250 = vmatprep.subr.mxu0 0.0
    %251 = vmatpush1.msra.mxu0 %v212
    %252 = vmatprep.subr.mxu0 0.0
    %253 = vmatpush1.msra.mxu0 0.0
    %254 = vmatprep.subr.mxu0 0.0
    %255 = vmatpush1.msra.mxu0 0.0
    %256 = vmatprep.subr.mxu0 0.0
    %257 = vmatpush1.msra.mxu0 0.0
    %258 = vmatprep.subr.mxu0 0.0
    %259 = vmatpush1.msra.mxu0 0.0
    %260 = vmatprep.subr.mxu0 0.0
    %261 = vmatpush1.msra.mxu0 0.0
    %262 = vmatprep.subr.mxu0 0.0
    %263 = vmatpush1.msra.mxu0 0.0
    %264 = vmatprep.subr.mxu0 0.0
    %265 = vmatpush1.msra.mxu0 0.0
    %266 = vmatprep.subr.mxu0 0.0
    %267 = vmatpush1.msra.mxu0 0.0
    %268 = vmatprep.subr.mxu0 0.0
    %269 = vmatpush1.msra.mxu0 0.0
    %270 = vmatprep.subr.mxu0 0.0
    %271 = vmatpush1.msra.mxu0 0.0
    %272 = vmatprep.subr.mxu0 0.0
    %273 = vmatpush1.msra.mxu0 0.0
    %274 = vmatprep.subr.mxu0 0.0
    %275 = vmatpush1.msra.mxu0 0.0
    %276 = vmatprep.subr.mxu0 0.0
    %277 = vmatpush1.msra.mxu0 0.0
    %278 = vmatprep.subr.mxu0 0.0
    %279 = vmatpush1.msra.mxu0 0.0
    %280 = vmatprep.subr.mxu0 0.0
    %281 = vmatpush1.msra.mxu0 0.0
    %282 = vmatprep.subr.mxu0 0.0
    %283 = vmatpush1.msra.mxu0 0.0
    %284 = vmatprep.subr.mxu0 0.0
    %285 = vmatpush1.msra.mxu0 0.0
    %286 = vmatprep.subr.mxu0 0.0
    %287 = vmatpush1.msra.mxu0 0.0
    %288 = vmatprep.subr.mxu0 0.0
    %289 = vmatpush1.msra.mxu0 0.0
    %290 = vmatprep.subr.mxu0 0.0
    %291 = vmatpush1.msra.mxu0 0.0
    %292 = vmatprep.subr.mxu0 0.0
    %293 = vmatpush1.msra.mxu0 0.0
    %294 = vmatprep.subr.mxu0 0.0
    %295 = vmatpush1.msra.mxu0 0.0
    %296 = vmatprep.subr.mxu0 0.0
    %297 = vmatpush1.msra.mxu0 0.0
    %298 = vmatprep.subr.mxu0 0.0
    %299 = vmatpush1.msra.mxu0 0.0
    %300 = vmatprep.subr.mxu0 0.0
    %301 = vmatpush1.msra.mxu0 0.0
    %302 = vmatprep.subr.mxu0 0.0
    %303 = vmatpush1.msra.mxu0 0.0
    %304 = vmatprep.subr.mxu0 0.0
    %305 = vmatpush1.msra.mxu0 0.0
    %306 = vmatprep.subr.mxu0 0.0
    %307 = vmatpush1.msra.mxu0 0.0
    %308 = vmatprep.mubr.f32.mxu0 0.0
    %309 = vmatmul.mubr.f32.gmra.mrb[0].mxu0 %v221
    %v310 = vpop.f32.mrb[0].mxu0
    %v311 = vadd.f32 %v218, %v310
    %v312 = vpop.f32.mrb[0].mxu0
    %313 = vmatprep.mubr.f32.mxu0 0.0
    %314 = vmatmul.mubr.f32.gmra.mrb[0].mxu0 %v224
    %v315 = vpop.f32.mrb[0].mxu0
    %v316 = vadd.f32 %v218, %v315
    %v317 = vpop.f32.mrb[0].mxu0
    %318 = vmatprep.mubr.f32.mxu0 0.0
    %319 = vmatmul.mubr.f32.gmra.mrb[0].mxu0 %v227
    %v320 = vpop.f32.mrb[0].mxu0
    %v321 = vadd.f32 %v218, %v320
    %v322 = vpop.f32.mrb[0].mxu0
    %323 = vmatprep.mubr.f32.mxu0 0.0
    %324 = vmatmul.mubr.f32.gmra.mrb[0].mxu0 %v230
    %v325 = vpop.f32.mrb[0].mxu0
    %v326 = vadd.f32 %v218, %v325
    %v327 = vpop.f32.mrb[0].mxu0
    %328 = vmatprep.mubr.f32.mxu0 0.0
    %329 = vmatmul.mubr.f32.gmra.mrb[0].mxu0 %v233
    %v330 = vpop.f32.mrb[0].mxu0
    %v331 = vadd.f32 %v218, %v330
    %v332 = vpop.f32.mrb[0].mxu0
    %333 = vmatprep.mubr.f32.mxu0 0.0
    %334 = vmatmul.mubr.f32.gmra.mrb[0].mxu0 %v236
    %v335 = vpop.f32.mrb[0].mxu0
    %v336 = vadd.f32 %v218, %v335
    %v337 = vpop.f32.mrb[0].mxu0
    %338 = vmatprep.mubr.f32.mxu0 0.0
    %339 = vmatmul.mubr.f32.gmra.mrb[0].mxu0 %v239
    %v340 = vpop.f32.mrb[0].mxu0
    %v341 = vadd.f32 %v218, %v340
    %v342 = vpop.f32.mrb[0].mxu0
    %343 = vmatprep.mubr.f32.mxu0 0.0
    %344 = vmatmul.mubr.f32.gmra.mrb[0].mxu0 %v242
    %v345 = vpop.f32.mrb[0].mxu0
    %v346 = vadd.f32 %v218, %v345
    %v347 = vpop.f32.mrb[0].mxu0
    %348 = vdwg.mxu0
    %357 = vrot.lane.b32.xlu0 %v311, 96
    %v358 = vpop.permute.xlu0 %357
    %359 = vrot.lane.b32.xlu0 %v316, 96
    %v360 = vpop.permute.xlu0 %359
    %361 = vrot.lane.b32.xlu0 %v321, 96
    %v362 = vpop.permute.xlu0 %361
    %363 = vrot.lane.b32.xlu0 %v326, 96
    %v364 = vpop.permute.xlu0 %363
    %365 = vrot.lane.b32.xlu0 %v331, 96
    %v366 = vpop.permute.xlu0 %365
    %367 = vrot.lane.b32.xlu0 %v336, 96
    %v368 = vpop.permute.xlu0 %367
    %369 = vrot.lane.b32.xlu0 %v341, 96
    %v370 = vpop.permute.xlu0 %369
    %371 = vrot.lane.b32.xlu0 %v346, 96
    %v372 = vpop.permute.xlu0 %371
    %vm373 = vcmask 130048
    %v374 = vsel %vm373, %v311, 0
    %v376 = vsel %vm373, %v316, 0
    %v378 = vsel %vm373, %v321, 0
    %v380 = vsel %vm373, %v326, 0
    %v382 = vsel %vm373, %v331, 0
    %v384 = vsel %vm373, %v336, 0
    %v386 = vsel %vm373, %v341, 0
    %v388 = vsel %vm373, %v346, 0
    %v390 = vsel %vm373, %v358, 0
    %v392 = vsel %vm373, %v360, 0
    %v394 = vsel %vm373, %v362, 0
    %v396 = vsel %vm373, %v364, 0
    %v398 = vsel %vm373, %v366, 0
    %v400 = vsel %vm373, %v368, 0
    %v402 = vsel %vm373, %v370, 0
    %v404 = vsel %vm373, %v372, 0
    %406 = vmatprep.subr.mxu0 0.0
    %407 = vmatpush1.xpose.msra.mxu0 %v390
    %408 = vmatprep.subr.mxu0 0.0
    %409 = vmatpush1.xpose.msra.mxu0 %v392
    %410 = vmatprep.subr.mxu0 0.0
    %411 = vmatpush1.xpose.msra.mxu0 %v394
    %412 = vmatprep.subr.mxu0 0.0
    %413 = vmatpush1.xpose.msra.mxu0 %v396
    %414 = vmatprep.subr.mxu0 0.0
    %415 = vmatpush1.xpose.msra.mxu0 %v398
    %416 = vmatprep.subr.mxu0 0.0
    %417 = vmatpush1.xpose.msra.mxu0 %v400
    %418 = vmatprep.subr.mxu0 0.0
    %419 = vmatpush1.xpose.msra.mxu0 %v402
    %420 = vmatprep.subr.mxu0 0.0
    %421 = vmatpush1.xpose.msra.mxu0 %v404
    %422 = vmatprep.subr.mxu0 0.0
    %423 = vmatpush1.xpose.msra.mxu0 0.0
    %424 = vmatprep.subr.mxu0 0.0
    %425 = vmatpush1.xpose.msra.mxu0 0.0
    %426 = vmatprep.subr.mxu0 0.0
    %427 = vmatpush1.xpose.msra.mxu0 0.0
    %428 = vmatprep.subr.mxu0 0.0
    %429 = vmatpush1.xpose.msra.mxu0 0.0
    %430 = vmatprep.subr.mxu0 0.0
    %431 = vmatpush1.xpose.msra.mxu0 0.0
    %432 = vmatprep.subr.mxu0 0.0
    %433 = vmatpush1.xpose.msra.mxu0 0.0
    %434 = vmatprep.subr.mxu0 0.0
    %435 = vmatpush1.xpose.msra.mxu0 0.0
    %436 = vmatprep.subr.mxu0 0.0
    %437 = vmatpush1.xpose.msra.mxu0 0.0
    %438 = vmatprep.subr.mxu0 0.0
    %439 = vmatpush1.xpose.msra.mxu0 0.0
    %440 = vmatprep.subr.mxu0 0.0
    %441 = vmatpush1.xpose.msra.mxu0 0.0
    %442 = vmatprep.subr.mxu0 0.0
    %443 = vmatpush1.xpose.msra.mxu0 0.0
    %444 = vmatprep.subr.mxu0 0.0
    %445 = vmatpush1.xpose.msra.mxu0 0.0
    %446 = vmatprep.subr.mxu0 0.0
    %447 = vmatpush1.xpose.msra.mxu0 0.0
    %448 = vmatprep.subr.mxu0 0.0
    %449 = vmatpush1.xpose.msra.mxu0 0.0
    %450 = vmatprep.subr.mxu0 0.0
    %451 = vmatpush1.xpose.msra.mxu0 0.0
    %452 = vmatprep.subr.mxu0 0.0
    %453 = vmatpush1.xpose.msra.mxu0 0.0
    %454 = vmatprep.subr.mxu0 0.0
    %455 = vmatpush1.xpose.msra.mxu0 0.0
    %456 = vmatprep.subr.mxu0 0.0
    %457 = vmatpush1.xpose.msra.mxu0 0.0
    %458 = vmatprep.subr.mxu0 0.0
    %459 = vmatpush1.xpose.msra.mxu0 0.0
    %460 = vmatprep.subr.mxu0 0.0
    %461 = vmatpush1.xpose.msra.mxu0 0.0
    %462 = vmatprep.subr.mxu0 0.0
    %463 = vmatpush1.xpose.msra.mxu0 0.0
    %464 = vmatprep.subr.mxu0 0.0
    %465 = vmatpush1.xpose.msra.mxu0 0.0
    %466 = vmatprep.subr.mxu0 0.0
    %467 = vmatpush1.xpose.msra.mxu0 0.0
    %468 = vmatprep.subr.mxu0 0.0
    %469 = vmatpush1.xpose.msra.mxu0 0.0
    %470 = vmatprep.mubr.f32.mxu0 0.0
    %471 = vmatmul.mubr.f32.gmra.mrb[0].mxu0 %v374
    %v472 = vpop.f32.mrb[0].mxu0
    %v473 = vadd.f32 0.0, %v472
    %v474 = vpop.f32.mrb[0].mxu0
    %475 = vmatprep.mubr.f32.mxu0 0.0
    %476 = vmatmul.mubr.f32.gmra.mrb[0].mxu0 %v376
    %v477 = vpop.f32.mrb[0].mxu0
    %v478 = vadd.f32 0.0, %v477
    %v479 = vpop.f32.mrb[0].mxu0
    %480 = vmatprep.mubr.f32.mxu0 0.0
    %481 = vmatmul.mubr.f32.gmra.mrb[0].mxu0 %v378
    %v482 = vpop.f32.mrb[0].mxu0
    %v483 = vadd.f32 0.0, %v482
    %v484 = vpop.f32.mrb[0].mxu0
    %485 = vmatprep.mubr.f32.mxu0 0.0
    %486 = vmatmul.mubr.f32.gmra.mrb[0].mxu0 %v380
    %v487 = vpop.f32.mrb[0].mxu0
    %v488 = vadd.f32 0.0, %v487
    %v489 = vpop.f32.mrb[0].mxu0
    %490 = vmatprep.mubr.f32.mxu0 0.0
    %491 = vmatmul.mubr.f32.gmra.mrb[0].mxu0 %v382
    %v492 = vpop.f32.mrb[0].mxu0
    %v493 = vadd.f32 0.0, %v492
    %v494 = vpop.f32.mrb[0].mxu0
    %495 = vmatprep.mubr.f32.mxu0 0.0
    %496 = vmatmul.mubr.f32.gmra.mrb[0].mxu0 %v384
    %v497 = vpop.f32.mrb[0].mxu0
    %v498 = vadd.f32 0.0, %v497
    %v499 = vpop.f32.mrb[0].mxu0
    %500 = vmatprep.mubr.f32.mxu0 0.0
    %501 = vmatmul.mubr.f32.gmra.mrb[0].mxu0 %v386
    %v502 = vpop.f32.mrb[0].mxu0
    %v503 = vadd.f32 0.0, %v502
    %v504 = vpop.f32.mrb[0].mxu0
    %505 = vmatprep.mubr.f32.mxu0 0.0
    %506 = vmatmul.mubr.f32.gmra.mrb[0].mxu0 %v388
    %v507 = vpop.f32.mrb[0].mxu0
    %v508 = vadd.f32 0.0, %v507
    %v509 = vpop.f32.mrb[0].mxu0
    %510 = vdwg.mxu0
    %v511 = vmul.f32 %v473, 0.25
    %v512 = vmul.f32 %v478, 0.25
    %v513 = vmul.f32 %v483, 0.25
    %v514 = vmul.f32 %v488, 0.25
    %v515 = vmul.f32 %v493, 0.25
    %v516 = vmul.f32 %v498, 0.25
    %v517 = vmul.f32 %v503, 0.25
    %v518 = vmul.f32 %v508, 0.25
    %v519 = vadd.f32 %v511, %v64
    %v520 = vadd.f32 %v512, %v65
    %v521 = vadd.f32 %v513, %v66
    %v522 = vadd.f32 %v514, %v67
    %v523 = vadd.f32 %v515, %v68
    %v524 = vadd.f32 %v516, %v69
    %v525 = vadd.f32 %v517, %v70
    %v526 = vadd.f32 %v518, %v71
    %vm527 = vcmask 523264
    %v528 = vsel %vm527, %v519, -inf
    %529 = vmax.xlane.f32.xlu0 %v528
    %v530 = vpop.xlane.xlu0 %529
    %v531 = vsel %vm527, %v520, -inf
    %532 = vmax.xlane.f32.xlu0 %v531
    %v533 = vpop.xlane.xlu0 %532
    %v534 = vsel %vm527, %v521, -inf
    %535 = vmax.xlane.f32.xlu0 %v534
    %v536 = vpop.xlane.xlu0 %535
    %v537 = vsel %vm527, %v522, -inf
    %538 = vmax.xlane.f32.xlu0 %v537
    %v539 = vpop.xlane.xlu0 %538
    %v540 = vsel %vm527, %v523, -inf
    %541 = vmax.xlane.f32.xlu0 %v540
    %v542 = vpop.xlane.xlu0 %541
    %v543 = vsel %vm527, %v524, -inf
    %544 = vmax.xlane.f32.xlu0 %v543
    %v545 = vpop.xlane.xlu0 %544
    %v546 = vsel %vm527, %v525, -inf
    %547 = vmax.xlane.f32.xlu0 %v546
    %v548 = vpop.xlane.xlu0 %547
    %v549 = vsel %vm527, %v526, -inf
    %550 = vmax.xlane.f32.xlu0 %v549
    %v551 = vpop.xlane.xlu0 %550
    %v552 = vsub.f32 %v519, %v530
    %v553 = vsub.f32 %v520, %v533
    %v554 = vsub.f32 %v521, %v536
    %v555 = vsub.f32 %v522, %v539
    %v556 = vsub.f32 %v523, %v542
    %v557 = vsub.f32 %v524, %v545
    %v558 = vsub.f32 %v525, %v548
    %v559 = vsub.f32 %v526, %v551
    %v560 = vmul.f32 %v552, 1.442695
    %v561 = vpow.pop %v560
    %v562 = vmul.f32 %v553, 1.442695
    %v563 = vpow.pop %v562
    %v564 = vmul.f32 %v554, 1.442695
    %v565 = vpow.pop %v564
    %v566 = vmul.f32 %v555, 1.442695
    %v567 = vpow.pop %v566
    %v568 = vmul.f32 %v556, 1.442695
    %v569 = vpow.pop %v568
    %v570 = vmul.f32 %v557, 1.442695
    %v571 = vpow.pop %v570
    %v572 = vmul.f32 %v558, 1.442695
    %v573 = vpow.pop %v572
    %v574 = vmul.f32 %v559, 1.442695
    %v575 = vpow.pop %v574
    %v576 = vsel %vm527, %v561, 0.0
    %577 = vadd.xlane.f32.xlu0 %v576
    %v578 = vpop.xlane.xlu0 %577
    %v579 = vsel %vm527, %v563, 0.0
    %580 = vadd.xlane.f32.xlu0 %v579
    %v581 = vpop.xlane.xlu0 %580
    %v582 = vsel %vm527, %v565, 0.0
    %583 = vadd.xlane.f32.xlu0 %v582
    %v584 = vpop.xlane.xlu0 %583
    %v585 = vsel %vm527, %v567, 0.0
    %586 = vadd.xlane.f32.xlu0 %v585
    %v587 = vpop.xlane.xlu0 %586
    %v588 = vsel %vm527, %v569, 0.0
    %589 = vadd.xlane.f32.xlu0 %v588
    %v590 = vpop.xlane.xlu0 %589
    %v591 = vsel %vm527, %v571, 0.0
    %592 = vadd.xlane.f32.xlu0 %v591
    %v593 = vpop.xlane.xlu0 %592
    %v594 = vsel %vm527, %v573, 0.0
    %595 = vadd.xlane.f32.xlu0 %v594
    %v596 = vpop.xlane.xlu0 %595
    %v597 = vsel %vm527, %v575, 0.0
    %598 = vadd.xlane.f32.xlu0 %v597
    %v599 = vpop.xlane.xlu0 %598
    %v600 = vrcp.pop %v578
    %v601 = vrcp.pop %v581
    %v602 = vrcp.pop %v584
    %v603 = vrcp.pop %v587
    %v604 = vrcp.pop %v590
    %v605 = vrcp.pop %v593
    %v606 = vrcp.pop %v596
    %v607 = vrcp.pop %v599
    %v608 = vmul.f32 %v561, %v600
    %v609 = vmul.f32 %v563, %v601
    %v610 = vmul.f32 %v565, %v602
    %v611 = vmul.f32 %v567, %v603
    %v612 = vmul.f32 %v569, %v604
    %v613 = vmul.f32 %v571, %v605
    %v614 = vmul.f32 %v573, %v606
    %v615 = vmul.f32 %v575, %v607
    %616 = vrot.lane.b32.xlu0 %v311, 64
    %v617 = vpop.permute.xlu0 %616
    %618 = vrot.lane.b32.xlu0 %v316, 64
    %v619 = vpop.permute.xlu0 %618
    %620 = vrot.lane.b32.xlu0 %v321, 64
    %v621 = vpop.permute.xlu0 %620
    %622 = vrot.lane.b32.xlu0 %v326, 64
    %v623 = vpop.permute.xlu0 %622
    %624 = vrot.lane.b32.xlu0 %v331, 64
    %v625 = vpop.permute.xlu0 %624
    %626 = vrot.lane.b32.xlu0 %v336, 64
    %v627 = vpop.permute.xlu0 %626
    %628 = vrot.lane.b32.xlu0 %v341, 64
    %v629 = vpop.permute.xlu0 %628
    %630 = vrot.lane.b32.xlu0 %v346, 64
    %v631 = vpop.permute.xlu0 %630
    %v641 = vsel %vm527, %v608, 0
    %v644 = vsel %vm527, %v609, 0
    %v647 = vsel %vm527, %v610, 0
    %v650 = vsel %vm527, %v611, 0
    %v653 = vsel %vm527, %v612, 0
    %v656 = vsel %vm527, %v613, 0
    %v659 = vsel %vm527, %v614, 0
    %v662 = vsel %vm527, %v615, 0
    %664 = vmatprep.subr.mxu0 0.0
    %665 = vmatpush1.msra.mxu0 %v617
    %666 = vmatprep.subr.mxu0 0.0
    %667 = vmatpush1.msra.mxu0 %v619
    %668 = vmatprep.subr.mxu0 0.0
    %669 = vmatpush1.msra.mxu0 %v621
    %670 = vmatprep.subr.mxu0 0.0
    %671 = vmatpush1.msra.mxu0 %v623
    %672 = vmatprep.subr.mxu0 0.0
    %673 = vmatpush1.msra.mxu0 %v625
    %674 = vmatprep.subr.mxu0 0.0
    %675 = vmatpush1.msra.mxu0 %v627
    %676 = vmatprep.subr.mxu0 0.0
    %677 = vmatpush1.msra.mxu0 %v629
    %678 = vmatprep.subr.mxu0 0.0
    %679 = vmatpush1.msra.mxu0 %v631
    %680 = vmatprep.subr.mxu0 0.0
    %681 = vmatpush1.msra.mxu0 0.0
    %682 = vmatprep.subr.mxu0 0.0
    %683 = vmatpush1.msra.mxu0 0.0
    %684 = vmatprep.subr.mxu0 0.0
    %685 = vmatpush1.msra.mxu0 0.0
    %686 = vmatprep.subr.mxu0 0.0
    %687 = vmatpush1.msra.mxu0 0.0
    %688 = vmatprep.subr.mxu0 0.0
    %689 = vmatpush1.msra.mxu0 0.0
    %690 = vmatprep.subr.mxu0 0.0
    %691 = vmatpush1.msra.mxu0 0.0
    %692 = vmatprep.subr.mxu0 0.0
    %693 = vmatpush1.msra.mxu0 0.0
    %694 = vmatprep.subr.mxu0 0.0
    %695 = vmatpush1.msra.mxu0 0.0
    %696 = vmatprep.subr.mxu0 0.0
    %697 = vmatpush1.msra.mxu0 0.0
    %698 = vmatprep.subr.mxu0 0.0
    %699 = vmatpush1.msra.mxu0 0.0
    %700 = vmatprep.subr.mxu0 0.0
    %701 = vmatpush1.msra.mxu0 0.0
    %702 = vmatprep.subr.mxu0 0.0
    %703 = vmatpush1.msra.mxu0 0.0
    %704 = vmatprep.subr.mxu0 0.0
    %705 = vmatpush1.msra.mxu0 0.0
    %706 = vmatprep.subr.mxu0 0.0
    %707 = vmatpush1.msra.mxu0 0.0
    %708 = vmatprep.subr.mxu0 0.0
    %709 = vmatpush1.msra.mxu0 0.0
    %710 = vmatprep.subr.mxu0 0.0
    %711 = vmatpush1.msra.mxu0 0.0
    %712 = vmatprep.subr.mxu0 0.0
    %713 = vmatpush1.msra.mxu0 0.0
    %714 = vmatprep.subr.mxu0 0.0
    %715 = vmatpush1.msra.mxu0 0.0
    %716 = vmatprep.subr.mxu0 0.0
    %717 = vmatpush1.msra.mxu0 0.0
    %718 = vmatprep.subr.mxu0 0.0
    %719 = vmatpush1.msra.mxu0 0.0
    %720 = vmatprep.subr.mxu0 0.0
    %721 = vmatpush1.msra.mxu0 0.0
    %722 = vmatprep.subr.mxu0 0.0
    %723 = vmatpush1.msra.mxu0 0.0
    %724 = vmatprep.subr.mxu0 0.0
    %725 = vmatpush1.msra.mxu0 0.0
    %726 = vmatprep.subr.mxu0 0.0
    %727 = vmatpush1.msra.mxu0 0.0
    %728 = vmatprep.mubr.f32.mxu0 0.0
    %729 = vmatmul.mubr.f32.gmra.mrb[0].mxu0 %v641
    %v730 = vpop.f32.mrb[0].mxu0
    %v731 = vadd.f32 0.0, %v730
    %v732 = vpop.f32.mrb[0].mxu0
    %733 = vmatprep.mubr.f32.mxu0 0.0
    %734 = vmatmul.mubr.f32.gmra.mrb[0].mxu0 %v644
    %v735 = vpop.f32.mrb[0].mxu0
    %v736 = vadd.f32 0.0, %v735
    %v737 = vpop.f32.mrb[0].mxu0
    %738 = vmatprep.mubr.f32.mxu0 0.0
    %739 = vmatmul.mubr.f32.gmra.mrb[0].mxu0 %v647
    %v740 = vpop.f32.mrb[0].mxu0
    %v741 = vadd.f32 0.0, %v740
    %v742 = vpop.f32.mrb[0].mxu0
    %743 = vmatprep.mubr.f32.mxu0 0.0
    %744 = vmatmul.mubr.f32.gmra.mrb[0].mxu0 %v650
    %v745 = vpop.f32.mrb[0].mxu0
    %v746 = vadd.f32 0.0, %v745
    %v747 = vpop.f32.mrb[0].mxu0
    %748 = vmatprep.mubr.f32.mxu0 0.0
    %749 = vmatmul.mubr.f32.gmra.mrb[0].mxu0 %v653
    %v750 = vpop.f32.mrb[0].mxu0
    %v751 = vadd.f32 0.0, %v750
    %v752 = vpop.f32.mrb[0].mxu0
    %753 = vmatprep.mubr.f32.mxu0 0.0
    %754 = vmatmul.mubr.f32.gmra.mrb[0].mxu0 %v656
    %v755 = vpop.f32.mrb[0].mxu0
    %v756 = vadd.f32 0.0, %v755
    %v757 = vpop.f32.mrb[0].mxu0
    %758 = vmatprep.mubr.f32.mxu0 0.0
    %759 = vmatmul.mubr.f32.gmra.mrb[0].mxu0 %v659
    %v760 = vpop.f32.mrb[0].mxu0
    %v761 = vadd.f32 0.0, %v760
    %v762 = vpop.f32.mrb[0].mxu0
    %763 = vmatprep.mubr.f32.mxu0 0.0
    %764 = vmatmul.mubr.f32.gmra.mrb[0].mxu0 %v662
    %v765 = vpop.f32.mrb[0].mxu0
    %v766 = vadd.f32 0.0, %v765
    %v767 = vpop.f32.mrb[0].mxu0
    %768 = vdwg.mxu0
    %769 = vrot.lane.b32.xlu0 %v311, 112
    %v770 = vpop.permute.xlu0 %769
    %771 = vrot.lane.b32.xlu0 %v316, 112
    %v772 = vpop.permute.xlu0 %771
    %773 = vrot.lane.b32.xlu0 %v321, 112
    %v774 = vpop.permute.xlu0 %773
    %775 = vrot.lane.b32.xlu0 %v326, 112
    %v776 = vpop.permute.xlu0 %775
    %777 = vrot.lane.b32.xlu0 %v331, 112
    %v778 = vpop.permute.xlu0 %777
    %779 = vrot.lane.b32.xlu0 %v336, 112
    %v780 = vpop.permute.xlu0 %779
    %781 = vrot.lane.b32.xlu0 %v341, 112
    %v782 = vpop.permute.xlu0 %781
    %783 = vrot.lane.b32.xlu0 %v346, 112
    %v784 = vpop.permute.xlu0 %783
    %785 = vrot.lane.b32.xlu0 %v311, 80
    %v786 = vpop.permute.xlu0 %785
    %787 = vrot.lane.b32.xlu0 %v316, 80
    %v788 = vpop.permute.xlu0 %787
    %789 = vrot.lane.b32.xlu0 %v321, 80
    %v790 = vpop.permute.xlu0 %789
    %791 = vrot.lane.b32.xlu0 %v326, 80
    %v792 = vpop.permute.xlu0 %791
    %793 = vrot.lane.b32.xlu0 %v331, 80
    %v794 = vpop.permute.xlu0 %793
    %795 = vrot.lane.b32.xlu0 %v336, 80
    %v796 = vpop.permute.xlu0 %795
    %797 = vrot.lane.b32.xlu0 %v341, 80
    %v798 = vpop.permute.xlu0 %797
    %799 = vrot.lane.b32.xlu0 %v346, 80
    %v800 = vpop.permute.xlu0 %799
    %v801 = vsel %vm373, %v770, 0
    %v803 = vsel %vm373, %v772, 0
    %v805 = vsel %vm373, %v774, 0
    %v807 = vsel %vm373, %v776, 0
    %v809 = vsel %vm373, %v778, 0
    %v811 = vsel %vm373, %v780, 0
    %v813 = vsel %vm373, %v782, 0
    %v815 = vsel %vm373, %v784, 0
    %v817 = vsel %vm373, %v786, 0
    %v819 = vsel %vm373, %v788, 0
    %v821 = vsel %vm373, %v790, 0
    %v823 = vsel %vm373, %v792, 0
    %v825 = vsel %vm373, %v794, 0
    %v827 = vsel %vm373, %v796, 0
    %v829 = vsel %vm373, %v798, 0
    %v831 = vsel %vm373, %v800, 0
    %833 = vmatprep.subr.mxu0 0.0
    %834 = vmatpush1.xpose.msra.mxu0 %v817
    %835 = vmatprep.subr.mxu0 0.0
    %836 = vmatpush1.xpose.msra.mxu0 %v819
    %837 = vmatprep.subr.mxu0 0.0
    %838 = vmatpush1.xpose.msra.mxu0 %v821
    %839 = vmatprep.subr.mxu0 0.0
    %840 = vmatpush1.xpose.msra.mxu0 %v823
    %841 = vmatprep.subr.mxu0 0.0
    %842 = vmatpush1.xpose.msra.mxu0 %v825
    %843 = vmatprep.subr.mxu0 0.0
    %844 = vmatpush1.xpose.msra.mxu0 %v827
    %845 = vmatprep.subr.mxu0 0.0
    %846 = vmatpush1.xpose.msra.mxu0 %v829
    %847 = vmatprep.subr.mxu0 0.0
    %848 = vmatpush1.xpose.msra.mxu0 %v831
    %849 = vmatprep.subr.mxu0 0.0
    %850 = vmatpush1.xpose.msra.mxu0 0.0
    %851 = vmatprep.subr.mxu0 0.0
    %852 = vmatpush1.xpose.msra.mxu0 0.0
    %853 = vmatprep.subr.mxu0 0.0
    %854 = vmatpush1.xpose.msra.mxu0 0.0
    %855 = vmatprep.subr.mxu0 0.0
    %856 = vmatpush1.xpose.msra.mxu0 0.0
    %857 = vmatprep.subr.mxu0 0.0
    %858 = vmatpush1.xpose.msra.mxu0 0.0
    %859 = vmatprep.subr.mxu0 0.0
    %860 = vmatpush1.xpose.msra.mxu0 0.0
    %861 = vmatprep.subr.mxu0 0.0
    %862 = vmatpush1.xpose.msra.mxu0 0.0
    %863 = vmatprep.subr.mxu0 0.0
    %864 = vmatpush1.xpose.msra.mxu0 0.0
    %865 = vmatprep.subr.mxu0 0.0
    %866 = vmatpush1.xpose.msra.mxu0 0.0
    %867 = vmatprep.subr.mxu0 0.0
    %868 = vmatpush1.xpose.msra.mxu0 0.0
    %869 = vmatprep.subr.mxu0 0.0
    %870 = vmatpush1.xpose.msra.mxu0 0.0
    %871 = vmatprep.subr.mxu0 0.0
    %872 = vmatpush1.xpose.msra.mxu0 0.0
    %873 = vmatprep.subr.mxu0 0.0
    %874 = vmatpush1.xpose.msra.mxu0 0.0
    %875 = vmatprep.subr.mxu0 0.0
    %876 = vmatpush1.xpose.msra.mxu0 0.0
    %877 = vmatprep.subr.mxu0 0.0
    %878 = vmatpush1.xpose.msra.mxu0 0.0
    %879 = vmatprep.subr.mxu0 0.0
    %880 = vmatpush1.xpose.msra.mxu0 0.0
    %881 = vmatprep.subr.mxu0 0.0
    %882 = vmatpush1.xpose.msra.mxu0 0.0
    %883 = vmatprep.subr.mxu0 0.0
    %884 = vmatpush1.xpose.msra.mxu0 0.0
    %885 = vmatprep.subr.mxu0 0.0
    %886 = vmatpush1.xpose.msra.mxu0 0.0
    %887 = vmatprep.subr.mxu0 0.0
    %888 = vmatpush1.xpose.msra.mxu0 0.0
    %889 = vmatprep.subr.mxu0 0.0
    %890 = vmatpush1.xpose.msra.mxu0 0.0
    %891 = vmatprep.subr.mxu0 0.0
    %892 = vmatpush1.xpose.msra.mxu0 0.0
    %893 = vmatprep.subr.mxu0 0.0
    %894 = vmatpush1.xpose.msra.mxu0 0.0
    %895 = vmatprep.subr.mxu0 0.0
    %896 = vmatpush1.xpose.msra.mxu0 0.0
    %897 = vmatprep.mubr.f32.mxu0 0.0
    %898 = vmatmul.mubr.f32.gmra.mrb[0].mxu0 %v801
    %v899 = vpop.f32.mrb[0].mxu0
    %v900 = vadd.f32 0.0, %v899
    %v901 = vpop.f32.mrb[0].mxu0
    %902 = vmatprep.mubr.f32.mxu0 0.0
    %903 = vmatmul.mubr.f32.gmra.mrb[0].mxu0 %v803
    %v904 = vpop.f32.mrb[0].mxu0
    %v905 = vadd.f32 0.0, %v904
    %v906 = vpop.f32.mrb[0].mxu0
    %907 = vmatprep.mubr.f32.mxu0 0.0
    %908 = vmatmul.mubr.f32.gmra.mrb[0].mxu0 %v805
    %v909 = vpop.f32.mrb[0].mxu0
    %v910 = vadd.f32 0.0, %v909
    %v911 = vpop.f32.mrb[0].mxu0
    %912 = vmatprep.mubr.f32.mxu0 0.0
    %913 = vmatmul.mubr.f32.gmra.mrb[0].mxu0 %v807
    %v914 = vpop.f32.mrb[0].mxu0
    %v915 = vadd.f32 0.0, %v914
    %v916 = vpop.f32.mrb[0].mxu0
    %917 = vmatprep.mubr.f32.mxu0 0.0
    %918 = vmatmul.mubr.f32.gmra.mrb[0].mxu0 %v809
    %v919 = vpop.f32.mrb[0].mxu0
    %v920 = vadd.f32 0.0, %v919
    %v921 = vpop.f32.mrb[0].mxu0
    %922 = vmatprep.mubr.f32.mxu0 0.0
    %923 = vmatmul.mubr.f32.gmra.mrb[0].mxu0 %v811
    %v924 = vpop.f32.mrb[0].mxu0
    %v925 = vadd.f32 0.0, %v924
    %v926 = vpop.f32.mrb[0].mxu0
    %927 = vmatprep.mubr.f32.mxu0 0.0
    %928 = vmatmul.mubr.f32.gmra.mrb[0].mxu0 %v813
    %v929 = vpop.f32.mrb[0].mxu0
    %v930 = vadd.f32 0.0, %v929
    %v931 = vpop.f32.mrb[0].mxu0
    %932 = vmatprep.mubr.f32.mxu0 0.0
    %933 = vmatmul.mubr.f32.gmra.mrb[0].mxu0 %v815
    %v934 = vpop.f32.mrb[0].mxu0
    %v935 = vadd.f32 0.0, %v934
    %v936 = vpop.f32.mrb[0].mxu0
    %937 = vdwg.mxu0
    %v938 = vmul.f32 %v900, 0.25
    %v939 = vmul.f32 %v905, 0.25
    %v940 = vmul.f32 %v910, 0.25
    %v941 = vmul.f32 %v915, 0.25
    %v942 = vmul.f32 %v920, 0.25
    %v943 = vmul.f32 %v925, 0.25
    %v944 = vmul.f32 %v930, 0.25
    %v945 = vmul.f32 %v935, 0.25
    %v946 = vadd.f32 %v938, %v64
    %v947 = vadd.f32 %v939, %v65
    %v948 = vadd.f32 %v940, %v66
    %v949 = vadd.f32 %v941, %v67
    %v950 = vadd.f32 %v942, %v68
    %v951 = vadd.f32 %v943, %v69
    %v952 = vadd.f32 %v944, %v70
    %v953 = vadd.f32 %v945, %v71
    %v954 = vsel %vm527, %v946, -inf
    %955 = vmax.xlane.f32.xlu0 %v954
    %v956 = vpop.xlane.xlu0 %955
    %v957 = vsel %vm527, %v947, -inf
    %958 = vmax.xlane.f32.xlu0 %v957
    %v959 = vpop.xlane.xlu0 %958
    %v960 = vsel %vm527, %v948, -inf
    %961 = vmax.xlane.f32.xlu0 %v960
    %v962 = vpop.xlane.xlu0 %961
    %v963 = vsel %vm527, %v949, -inf
    %964 = vmax.xlane.f32.xlu0 %v963
    %v965 = vpop.xlane.xlu0 %964
    %v966 = vsel %vm527, %v950, -inf
    %967 = vmax.xlane.f32.xlu0 %v966
    %v968 = vpop.xlane.xlu0 %967
    %v969 = vsel %vm527, %v951, -inf
    %970 = vmax.xlane.f32.xlu0 %v969
    %v971 = vpop.xlane.xlu0 %970
    %v972 = vsel %vm527, %v952, -inf
    %973 = vmax.xlane.f32.xlu0 %v972
    %v974 = vpop.xlane.xlu0 %973
    %v975 = vsel %vm527, %v953, -inf
    %976 = vmax.xlane.f32.xlu0 %v975
    %v977 = vpop.xlane.xlu0 %976
    %v978 = vsub.f32 %v946, %v956
    %v979 = vsub.f32 %v947, %v959
    %v980 = vsub.f32 %v948, %v962
    %v981 = vsub.f32 %v949, %v965
    %v982 = vsub.f32 %v950, %v968
    %v983 = vsub.f32 %v951, %v971
    %v984 = vsub.f32 %v952, %v974
    %v985 = vsub.f32 %v953, %v977
    %v986 = vmul.f32 %v978, 1.442695
    %v987 = vpow.pop %v986
    %v988 = vmul.f32 %v979, 1.442695
    %v989 = vpow.pop %v988
    %v990 = vmul.f32 %v980, 1.442695
    %v991 = vpow.pop %v990
    %v992 = vmul.f32 %v981, 1.442695
    %v993 = vpow.pop %v992
    %v994 = vmul.f32 %v982, 1.442695
    %v995 = vpow.pop %v994
    %v996 = vmul.f32 %v983, 1.442695
    %v997 = vpow.pop %v996
    %v998 = vmul.f32 %v984, 1.442695
    %v999 = vpow.pop %v998
    %v1000 = vmul.f32 %v985, 1.442695
    %v1001 = vpow.pop %v1000
    %v1002 = vsel %vm527, %v987, 0.0
    %1003 = vadd.xlane.f32.xlu0 %v1002
    %v1004 = vpop.xlane.xlu0 %1003
    %v1005 = vsel %vm527, %v989, 0.0
    %1006 = vadd.xlane.f32.xlu0 %v1005
    %v1007 = vpop.xlane.xlu0 %1006
    %v1008 = vsel %vm527, %v991, 0.0
    %1009 = vadd.xlane.f32.xlu0 %v1008
    %v1010 = vpop.xlane.xlu0 %1009
    %v1011 = vsel %vm527, %v993, 0.0
    %1012 = vadd.xlane.f32.xlu0 %v1011
    %v1013 = vpop.xlane.xlu0 %1012
    %v1014 = vsel %vm527, %v995, 0.0
    %1015 = vadd.xlane.f32.xlu0 %v1014
    %v1016 = vpop.xlane.xlu0 %1015
    %v1017 = vsel %vm527, %v997, 0.0
    %1018 = vadd.xlane.f32.xlu0 %v1017
    %v1019 = vpop.xlane.xlu0 %1018
    %v1020 = vsel %vm527, %v999, 0.0
    %1021 = vadd.xlane.f32.xlu0 %v1020
    %v1022 = vpop.xlane.xlu0 %1021
    %v1023 = vsel %vm527, %v1001, 0.0
    %1024 = vadd.xlane.f32.xlu0 %v1023
    %v1025 = vpop.xlane.xlu0 %1024
    %v1026 = vrcp.pop %v1004
    %v1027 = vrcp.pop %v1007
    %v1028 = vrcp.pop %v1010
    %v1029 = vrcp.pop %v1013
    %v1030 = vrcp.pop %v1016
    %v1031 = vrcp.pop %v1019
    %v1032 = vrcp.pop %v1022
    %v1033 = vrcp.pop %v1025
    %v1034 = vmul.f32 %v987, %v1026
    %v1035 = vmul.f32 %v989, %v1027
    %v1036 = vmul.f32 %v991, %v1028
    %v1037 = vmul.f32 %v993, %v1029
    %v1038 = vmul.f32 %v995, %v1030
    %v1039 = vmul.f32 %v997, %v1031
    %v1040 = vmul.f32 %v999, %v1032
    %v1041 = vmul.f32 %v1001, %v1033
    %1042 = vrot.lane.b32.xlu0 %v311, 48
    %v1043 = vpop.permute.xlu0 %1042
    %1044 = vrot.lane.b32.xlu0 %v316, 48
    %v1045 = vpop.permute.xlu0 %1044
    %1046 = vrot.lane.b32.xlu0 %v321, 48
    %v1047 = vpop.permute.xlu0 %1046
    %1048 = vrot.lane.b32.xlu0 %v326, 48
    %v1049 = vpop.permute.xlu0 %1048
    %1050 = vrot.lane.b32.xlu0 %v331, 48
    %v1051 = vpop.permute.xlu0 %1050
    %1052 = vrot.lane.b32.xlu0 %v336, 48
    %v1053 = vpop.permute.xlu0 %1052
    %1054 = vrot.lane.b32.xlu0 %v341, 48
    %v1055 = vpop.permute.xlu0 %1054
    %1056 = vrot.lane.b32.xlu0 %v346, 48
    %v1057 = vpop.permute.xlu0 %1056
    %v1067 = vsel %vm527, %v1034, 0
    %v1070 = vsel %vm527, %v1035, 0
    %v1073 = vsel %vm527, %v1036, 0
    %v1076 = vsel %vm527, %v1037, 0
    %v1079 = vsel %vm527, %v1038, 0
    %v1082 = vsel %vm527, %v1039, 0
    %v1085 = vsel %vm527, %v1040, 0
    %v1088 = vsel %vm527, %v1041, 0
    %1090 = vmatprep.subr.mxu0 0.0
    %1091 = vmatpush1.msra.mxu0 %v1043
    %1092 = vmatprep.subr.mxu0 0.0
    %1093 = vmatpush1.msra.mxu0 %v1045
    %1094 = vmatprep.subr.mxu0 0.0
    %1095 = vmatpush1.msra.mxu0 %v1047
    %1096 = vmatprep.subr.mxu0 0.0
    %1097 = vmatpush1.msra.mxu0 %v1049
    %1098 = vmatprep.subr.mxu0 0.0
    %1099 = vmatpush1.msra.mxu0 %v1051
    %1100 = vmatprep.subr.mxu0 0.0
    %1101 = vmatpush1.msra.mxu0 %v1053
    %1102 = vmatprep.subr.mxu0 0.0
    %1103 = vmatpush1.msra.mxu0 %v1055
    %1104 = vmatprep.subr.mxu0 0.0
    %1105 = vmatpush1.msra.mxu0 %v1057
    %1106 = vmatprep.subr.mxu0 0.0
    %1107 = vmatpush1.msra.mxu0 0.0
    %1108 = vmatprep.subr.mxu0 0.0
    %1109 = vmatpush1.msra.mxu0 0.0
    %1110 = vmatprep.subr.mxu0 0.0
    %1111 = vmatpush1.msra.mxu0 0.0
    %1112 = vmatprep.subr.mxu0 0.0
    %1113 = vmatpush1.msra.mxu0 0.0
    %1114 = vmatprep.subr.mxu0 0.0
    %1115 = vmatpush1.msra.mxu0 0.0
    %1116 = vmatprep.subr.mxu0 0.0
    %1117 = vmatpush1.msra.mxu0 0.0
    %1118 = vmatprep.subr.mxu0 0.0
    %1119 = vmatpush1.msra.mxu0 0.0
    %1120 = vmatprep.subr.mxu0 0.0
    %1121 = vmatpush1.msra.mxu0 0.0
    %1122 = vmatprep.subr.mxu0 0.0
    %1123 = vmatpush1.msra.mxu0 0.0
    %1124 = vmatprep.subr.mxu0 0.0
    %1125 = vmatpush1.msra.mxu0 0.0
    %1126 = vmatprep.subr.mxu0 0.0
    %1127 = vmatpush1.msra.mxu0 0.0
    %1128 = vmatprep.subr.mxu0 0.0
    %1129 = vmatpush1.msra.mxu0 0.0
    %1130 = vmatprep.subr.mxu0 0.0
    %1131 = vmatpush1.msra.mxu0 0.0
    %1132 = vmatprep.subr.mxu0 0.0
    %1133 = vmatpush1.msra.mxu0 0.0
    %1134 = vmatprep.subr.mxu0 0.0
    %1135 = vmatpush1.msra.mxu0 0.0
    %1136 = vmatprep.subr.mxu0 0.0
    %1137 = vmatpush1.msra.mxu0 0.0
    %1138 = vmatprep.subr.mxu0 0.0
    %1139 = vmatpush1.msra.mxu0 0.0
    %1140 = vmatprep.subr.mxu0 0.0
    %1141 = vmatpush1.msra.mxu0 0.0
    %1142 = vmatprep.subr.mxu0 0.0
    %1143 = vmatpush1.msra.mxu0 0.0
    %1144 = vmatprep.subr.mxu0 0.0
    %1145 = vmatpush1.msra.mxu0 0.0
    %1146 = vmatprep.subr.mxu0 0.0
    %1147 = vmatpush1.msra.mxu0 0.0
    %1148 = vmatprep.subr.mxu0 0.0
    %1149 = vmatpush1.msra.mxu0 0.0
    %1150 = vmatprep.subr.mxu0 0.0
    %1151 = vmatpush1.msra.mxu0 0.0
    %1152 = vmatprep.subr.mxu0 0.0
    %1153 = vmatpush1.msra.mxu0 0.0
    %1154 = vmatprep.mubr.f32.mxu0 0.0
    %1155 = vmatmul.mubr.f32.gmra.mrb[0].mxu0 %v1067
    %v1156 = vpop.f32.mrb[0].mxu0
    %v1157 = vadd.f32 0.0, %v1156
    %v1158 = vpop.f32.mrb[0].mxu0
    %1159 = vmatprep.mubr.f32.mxu0 0.0
    %1160 = vmatmul.mubr.f32.gmra.mrb[0].mxu0 %v1070
    %v1161 = vpop.f32.mrb[0].mxu0
    %v1162 = vadd.f32 0.0, %v1161
    %v1163 = vpop.f32.mrb[0].mxu0
    %1164 = vmatprep.mubr.f32.mxu0 0.0
    %1165 = vmatmul.mubr.f32.gmra.mrb[0].mxu0 %v1073
    %v1166 = vpop.f32.mrb[0].mxu0
    %v1167 = vadd.f32 0.0, %v1166
    %v1168 = vpop.f32.mrb[0].mxu0
    %1169 = vmatprep.mubr.f32.mxu0 0.0
    %1170 = vmatmul.mubr.f32.gmra.mrb[0].mxu0 %v1076
    %v1171 = vpop.f32.mrb[0].mxu0
    %v1172 = vadd.f32 0.0, %v1171
    %v1173 = vpop.f32.mrb[0].mxu0
    %1174 = vmatprep.mubr.f32.mxu0 0.0
    %1175 = vmatmul.mubr.f32.gmra.mrb[0].mxu0 %v1079
    %v1176 = vpop.f32.mrb[0].mxu0
    %v1177 = vadd.f32 0.0, %v1176
    %v1178 = vpop.f32.mrb[0].mxu0
    %1179 = vmatprep.mubr.f32.mxu0 0.0
    %1180 = vmatmul.mubr.f32.gmra.mrb[0].mxu0 %v1082
    %v1181 = vpop.f32.mrb[0].mxu0
    %v1182 = vadd.f32 0.0, %v1181
    %v1183 = vpop.f32.mrb[0].mxu0
    %1184 = vmatprep.mubr.f32.mxu0 0.0
    %1185 = vmatmul.mubr.f32.gmra.mrb[0].mxu0 %v1085
    %v1186 = vpop.f32.mrb[0].mxu0
    %v1187 = vadd.f32 0.0, %v1186
    %v1188 = vpop.f32.mrb[0].mxu0
    %1189 = vmatprep.mubr.f32.mxu0 0.0
    %1190 = vmatmul.mubr.f32.gmra.mrb[0].mxu0 %v1088
    %v1191 = vpop.f32.mrb[0].mxu0
    %v1192 = vadd.f32 0.0, %v1191
    %v1193 = vpop.f32.mrb[0].mxu0
    %1194 = vdwg.mxu0
    %1203 = vrot.lane.b32.xlu0 %v1157, 16
    %v1204 = vpop.permute.xlu0 %1203
    %1205 = vrot.lane.b32.xlu0 %v1162, 16
    %v1206 = vpop.permute.xlu0 %1205
    %1207 = vrot.lane.b32.xlu0 %v1167, 16
    %v1208 = vpop.permute.xlu0 %1207
    %1209 = vrot.lane.b32.xlu0 %v1172, 16
    %v1210 = vpop.permute.xlu0 %1209
    %1211 = vrot.lane.b32.xlu0 %v1177, 16
    %v1212 = vpop.permute.xlu0 %1211
    %1213 = vrot.lane.b32.xlu0 %v1182, 16
    %v1214 = vpop.permute.xlu0 %1213
    %1215 = vrot.lane.b32.xlu0 %v1187, 16
    %v1216 = vpop.permute.xlu0 %1215
    %1217 = vrot.lane.b32.xlu0 %v1192, 16
    %v1218 = vpop.permute.xlu0 %1217
    %v1227 = vsel %vm373, %v731, %v1204
    %v1228 = vsel %vm373, %v736, %v1206
    %v1229 = vsel %vm373, %v741, %v1208
    %v1230 = vsel %vm373, %v746, %v1210
    %v1231 = vsel %vm373, %v751, %v1212
    %v1232 = vsel %vm373, %v756, %v1214
    %v1233 = vsel %vm373, %v761, %v1216
    %v1234 = vsel %vm373, %v766, %v1218
    %v1235 = vld [vmem:[%s5] sm:$0xff]
    %v1236 = vld [vmem:[%s5 + $0x8] sm:$0xff]
    %v1237 = vld [vmem:[%s5 + $0x10] sm:$0xff]
    %v1238 = vld [vmem:[%s5 + $0x18] sm:$0xff]
    %v1239 = vld [vmem:[%s6] sm:$0x1]
    %v1241 = vlaneseq
    %v1242 = vshrl.u32 %v1241, 7
    %v1243 = vsub.s32 0, %v1242
    %v1244 = vrot.slane %v1239, %v1243
    %v1247 = vsel %vm75, %v1227, 0
    %v1250 = vsel %vm75, %v1228, 0
    %v1253 = vsel %vm75, %v1229, 0
    %v1256 = vsel %vm75, %v1230, 0
    %v1259 = vsel %vm75, %v1231, 0
    %v1262 = vsel %vm75, %v1232, 0
    %v1265 = vsel %vm75, %v1233, 0
    %v1268 = vsel %vm75, %v1234, 0
    %1270 = vmatprep.subr.mxu0 0.0
    %1271 = vmatpush1.msra.mxu0 %v1235
    %1272 = vmatprep.subr.mxu0 0.0
    %1273 = vmatpush1.msra.mxu0 %v1236
    %1274 = vmatprep.subr.mxu0 0.0
    %1275 = vmatpush1.msra.mxu0 %v1237
    %1276 = vmatprep.subr.mxu0 0.0
    %1277 = vmatpush1.msra.mxu0 %v1238
    %1278 = vmatprep.subr.mxu0 0.0
    %1279 = vmatpush1.msra.mxu0 0.0
    %1280 = vmatprep.subr.mxu0 0.0
    %1281 = vmatpush1.msra.mxu0 0.0
    %1282 = vmatprep.subr.mxu0 0.0
    %1283 = vmatpush1.msra.mxu0 0.0
    %1284 = vmatprep.subr.mxu0 0.0
    %1285 = vmatpush1.msra.mxu0 0.0
    %1286 = vmatprep.subr.mxu0 0.0
    %1287 = vmatpush1.msra.mxu0 0.0
    %1288 = vmatprep.subr.mxu0 0.0
    %1289 = vmatpush1.msra.mxu0 0.0
    %1290 = vmatprep.subr.mxu0 0.0
    %1291 = vmatpush1.msra.mxu0 0.0
    %1292 = vmatprep.subr.mxu0 0.0
    %1293 = vmatpush1.msra.mxu0 0.0
    %1294 = vmatprep.subr.mxu0 0.0
    %1295 = vmatpush1.msra.mxu0 0.0
    %1296 = vmatprep.subr.mxu0 0.0
    %1297 = vmatpush1.msra.mxu0 0.0
    %1298 = vmatprep.subr.mxu0 0.0
    %1299 = vmatpush1.msra.mxu0 0.0
    %1300 = vmatprep.subr.mxu0 0.0
    %1301 = vmatpush1.msra.mxu0 0.0
    %1302 = vmatprep.subr.mxu0 0.0
    %1303 = vmatpush1.msra.mxu0 0.0
    %1304 = vmatprep.subr.mxu0 0.0
    %1305 = vmatpush1.msra.mxu0 0.0
    %1306 = vmatprep.subr.mxu0 0.0
    %1307 = vmatpush1.msra.mxu0 0.0
    %1308 = vmatprep.subr.mxu0 0.0
    %1309 = vmatpush1.msra.mxu0 0.0
    %1310 = vmatprep.subr.mxu0 0.0
    %1311 = vmatpush1.msra.mxu0 0.0
    %1312 = vmatprep.subr.mxu0 0.0
    %1313 = vmatpush1.msra.mxu0 0.0
    %1314 = vmatprep.subr.mxu0 0.0
    %1315 = vmatpush1.msra.mxu0 0.0
    %1316 = vmatprep.subr.mxu0 0.0
    %1317 = vmatpush1.msra.mxu0 0.0
    %1318 = vmatprep.subr.mxu0 0.0
    %1319 = vmatpush1.msra.mxu0 0.0
    %1320 = vmatprep.subr.mxu0 0.0
    %1321 = vmatpush1.msra.mxu0 0.0
    %1322 = vmatprep.subr.mxu0 0.0
    %1323 = vmatpush1.msra.mxu0 0.0
    %1324 = vmatprep.subr.mxu0 0.0
    %1325 = vmatpush1.msra.mxu0 0.0
    %1326 = vmatprep.subr.mxu0 0.0
    %1327 = vmatpush1.msra.mxu0 0.0
    %1328 = vmatprep.subr.mxu0 0.0
    %1329 = vmatpush1.msra.mxu0 0.0
    %1330 = vmatprep.subr.mxu0 0.0
    %1331 = vmatpush1.msra.mxu0 0.0
    %1332 = vmatprep.subr.mxu0 0.0
    %1333 = vmatpush1.msra.mxu0 0.0
    %1334 = vmatprep.mubr.f32.mxu0 0.0
    %1335 = vmatmul.mubr.f32.gmra.mrb[0].mxu0 %v1247
    %v1336 = vpop.f32.mrb[0].mxu0
    %v1337 = vadd.f32 %v1244, %v1336
    %v1338 = vpop.f32.mrb[0].mxu0
    %1339 = vmatprep.mubr.f32.mxu0 0.0
    %1340 = vmatmul.mubr.f32.gmra.mrb[0].mxu0 %v1250
    %v1341 = vpop.f32.mrb[0].mxu0
    %v1342 = vadd.f32 %v1244, %v1341
    %v1343 = vpop.f32.mrb[0].mxu0
    %1344 = vmatprep.mubr.f32.mxu0 0.0
    %1345 = vmatmul.mubr.f32.gmra.mrb[0].mxu0 %v1253
    %v1346 = vpop.f32.mrb[0].mxu0
    %v1347 = vadd.f32 %v1244, %v1346
    %v1348 = vpop.f32.mrb[0].mxu0
    %1349 = vmatprep.mubr.f32.mxu0 0.0
    %1350 = vmatmul.mubr.f32.gmra.mrb[0].mxu0 %v1256
    %v1351 = vpop.f32.mrb[0].mxu0
    %v1352 = vadd.f32 %v1244, %v1351
    %v1353 = vpop.f32.mrb[0].mxu0
    %1354 = vmatprep.mubr.f32.mxu0 0.0
    %1355 = vmatmul.mubr.f32.gmra.mrb[0].mxu0 %v1259
    %v1356 = vpop.f32.mrb[0].mxu0
    %v1357 = vadd.f32 %v1244, %v1356
    %v1358 = vpop.f32.mrb[0].mxu0
    %1359 = vmatprep.mubr.f32.mxu0 0.0
    %1360 = vmatmul.mubr.f32.gmra.mrb[0].mxu0 %v1262
    %v1361 = vpop.f32.mrb[0].mxu0
    %v1362 = vadd.f32 %v1244, %v1361
    %v1363 = vpop.f32.mrb[0].mxu0
    %1364 = vmatprep.mubr.f32.mxu0 0.0
    %1365 = vmatmul.mubr.f32.gmra.mrb[0].mxu0 %v1265
    %v1366 = vpop.f32.mrb[0].mxu0
    %v1367 = vadd.f32 %v1244, %v1366
    %v1368 = vpop.f32.mrb[0].mxu0
    %1369 = vmatprep.mubr.f32.mxu0 0.0
    %1370 = vmatmul.mubr.f32.gmra.mrb[0].mxu0 %v1268
    %v1371 = vpop.f32.mrb[0].mxu0
    %v1372 = vadd.f32 %v1244, %v1371
    %v1373 = vpop.f32.mrb[0].mxu0
    %1374 = vdwg.mxu0
    %v1375 = vadd.f32 %v201, %v1337
    %v1376 = vadd.f32 %v202, %v1342
    %v1377 = vadd.f32 %v203, %v1347
    %v1378 = vadd.f32 %v204, %v1352
    %v1379 = vadd.f32 %v205, %v1357
    %v1380 = vadd.f32 %v206, %v1362
    %v1381 = vadd.f32 %v207, %v1367
    %v1382 = vadd.f32 %v208, %v1372
    %s1383 = scalar_lea.vmem %s2, 1
    %v1384 = vld [vmem:[%s1383] sm:$0x1]
    %s1385 = scalar_lea.vmem %s2, 6
    %v1386 = vld [vmem:[%s1385] sm:$0x1]
    %v1387 = vsel %vm75, %v1375, 0.0
    %1388 = vadd.xlane.f32.xlu0 %v1387
    %v1389 = vpop.xlane.xlu0 %1388
    %v1390 = vsel %vm75, %v1376, 0.0
    %1391 = vadd.xlane.f32.xlu0 %v1390
    %v1392 = vpop.xlane.xlu0 %1391
    %v1393 = vsel %vm75, %v1377, 0.0
    %1394 = vadd.xlane.f32.xlu0 %v1393
    %v1395 = vpop.xlane.xlu0 %1394
    %v1396 = vsel %vm75, %v1378, 0.0
    %1397 = vadd.xlane.f32.xlu0 %v1396
    %v1398 = vpop.xlane.xlu0 %1397
    %v1399 = vsel %vm75, %v1379, 0.0
    %1400 = vadd.xlane.f32.xlu0 %v1399
    %v1401 = vpop.xlane.xlu0 %1400
    %v1402 = vsel %vm75, %v1380, 0.0
    %1403 = vadd.xlane.f32.xlu0 %v1402
    %v1404 = vpop.xlane.xlu0 %1403
    %v1405 = vsel %vm75, %v1381, 0.0
    %1406 = vadd.xlane.f32.xlu0 %v1405
    %v1407 = vpop.xlane.xlu0 %1406
    %v1408 = vsel %vm75, %v1382, 0.0
    %1409 = vadd.xlane.f32.xlu0 %v1408
    %v1410 = vpop.xlane.xlu0 %1409
    %v1411 = vmul.f32 %v1389, %v100
    %v1412 = vmul.f32 %v1392, %v100
    %v1413 = vmul.f32 %v1395, %v100
    %v1414 = vmul.f32 %v1398, %v100
    %v1415 = vmul.f32 %v1401, %v100
    %v1416 = vmul.f32 %v1404, %v100
    %v1417 = vmul.f32 %v1407, %v100
    %v1418 = vmul.f32 %v1410, %v100
    %v1419 = vsub.f32 %v1375, %v1411
    %v1420 = vsub.f32 %v1376, %v1412
    %v1421 = vsub.f32 %v1377, %v1413
    %v1422 = vsub.f32 %v1378, %v1414
    %v1423 = vsub.f32 %v1379, %v1415
    %v1424 = vsub.f32 %v1380, %v1416
    %v1425 = vsub.f32 %v1381, %v1417
    %v1426 = vsub.f32 %v1382, %v1418
    %v1427 = vmul.f32 %v1419, %v1419
    %v1428 = vmul.f32 %v1420, %v1420
    %v1429 = vmul.f32 %v1421, %v1421
    %v1430 = vmul.f32 %v1422, %v1422
    %v1431 = vmul.f32 %v1423, %v1423
    %v1432 = vmul.f32 %v1424, %v1424
    %v1433 = vmul.f32 %v1425, %v1425
    %v1434 = vmul.f32 %v1426, %v1426
    %v1435 = vsel %vm75, %v1427, 0.0
    %1436 = vadd.xlane.f32.xlu0 %v1435
    %v1437 = vpop.xlane.xlu0 %1436
    %v1438 = vsel %vm75, %v1428, 0.0
    %1439 = vadd.xlane.f32.xlu0 %v1438
    %v1440 = vpop.xlane.xlu0 %1439
    %v1441 = vsel %vm75, %v1429, 0.0
    %1442 = vadd.xlane.f32.xlu0 %v1441
    %v1443 = vpop.xlane.xlu0 %1442
    %v1444 = vsel %vm75, %v1430, 0.0
    %1445 = vadd.xlane.f32.xlu0 %v1444
    %v1446 = vpop.xlane.xlu0 %1445
    %v1447 = vsel %vm75, %v1431, 0.0
    %1448 = vadd.xlane.f32.xlu0 %v1447
    %v1449 = vpop.xlane.xlu0 %1448
    %v1450 = vsel %vm75, %v1432, 0.0
    %1451 = vadd.xlane.f32.xlu0 %v1450
    %v1452 = vpop.xlane.xlu0 %1451
    %v1453 = vsel %vm75, %v1433, 0.0
    %1454 = vadd.xlane.f32.xlu0 %v1453
    %v1455 = vpop.xlane.xlu0 %1454
    %v1456 = vsel %vm75, %v1434, 0.0
    %1457 = vadd.xlane.f32.xlu0 %v1456
    %v1458 = vpop.xlane.xlu0 %1457
    %v1459 = vmul.f32 %v1437, %v100
    %v1460 = vmul.f32 %v1440, %v100
    %v1461 = vmul.f32 %v1443, %v100
    %v1462 = vmul.f32 %v1446, %v100
    %v1463 = vmul.f32 %v1449, %v100
    %v1464 = vmul.f32 %v1452, %v100
    %v1465 = vmul.f32 %v1455, %v100
    %v1466 = vmul.f32 %v1458, %v100
    %v1467 = vadd.f32 %v1459, 1e-12
    %v1468 = vadd.f32 %v1460, 1e-12
    %v1469 = vadd.f32 %v1461, 1e-12
    %v1470 = vadd.f32 %v1462, 1e-12
    %v1471 = vadd.f32 %v1463, 1e-12
    %v1472 = vadd.f32 %v1464, 1e-12
    %v1473 = vadd.f32 %v1465, 1e-12
    %v1474 = vadd.f32 %v1466, 1e-12
    %v1475 = vrsqrt.pop %v1467
    %v1476 = vrsqrt.pop %v1468
    %v1477 = vrsqrt.pop %v1469
    %v1478 = vrsqrt.pop %v1470
    %v1479 = vrsqrt.pop %v1471
    %v1480 = vrsqrt.pop %v1472
    %v1481 = vrsqrt.pop %v1473
    %v1482 = vrsqrt.pop %v1474
    %v1483 = vmul.f32 %v1419, %v1475
    %v1484 = vmul.f32 %v1420, %v1476
    %v1485 = vmul.f32 %v1421, %v1477
    %v1486 = vmul.f32 %v1422, %v1478
    %v1487 = vmul.f32 %v1423, %v1479
    %v1488 = vmul.f32 %v1424, %v1480
    %v1489 = vmul.f32 %v1425, %v1481
    %v1490 = vmul.f32 %v1426, %v1482
    %v1492 = vlaneseq
    %v1493 = vshrl.u32 %v1492, 7
    %v1494 = vsub.s32 0, %v1493
    %v1495 = vrot.slane %v1384, %v1494
    %v1497 = vmul.f32 %v1483, %v1495
    %v1498 = vmul.f32 %v1484, %v1495
    %v1499 = vmul.f32 %v1485, %v1495
    %v1500 = vmul.f32 %v1486, %v1495
    %v1501 = vmul.f32 %v1487, %v1495
    %v1502 = vmul.f32 %v1488, %v1495
    %v1503 = vmul.f32 %v1489, %v1495
    %v1504 = vmul.f32 %v1490, %v1495
    %v1506 = vlaneseq
    %v1507 = vshrl.u32 %v1506, 7
    %v1508 = vsub.s32 0, %v1507
    %v1509 = vrot.slane %v1386, %v1508
    %v1511 = vadd.f32 %v1497, %v1509
    %v1512 = vadd.f32 %v1498, %v1509
    %v1513 = vadd.f32 %v1499, %v1509
    %v1514 = vadd.f32 %v1500, %v1509
    %v1515 = vadd.f32 %v1501, %v1509
    %v1516 = vadd.f32 %v1502, %v1509
    %v1517 = vadd.f32 %v1503, %v1509
    %v1518 = vadd.f32 %v1504, %v1509
    %v1519 = vld [vmem:[#allocation2] sm:$0xff]
    %v1520 = vld [vmem:[#allocation2 + $0x8] sm:$0xff]
    %v1521 = vld [vmem:[#allocation2 + $0x10] sm:$0xff]
    %v1522 = vld [vmem:[#allocation2 + $0x18] sm:$0xff]
    %v1523 = vld [vmem:[%s8] sm:$0x1]
    %v1525 = vlaneseq
    %v1526 = vshrl.u32 %v1525, 7
    %v1527 = vsub.s32 0, %v1526
    %v1528 = vrot.slane %v1523, %v1527
    %v1531 = vsel %vm75, %v1511, 0
    %v1534 = vsel %vm75, %v1512, 0
    %v1537 = vsel %vm75, %v1513, 0
    %v1540 = vsel %vm75, %v1514, 0
    %v1543 = vsel %vm75, %v1515, 0
    %v1546 = vsel %vm75, %v1516, 0
    %v1549 = vsel %vm75, %v1517, 0
    %v1552 = vsel %vm75, %v1518, 0
    %1554 = vmatprep.subr.mxu0 0.0
    %1555 = vmatpush1.msra.mxu0 %v1519
    %1556 = vmatprep.subr.mxu0 0.0
    %1557 = vmatpush1.msra.mxu0 %v1520
    %1558 = vmatprep.subr.mxu0 0.0
    %1559 = vmatpush1.msra.mxu0 %v1521
    %1560 = vmatprep.subr.mxu0 0.0
    %1561 = vmatpush1.msra.mxu0 %v1522
    %1562 = vmatprep.subr.mxu0 0.0
    %1563 = vmatpush1.msra.mxu0 0.0
    %1564 = vmatprep.subr.mxu0 0.0
    %1565 = vmatpush1.msra.mxu0 0.0
    %1566 = vmatprep.subr.mxu0 0.0
    %1567 = vmatpush1.msra.mxu0 0.0
    %1568 = vmatprep.subr.mxu0 0.0
    %1569 = vmatpush1.msra.mxu0 0.0
    %1570 = vmatprep.subr.mxu0 0.0
    %1571 = vmatpush1.msra.mxu0 0.0
    %1572 = vmatprep.subr.mxu0 0.0
    %1573 = vmatpush1.msra.mxu0 0.0
    %1574 = vmatprep.subr.mxu0 0.0
    %1575 = vmatpush1.msra.mxu0 0.0
    %1576 = vmatprep.subr.mxu0 0.0
    %1577 = vmatpush1.msra.mxu0 0.0
    %1578 = vmatprep.subr.mxu0 0.0
    %1579 = vmatpush1.msra.mxu0 0.0
    %1580 = vmatprep.subr.mxu0 0.0
    %1581 = vmatpush1.msra.mxu0 0.0
    %1582 = vmatprep.subr.mxu0 0.0
    %1583 = vmatpush1.msra.mxu0 0.0
    %1584 = vmatprep.subr.mxu0 0.0
    %1585 = vmatpush1.msra.mxu0 0.0
    %1586 = vmatprep.subr.mxu0 0.0
    %1587 = vmatpush1.msra.mxu0 0.0
    %1588 = vmatprep.subr.mxu0 0.0
    %1589 = vmatpush1.msra.mxu0 0.0
    %1590 = vmatprep.subr.mxu0 0.0
    %1591 = vmatpush1.msra.mxu0 0.0
    %1592 = vmatprep.subr.mxu0 0.0
    %1593 = vmatpush1.msra.mxu0 0.0
    %1594 = vmatprep.subr.mxu0 0.0
    %1595 = vmatpush1.msra.mxu0 0.0
    %1596 = vmatprep.subr.mxu0 0.0
    %1597 = vmatpush1.msra.mxu0 0.0
    %1598 = vmatprep.subr.mxu0 0.0
    %1599 = vmatpush1.msra.mxu0 0.0
    %1600 = vmatprep.subr.mxu0 0.0
    %1601 = vmatpush1.msra.mxu0 0.0
    %1602 = vmatprep.subr.mxu0 0.0
    %1603 = vmatpush1.msra.mxu0 0.0
    %1604 = vmatprep.subr.mxu0 0.0
    %1605 = vmatpush1.msra.mxu0 0.0
    %1606 = vmatprep.subr.mxu0 0.0
    %1607 = vmatpush1.msra.mxu0 0.0
    %1608 = vmatprep.subr.mxu0 0.0
    %1609 = vmatpush1.msra.mxu0 0.0
    %1610 = vmatprep.subr.mxu0 0.0
    %1611 = vmatpush1.msra.mxu0 0.0
    %1612 = vmatprep.subr.mxu0 0.0
    %1613 = vmatpush1.msra.mxu0 0.0
    %1614 = vmatprep.subr.mxu0 0.0
    %1615 = vmatpush1.msra.mxu0 0.0
    %1616 = vmatprep.subr.mxu0 0.0
    %1617 = vmatpush1.msra.mxu0 0.0
    %1618 = vmatprep.mubr.f32.mxu0 0.0
    %1619 = vmatmul.mubr.f32.gmra.mrb[0].mxu0 %v1531
    %v1620 = vpop.f32.mrb[0].mxu0
    %v1621 = vadd.f32 %v1528, %v1620
    %v1622 = vpop.f32.mrb[0].mxu0
    %1623 = vmatprep.mubr.f32.mxu0 0.0
    %1624 = vmatmul.mubr.f32.gmra.mrb[0].mxu0 %v1534
    %v1625 = vpop.f32.mrb[0].mxu0
    %v1626 = vadd.f32 %v1528, %v1625
    %v1627 = vpop.f32.mrb[0].mxu0
    %1628 = vmatprep.mubr.f32.mxu0 0.0
    %1629 = vmatmul.mubr.f32.gmra.mrb[0].mxu0 %v1537
    %v1630 = vpop.f32.mrb[0].mxu0
    %v1631 = vadd.f32 %v1528, %v1630
    %v1632 = vpop.f32.mrb[0].mxu0
    %1633 = vmatprep.mubr.f32.mxu0 0.0
    %1634 = vmatmul.mubr.f32.gmra.mrb[0].mxu0 %v1540
    %v1635 = vpop.f32.mrb[0].mxu0
    %v1636 = vadd.f32 %v1528, %v1635
    %v1637 = vpop.f32.mrb[0].mxu0
    %1638 = vmatprep.mubr.f32.mxu0 0.0
    %1639 = vmatmul.mubr.f32.gmra.mrb[0].mxu0 %v1543
    %v1640 = vpop.f32.mrb[0].mxu0
    %v1641 = vadd.f32 %v1528, %v1640
    %v1642 = vpop.f32.mrb[0].mxu0
    %1643 = vmatprep.mubr.f32.mxu0 0.0
    %1644 = vmatmul.mubr.f32.gmra.mrb[0].mxu0 %v1546
    %v1645 = vpop.f32.mrb[0].mxu0
    %v1646 = vadd.f32 %v1528, %v1645
    %v1647 = vpop.f32.mrb[0].mxu0
    %1648 = vmatprep.mubr.f32.mxu0 0.0
    %1649 = vmatmul.mubr.f32.gmra.mrb[0].mxu0 %v1549
    %v1650 = vpop.f32.mrb[0].mxu0
    %v1651 = vadd.f32 %v1528, %v1650
    %v1652 = vpop.f32.mrb[0].mxu0
    %1653 = vmatprep.mubr.f32.mxu0 0.0
    %1654 = vmatmul.mubr.f32.gmra.mrb[0].mxu0 %v1552
    %v1655 = vpop.f32.mrb[0].mxu0
    %v1656 = vadd.f32 %v1528, %v1655
    %v1657 = vpop.f32.mrb[0].mxu0
    %1658 = vdwg.mxu0
    %v1659 = vmul.f32 %v1621, %v1621
    %v1660 = vmul.f32 %v1626, %v1626
    %v1661 = vmul.f32 %v1631, %v1631
    %v1662 = vmul.f32 %v1636, %v1636
    %v1663 = vmul.f32 %v1641, %v1641
    %v1664 = vmul.f32 %v1646, %v1646
    %v1665 = vmul.f32 %v1651, %v1651
    %v1666 = vmul.f32 %v1656, %v1656
    %v1667 = vmul.f32 %v1621, %v1659
    %v1668 = vmul.f32 %v1626, %v1660
    %v1669 = vmul.f32 %v1631, %v1661
    %v1670 = vmul.f32 %v1636, %v1662
    %v1671 = vmul.f32 %v1641, %v1663
    %v1672 = vmul.f32 %v1646, %v1664
    %v1673 = vmul.f32 %v1651, %v1665
    %v1674 = vmul.f32 %v1656, %v1666
    %v1675 = vmul.f32 %v1667, 0.044715
    %v1676 = vmul.f32 %v1668, 0.044715
    %v1677 = vmul.f32 %v1669, 0.044715
    %v1678 = vmul.f32 %v1670, 0.044715
    %v1679 = vmul.f32 %v1671, 0.044715
    %v1680 = vmul.f32 %v1672, 0.044715
    %v1681 = vmul.f32 %v1673, 0.044715
    %v1682 = vmul.f32 %v1674, 0.044715
    %v1683 = vadd.f32 %v1621, %v1675
    %v1684 = vadd.f32 %v1626, %v1676
    %v1685 = vadd.f32 %v1631, %v1677
    %v1686 = vadd.f32 %v1636, %v1678
    %v1687 = vadd.f32 %v1641, %v1679
    %v1688 = vadd.f32 %v1646, %v1680
    %v1689 = vadd.f32 %v1651, %v1681
    %v1690 = vadd.f32 %v1656, %v1682
    %v1691 = vmul.f32 %v1683, 0.7978846
    %v1692 = vmul.f32 %v1684, 0.7978846
    %v1693 = vmul.f32 %v1685, 0.7978846
    %v1694 = vmul.f32 %v1686, 0.7978846
    %v1695 = vmul.f32 %v1687, 0.7978846
    %v1696 = vmul.f32 %v1688, 0.7978846
    %v1697 = vmul.f32 %v1689, 0.7978846
    %v1698 = vmul.f32 %v1690, 0.7978846
    %v1699 = vtanh.pop %v1691
    %v1700 = vtanh.pop %v1692
    %v1701 = vtanh.pop %v1693
    %v1702 = vtanh.pop %v1694
    %v1703 = vtanh.pop %v1695
    %v1704 = vtanh.pop %v1696
    %v1705 = vtanh.pop %v1697
    %v1706 = vtanh.pop %v1698
    %v1707 = vadd.f32 %v1699, 1.0
    %v1708 = vadd.f32 %v1700, 1.0
    %v1709 = vadd.f32 %v1701, 1.0
    %v1710 = vadd.f32 %v1702, 1.0
    %v1711 = vadd.f32 %v1703, 1.0
    %v1712 = vadd.f32 %v1704, 1.0
    %v1713 = vadd.f32 %v1705, 1.0
    %v1714 = vadd.f32 %v1706, 1.0
    %v1715 = vmul.f32 %v1707, 0.5
    %v1716 = vmul.f32 %v1708, 0.5
    %v1717 = vmul.f32 %v1709, 0.5
    %v1718 = vmul.f32 %v1710, 0.5
    %v1719 = vmul.f32 %v1711, 0.5
    %v1720 = vmul.f32 %v1712, 0.5
    %v1721 = vmul.f32 %v1713, 0.5
    %v1722 = vmul.f32 %v1714, 0.5
    %v1723 = vmul.f32 %v1621, %v1715
    %v1724 = vmul.f32 %v1626, %v1716
    %v1725 = vmul.f32 %v1631, %v1717
    %v1726 = vmul.f32 %v1636, %v1718
    %v1727 = vmul.f32 %v1641, %v1719
    %v1728 = vmul.f32 %v1646, %v1720
    %v1729 = vmul.f32 %v1651, %v1721
    %v1730 = vmul.f32 %v1656, %v1722
    %v1731 = vld [vmem:[%s9] sm:$0xff]
    %v1732 = vld [vmem:[%s9 + $0x8] sm:$0xff]
    %v1733 = vld [vmem:[%s9 + $0x10] sm:$0xff]
    %v1734 = vld [vmem:[%s9 + $0x18] sm:$0xff]
    %v1735 = vld [vmem:[%s9 + $0x20] sm:$0xff]
    %v1736 = vld [vmem:[%s9 + $0x28] sm:$0xff]
    %v1737 = vld [vmem:[%s9 + $0x30] sm:$0xff]
    %v1738 = vld [vmem:[%s9 + $0x38] sm:$0xff]
    %s1739 = scalar_lea.vmem %s6, 2
    %v1740 = vld [vmem:[%s1739] sm:$0x1]
    %v1742 = vlaneseq
    %v1743 = vshrl.u32 %v1742, 7
    %v1744 = vsub.s32 0, %v1743
    %v1745 = vrot.slane %v1740, %v1744
    %v1748 = vsel %vm527, %v1723, 0
    %v1751 = vsel %vm527, %v1724, 0
    %v1754 = vsel %vm527, %v1725, 0
    %v1757 = vsel %vm527, %v1726, 0
    %v1760 = vsel %vm527, %v1727, 0
    %v1763 = vsel %vm527, %v1728, 0
    %v1766 = vsel %vm527, %v1729, 0
    %v1769 = vsel %vm527, %v1730, 0
    %1771 = vmatprep.subr.mxu0 0.0
    %1772 = vmatpush1.msra.mxu0 %v1731
    %1773 = vmatprep.subr.mxu0 0.0
    %1774 = vmatpush1.msra.mxu0 %v1732
    %1775 = vmatprep.subr.mxu0 0.0
    %1776 = vmatpush1.msra.mxu0 %v1733
    %1777 = vmatprep.subr.mxu0 0.0
    %1778 = vmatpush1.msra.mxu0 %v1734
    %1779 = vmatprep.subr.mxu0 0.0
    %1780 = vmatpush1.msra.mxu0 %v1735
    %1781 = vmatprep.subr.mxu0 0.0
    %1782 = vmatpush1.msra.mxu0 %v1736
    %1783 = vmatprep.subr.mxu0 0.0
    %1784 = vmatpush1.msra.mxu0 %v1737
    %1785 = vmatprep.subr.mxu0 0.0
    %1786 = vmatpush1.msra.mxu0 %v1738
    %1787 = vmatprep.subr.mxu0 0.0
    %1788 = vmatpush1.msra.mxu0 0.0
    %1789 = vmatprep.subr.mxu0 0.0
    %1790 = vmatpush1.msra.mxu0 0.0
    %1791 = vmatprep.subr.mxu0 0.0
    %1792 = vmatpush1.msra.mxu0 0.0
    %1793 = vmatprep.subr.mxu0 0.0
    %1794 = vmatpush1.msra.mxu0 0.0
    %1795 = vmatprep.subr.mxu0 0.0
    %1796 = vmatpush1.msra.mxu0 0.0
    %1797 = vmatprep.subr.mxu0 0.0
    %1798 = vmatpush1.msra.mxu0 0.0
    %1799 = vmatprep.subr.mxu0 0.0
    %1800 = vmatpush1.msra.mxu0 0.0
    %1801 = vmatprep.subr.mxu0 0.0
    %1802 = vmatpush1.msra.mxu0 0.0
    %1803 = vmatprep.subr.mxu0 0.0
    %1804 = vmatpush1.msra.mxu0 0.0
    %1805 = vmatprep.subr.mxu0 0.0
    %1806 = vmatpush1.msra.mxu0 0.0
    %1807 = vmatprep.subr.mxu0 0.0
    %1808 = vmatpush1.msra.mxu0 0.0
    %1809 = vmatprep.subr.mxu0 0.0
    %1810 = vmatpush1.msra.mxu0 0.0
    %1811 = vmatprep.subr.mxu0 0.0
    %1812 = vmatpush1.msra.mxu0 0.0
    %1813 = vmatprep.subr.mxu0 0.0
    %1814 = vmatpush1.msra.mxu0 0.0
    %1815 = vmatprep.subr.mxu0 0.0
    %1816 = vmatpush1.msra.mxu0 0.0
    %1817 = vmatprep.subr.mxu0 0.0
    %1818 = vmatpush1.msra.mxu0 0.0
    %1819 = vmatprep.subr.mxu0 0.0
    %1820 = vmatpush1.msra.mxu0 0.0
    %1821 = vmatprep.subr.mxu0 0.0
    %1822 = vmatpush1.msra.mxu0 0.0
    %1823 = vmatprep.subr.mxu0 0.0
    %1824 = vmatpush1.msra.mxu0 0.0
    %1825 = vmatprep.subr.mxu0 0.0
    %1826 = vmatpush1.msra.mxu0 0.0
    %1827 = vmatprep.subr.mxu0 0.0
    %1828 = vmatpush1.msra.mxu0 0.0
    %1829 = vmatprep.subr.mxu0 0.0
    %1830 = vmatpush1.msra.mxu0 0.0
    %1831 = vmatprep.subr.mxu0 0.0
    %1832 = vmatpush1.msra.mxu0 0.0
    %1833 = vmatprep.subr.mxu0 0.0
    %1834 = vmatpush1.msra.mxu0 0.0
    %1835 = vmatprep.mubr.f32.mxu0 0.0
    %1836 = vmatmul.mubr.f32.gmra.mrb[0].mxu0 %v1748
    %v1837 = vpop.f32.mrb[0].mxu0
    %v1838 = vadd.f32 %v1745, %v1837
    %v1839 = vpop.f32.mrb[0].mxu0
    %1840 = vmatprep.mubr.f32.mxu0 0.0
    %1841 = vmatmul.mubr.f32.gmra.mrb[0].mxu0 %v1751
    %v1842 = vpop.f32.mrb[0].mxu0
    %v1843 = vadd.f32 %v1745, %v1842
    %v1844 = vpop.f32.mrb[0].mxu0
    %1845 = vmatprep.mubr.f32.mxu0 0.0
    %1846 = vmatmul.mubr.f32.gmra.mrb[0].mxu0 %v1754
    %v1847 = vpop.f32.mrb[0].mxu0
    %v1848 = vadd.f32 %v1745, %v1847
    %v1849 = vpop.f32.mrb[0].mxu0
    %1850 = vmatprep.mubr.f32.mxu0 0.0
    %1851 = vmatmul.mubr.f32.gmra.mrb[0].mxu0 %v1757
    %v1852 = vpop.f32.mrb[0].mxu0
    %v1853 = vadd.f32 %v1745, %v1852
    %v1854 = vpop.f32.mrb[0].mxu0
    %1855 = vmatprep.mubr.f32.mxu0 0.0
    %1856 = vmatmul.mubr.f32.gmra.mrb[0].mxu0 %v1760
    %v1857 = vpop.f32.mrb[0].mxu0
    %v1858 = vadd.f32 %v1745, %v1857
    %v1859 = vpop.f32.mrb[0].mxu0
    %1860 = vmatprep.mubr.f32.mxu0 0.0
    %1861 = vmatmul.mubr.f32.gmra.mrb[0].mxu0 %v1763
    %v1862 = vpop.f32.mrb[0].mxu0
    %v1863 = vadd.f32 %v1745, %v1862
    %v1864 = vpop.f32.mrb[0].mxu0
    %1865 = vmatprep.mubr.f32.mxu0 0.0
    %1866 = vmatmul.mubr.f32.gmra.mrb[0].mxu0 %v1766
    %v1867 = vpop.f32.mrb[0].mxu0
    %v1868 = vadd.f32 %v1745, %v1867
    %v1869 = vpop.f32.mrb[0].mxu0
    %1870 = vmatprep.mubr.f32.mxu0 0.0
    %1871 = vmatmul.mubr.f32.gmra.mrb[0].mxu0 %v1769
    %v1872 = vpop.f32.mrb[0].mxu0
    %v1873 = vadd.f32 %v1745, %v1872
    %v1874 = vpop.f32.mrb[0].mxu0
    %1875 = vdwg.mxu0
    %v1876 = vadd.f32 %v1511, %v1838
    %v1877 = vadd.f32 %v1512, %v1843
    %v1878 = vadd.f32 %v1513, %v1848
    %v1879 = vadd.f32 %v1514, %v1853
    %v1880 = vadd.f32 %v1515, %v1858
    %v1881 = vadd.f32 %v1516, %v1863
    %v1882 = vadd.f32 %v1517, %v1868
    %v1883 = vadd.f32 %v1518, %v1873
    %s1884 = scalar_lea.vmem %s2, 2
    %v1885 = vld [vmem:[%s1884] sm:$0x1]
    %s1886 = scalar_lea.vmem %s2, 7
    %v1887 = vld [vmem:[%s1886] sm:$0x1]
    %v1888 = vsel %vm75, %v1876, 0.0
    %1889 = vadd.xlane.f32.xlu0 %v1888
    %v1890 = vpop.xlane.xlu0 %1889
    %v1891 = vsel %vm75, %v1877, 0.0
    %1892 = vadd.xlane.f32.xlu0 %v1891
    %v1893 = vpop.xlane.xlu0 %1892
    %v1894 = vsel %vm75, %v1878, 0.0
    %1895 = vadd.xlane.f32.xlu0 %v1894
    %v1896 = vpop.xlane.xlu0 %1895
    %v1897 = vsel %vm75, %v1879, 0.0
    %1898 = vadd.xlane.f32.xlu0 %v1897
    %v1899 = vpop.xlane.xlu0 %1898
    %v1900 = vsel %vm75, %v1880, 0.0
    %1901 = vadd.xlane.f32.xlu0 %v1900
    %v1902 = vpop.xlane.xlu0 %1901
    %v1903 = vsel %vm75, %v1881, 0.0
    %1904 = vadd.xlane.f32.xlu0 %v1903
    %v1905 = vpop.xlane.xlu0 %1904
    %v1906 = vsel %vm75, %v1882, 0.0
    %1907 = vadd.xlane.f32.xlu0 %v1906
    %v1908 = vpop.xlane.xlu0 %1907
    %v1909 = vsel %vm75, %v1883, 0.0
    %1910 = vadd.xlane.f32.xlu0 %v1909
    %v1911 = vpop.xlane.xlu0 %1910
    %v1912 = vmul.f32 %v1890, %v100
    %v1913 = vmul.f32 %v1893, %v100
    %v1914 = vmul.f32 %v1896, %v100
    %v1915 = vmul.f32 %v1899, %v100
    %v1916 = vmul.f32 %v1902, %v100
    %v1917 = vmul.f32 %v1905, %v100
    %v1918 = vmul.f32 %v1908, %v100
    %v1919 = vmul.f32 %v1911, %v100
    %v1920 = vsub.f32 %v1876, %v1912
    %v1921 = vsub.f32 %v1877, %v1913
    %v1922 = vsub.f32 %v1878, %v1914
    %v1923 = vsub.f32 %v1879, %v1915
    %v1924 = vsub.f32 %v1880, %v1916
    %v1925 = vsub.f32 %v1881, %v1917
    %v1926 = vsub.f32 %v1882, %v1918
    %v1927 = vsub.f32 %v1883, %v1919
    %v1928 = vmul.f32 %v1920, %v1920
    %v1929 = vmul.f32 %v1921, %v1921
    %v1930 = vmul.f32 %v1922, %v1922
    %v1931 = vmul.f32 %v1923, %v1923
    %v1932 = vmul.f32 %v1924, %v1924
    %v1933 = vmul.f32 %v1925, %v1925
    %v1934 = vmul.f32 %v1926, %v1926
    %v1935 = vmul.f32 %v1927, %v1927
    %v1936 = vsel %vm75, %v1928, 0.0
    %1937 = vadd.xlane.f32.xlu0 %v1936
    %v1938 = vpop.xlane.xlu0 %1937
    %v1939 = vsel %vm75, %v1929, 0.0
    %1940 = vadd.xlane.f32.xlu0 %v1939
    %v1941 = vpop.xlane.xlu0 %1940
    %v1942 = vsel %vm75, %v1930, 0.0
    %1943 = vadd.xlane.f32.xlu0 %v1942
    %v1944 = vpop.xlane.xlu0 %1943
    %v1945 = vsel %vm75, %v1931, 0.0
    %1946 = vadd.xlane.f32.xlu0 %v1945
    %v1947 = vpop.xlane.xlu0 %1946
    %v1948 = vsel %vm75, %v1932, 0.0
    %1949 = vadd.xlane.f32.xlu0 %v1948
    %v1950 = vpop.xlane.xlu0 %1949
    %v1951 = vsel %vm75, %v1933, 0.0
    %1952 = vadd.xlane.f32.xlu0 %v1951
    %v1953 = vpop.xlane.xlu0 %1952
    %v1954 = vsel %vm75, %v1934, 0.0
    %1955 = vadd.xlane.f32.xlu0 %v1954
    %v1956 = vpop.xlane.xlu0 %1955
    %v1957 = vsel %vm75, %v1935, 0.0
    %1958 = vadd.xlane.f32.xlu0 %v1957
    %v1959 = vpop.xlane.xlu0 %1958
    %v1960 = vmul.f32 %v1938, %v100
    %v1961 = vmul.f32 %v1941, %v100
    %v1962 = vmul.f32 %v1944, %v100
    %v1963 = vmul.f32 %v1947, %v100
    %v1964 = vmul.f32 %v1950, %v100
    %v1965 = vmul.f32 %v1953, %v100
    %v1966 = vmul.f32 %v1956, %v100
    %v1967 = vmul.f32 %v1959, %v100
    %v1968 = vadd.f32 %v1960, 1e-12
    %v1969 = vadd.f32 %v1961, 1e-12
    %v1970 = vadd.f32 %v1962, 1e-12
    %v1971 = vadd.f32 %v1963, 1e-12
    %v1972 = vadd.f32 %v1964, 1e-12
    %v1973 = vadd.f32 %v1965, 1e-12
    %v1974 = vadd.f32 %v1966, 1e-12
    %v1975 = vadd.f32 %v1967, 1e-12
    %v1976 = vrsqrt.pop %v1968
    %v1977 = vrsqrt.pop %v1969
    %v1978 = vrsqrt.pop %v1970
    %v1979 = vrsqrt.pop %v1971
    %v1980 = vrsqrt.pop %v1972
    %v1981 = vrsqrt.pop %v1973
    %v1982 = vrsqrt.pop %v1974
    %v1983 = vrsqrt.pop %v1975
    %v1984 = vmul.f32 %v1920, %v1976
    %v1985 = vmul.f32 %v1921, %v1977
    %v1986 = vmul.f32 %v1922, %v1978
    %v1987 = vmul.f32 %v1923, %v1979
    %v1988 = vmul.f32 %v1924, %v1980
    %v1989 = vmul.f32 %v1925, %v1981
    %v1990 = vmul.f32 %v1926, %v1982
    %v1991 = vmul.f32 %v1927, %v1983
    %v1993 = vlaneseq
    %v1994 = vshrl.u32 %v1993, 7
    %v1995 = vsub.s32 0, %v1994
    %v1996 = vrot.slane %v1885, %v1995
    %v1998 = vmul.f32 %v1984, %v1996
    %v1999 = vmul.f32 %v1985, %v1996
    %v2000 = vmul.f32 %v1986, %v1996
    %v2001 = vmul.f32 %v1987, %v1996
    %v2002 = vmul.f32 %v1988, %v1996
    %v2003 = vmul.f32 %v1989, %v1996
    %v2004 = vmul.f32 %v1990, %v1996
    %v2005 = vmul.f32 %v1991, %v1996
    %v2007 = vlaneseq
    %v2008 = vshrl.u32 %v2007, 7
    %v2009 = vsub.s32 0, %v2008
    %v2010 = vrot.slane %v1887, %v2009
    %v2012 = vadd.f32 %v1998, %v2010
    %v2013 = vadd.f32 %v1999, %v2010
    %v2014 = vadd.f32 %v2000, %v2010
    %v2015 = vadd.f32 %v2001, %v2010
    %v2016 = vadd.f32 %v2002, %v2010
    %v2017 = vadd.f32 %v2003, %v2010
    %v2018 = vadd.f32 %v2004, %v2010
    %v2019 = vadd.f32 %v2005, %v2010
    %s2020 = scalar_lea.vmem %s3, 32
    %v2021 = vld [vmem:[%s2020] sm:$0xff]
    %v2022 = vld [vmem:[%s2020 + $0x8] sm:$0xff]
    %v2023 = vld [vmem:[%s2020 + $0x10] sm:$0xff]
    %v2024 = vld [vmem:[%s2020 + $0x18] sm:$0xff]
    %s2025 = scalar_lea.vmem %s4, 1
    %v2026 = vld [vmem:[%s2025] sm:$0x1]
    %v2028 = vlaneseq
    %v2029 = vshrl.u32 %v2028, 7
    %v2030 = vsub.s32 0, %v2029
    %v2031 = vrot.slane %v2026, %v2030
    %v2034 = vsel %vm75, %v2012, 0
    %v2037 = vsel %vm75, %v2013, 0
    %v2040 = vsel %vm75, %v2014, 0
    %v2043 = vsel %vm75, %v2015, 0
    %v2046 = vsel %vm75, %v2016, 0
    %v2049 = vsel %vm75, %v2017, 0
    %v2052 = vsel %vm75, %v2018, 0
    %v2055 = vsel %vm75, %v2019, 0
    %2057 = vmatprep.subr.mxu0 0.0
    %2058 = vmatpush1.msra.mxu0 %v2021
    %2059 = vmatprep.subr.mxu0 0.0
    %2060 = vmatpush1.msra.mxu0 %v2022
    %2061 = vmatprep.subr.mxu0 0.0
    %2062 = vmatpush1.msra.mxu0 %v2023
    %2063 = vmatprep.subr.mxu0 0.0
    %2064 = vmatpush1.msra.mxu0 %v2024
    %2065 = vmatprep.subr.mxu0 0.0
    %2066 = vmatpush1.msra.mxu0 0.0
    %2067 = vmatprep.subr.mxu0 0.0
    %2068 = vmatpush1.msra.mxu0 0.0
    %2069 = vmatprep.subr.mxu0 0.0
    %2070 = vmatpush1.msra.mxu0 0.0
    %2071 = vmatprep.subr.mxu0 0.0
    %2072 = vmatpush1.msra.mxu0 0.0
    %2073 = vmatprep.subr.mxu0 0.0
    %2074 = vmatpush1.msra.mxu0 0.0
    %2075 = vmatprep.subr.mxu0 0.0
    %2076 = vmatpush1.msra.mxu0 0.0
    %2077 = vmatprep.subr.mxu0 0.0
    %2078 = vmatpush1.msra.mxu0 0.0
    %2079 = vmatprep.subr.mxu0 0.0
    %2080 = vmatpush1.msra.mxu0 0.0
    %2081 = vmatprep.subr.mxu0 0.0
    %2082 = vmatpush1.msra.mxu0 0.0
    %2083 = vmatprep.subr.mxu0 0.0
    %2084 = vmatpush1.msra.mxu0 0.0
    %2085 = vmatprep.subr.mxu0 0.0
    %2086 = vmatpush1.msra.mxu0 0.0
    %2087 = vmatprep.subr.mxu0 0.0
    %2088 = vmatpush1.msra.mxu0 0.0
    %2089 = vmatprep.subr.mxu0 0.0
    %2090 = vmatpush1.msra.mxu0 0.0
    %2091 = vmatprep.subr.mxu0 0.0
    %2092 = vmatpush1.msra.mxu0 0.0
    %2093 = vmatprep.subr.mxu0 0.0
    %2094 = vmatpush1.msra.mxu0 0.0
    %2095 = vmatprep.subr.mxu0 0.0
    %2096 = vmatpush1.msra.mxu0 0.0
    %2097 = vmatprep.subr.mxu0 0.0
    %2098 = vmatpush1.msra.mxu0 0.0
    %2099 = vmatprep.subr.mxu0 0.0
    %2100 = vmatpush1.msra.mxu0 0.0
    %2101 = vmatprep.subr.mxu0 0.0
    %2102 = vmatpush1.msra.mxu0 0.0
    %2103 = vmatprep.subr.mxu0 0.0
    %2104 = vmatpush1.msra.mxu0 0.0
    %2105 = vmatprep.subr.mxu0 0.0
    %2106 = vmatpush1.msra.mxu0 0.0
    %2107 = vmatprep.subr.mxu0 0.0
    %2108 = vmatpush1.msra.mxu0 0.0
    %2109 = vmatprep.subr.mxu0 0.0
    %2110 = vmatpush1.msra.mxu0 0.0
    %2111 = vmatprep.subr.mxu0 0.0
    %2112 = vmatpush1.msra.mxu0 0.0
    %2113 = vmatprep.subr.mxu0 0.0
    %2114 = vmatpush1.msra.mxu0 0.0
    %2115 = vmatprep.subr.mxu0 0.0
    %2116 = vmatpush1.msra.mxu0 0.0
    %2117 = vmatprep.subr.mxu0 0.0
    %2118 = vmatpush1.msra.mxu0 0.0
    %2119 = vmatprep.subr.mxu0 0.0
    %2120 = vmatpush1.msra.mxu0 0.0
    %2121 = vmatprep.mubr.f32.mxu0 0.0
    %2122 = vmatmul.mubr.f32.gmra.mrb[0].mxu0 %v2034
    %v2123 = vpop.f32.mrb[0].mxu0
    %v2124 = vadd.f32 %v2031, %v2123
    %v2125 = vpop.f32.mrb[0].mxu0
    %2126 = vmatprep.mubr.f32.mxu0 0.0
    %2127 = vmatmul.mubr.f32.gmra.mrb[0].mxu0 %v2037
    %v2128 = vpop.f32.mrb[0].mxu0
    %v2129 = vadd.f32 %v2031, %v2128
    %v2130 = vpop.f32.mrb[0].mxu0
    %2131 = vmatprep.mubr.f32.mxu0 0.0
    %2132 = vmatmul.mubr.f32.gmra.mrb[0].mxu0 %v2040
    %v2133 = vpop.f32.mrb[0].mxu0
    %v2134 = vadd.f32 %v2031, %v2133
    %v2135 = vpop.f32.mrb[0].mxu0
    %2136 = vmatprep.mubr.f32.mxu0 0.0
    %2137 = vmatmul.mubr.f32.gmra.mrb[0].mxu0 %v2043
    %v2138 = vpop.f32.mrb[0].mxu0
    %v2139 = vadd.f32 %v2031, %v2138
    %v2140 = vpop.f32.mrb[0].mxu0
    %2141 = vmatprep.mubr.f32.mxu0 0.0
    %2142 = vmatmul.mubr.f32.gmra.mrb[0].mxu0 %v2046
    %v2143 = vpop.f32.mrb[0].mxu0
    %v2144 = vadd.f32 %v2031, %v2143
    %v2145 = vpop.f32.mrb[0].mxu0
    %2146 = vmatprep.mubr.f32.mxu0 0.0
    %2147 = vmatmul.mubr.f32.gmra.mrb[0].mxu0 %v2049
    %v2148 = vpop.f32.mrb[0].mxu0
    %v2149 = vadd.f32 %v2031, %v2148
    %v2150 = vpop.f32.mrb[0].mxu0
    %2151 = vmatprep.mubr.f32.mxu0 0.0
    %2152 = vmatmul.mubr.f32.gmra.mrb[0].mxu0 %v2052
    %v2153 = vpop.f32.mrb[0].mxu0
    %v2154 = vadd.f32 %v2031, %v2153
    %v2155 = vpop.f32.mrb[0].mxu0
    %2156 = vmatprep.mubr.f32.mxu0 0.0
    %2157 = vmatmul.mubr.f32.gmra.mrb[0].mxu0 %v2055
    %v2158 = vpop.f32.mrb[0].mxu0
    %v2159 = vadd.f32 %v2031, %v2158
    %v2160 = vpop.f32.mrb[0].mxu0
    %2161 = vdwg.mxu0
    %2170 = vrot.lane.b32.xlu0 %v2124, 96
    %v2171 = vpop.permute.xlu0 %2170
    %2172 = vrot.lane.b32.xlu0 %v2129, 96
    %v2173 = vpop.permute.xlu0 %2172
    %2174 = vrot.lane.b32.xlu0 %v2134, 96
    %v2175 = vpop.permute.xlu0 %2174
    %2176 = vrot.lane.b32.xlu0 %v2139, 96
    %v2177 = vpop.permute.xlu0 %2176
    %2178 = vrot.lane.b32.xlu0 %v2144, 96
    %v2179 = vpop.permute.xlu0 %2178
    %2180 = vrot.lane.b32.xlu0 %v2149, 96
    %v2181 = vpop.permute.xlu0 %2180
    %2182 = vrot.lane.b32.xlu0 %v2154, 96
    %v2183 = vpop.permute.xlu0 %2182
    %2184 = vrot.lane.b32.xlu0 %v2159, 96
    %v2185 = vpop.permute.xlu0 %2184
    %v2186 = vsel %vm373, %v2124, 0
    %v2188 = vsel %vm373, %v2129, 0
    %v2190 = vsel %vm373, %v2134, 0
    %v2192 = vsel %vm373, %v2139, 0
    %v2194 = vsel %vm373, %v2144, 0
    %v2196 = vsel %vm373, %v2149, 0
    %v2198 = vsel %vm373, %v2154, 0
    %v2200 = vsel %vm373, %v2159, 0
    %v2202 = vsel %vm373, %v2171, 0
    %v2204 = vsel %vm373, %v2173, 0
    %v2206 = vsel %vm373, %v2175, 0
    %v2208 = vsel %vm373, %v2177, 0
    %v2210 = vsel %vm373, %v2179, 0
    %v2212 = vsel %vm373, %v2181, 0
    %v2214 = vsel %vm373, %v2183, 0
    %v2216 = vsel %vm373, %v2185, 0
    %2218 = vmatprep.subr.mxu0 0.0
    %2219 = vmatpush1.xpose.msra.mxu0 %v2202
    %2220 = vmatprep.subr.mxu0 0.0
    %2221 = vmatpush1.xpose.msra.mxu0 %v2204
    %2222 = vmatprep.subr.mxu0 0.0
    %2223 = vmatpush1.xpose.msra.mxu0 %v2206
    %2224 = vmatprep.subr.mxu0 0.0
    %2225 = vmatpush1.xpose.msra.mxu0 %v2208
    %2226 = vmatprep.subr.mxu0 0.0
    %2227 = vmatpush1.xpose.msra.mxu0 %v2210
    %2228 = vmatprep.subr.mxu0 0.0
    %2229 = vmatpush1.xpose.msra.mxu0 %v2212
    %2230 = vmatprep.subr.mxu0 0.0
    %2231 = vmatpush1.xpose.msra.mxu0 %v2214
    %2232 = vmatprep.subr.mxu0 0.0
    %2233 = vmatpush1.xpose.msra.mxu0 %v2216
    %2234 = vmatprep.subr.mxu0 0.0
    %2235 = vmatpush1.xpose.msra.mxu0 0.0
    %2236 = vmatprep.subr.mxu0 0.0
    %2237 = vmatpush1.xpose.msra.mxu0 0.0
    %2238 = vmatprep.subr.mxu0 0.0
    %2239 = vmatpush1.xpose.msra.mxu0 0.0
    %2240 = vmatprep.subr.mxu0 0.0
    %2241 = vmatpush1.xpose.msra.mxu0 0.0
    %2242 = vmatprep.subr.mxu0 0.0
    %2243 = vmatpush1.xpose.msra.mxu0 0.0
    %2244 = vmatprep.subr.mxu0 0.0
    %2245 = vmatpush1.xpose.msra.mxu0 0.0
    %2246 = vmatprep.subr.mxu0 0.0
    %2247 = vmatpush1.xpose.msra.mxu0 0.0
    %2248 = vmatprep.subr.mxu0 0.0
    %2249 = vmatpush1.xpose.msra.mxu0 0.0
    %2250 = vmatprep.subr.mxu0 0.0
    %2251 = vmatpush1.xpose.msra.mxu0 0.0
    %2252 = vmatprep.subr.mxu0 0.0
    %2253 = vmatpush1.xpose.msra.mxu0 0.0
    %2254 = vmatprep.subr.mxu0 0.0
    %2255 = vmatpush1.xpose.msra.mxu0 0.0
    %2256 = vmatprep.subr.mxu0 0.0
    %2257 = vmatpush1.xpose.msra.mxu0 0.0
    %2258 = vmatprep.subr.mxu0 0.0
    %2259 = vmatpush1.xpose.msra.mxu0 0.0
    %2260 = vmatprep.subr.mxu0 0.0
    %2261 = vmatpush1.xpose.msra.mxu0 0.0
    %2262 = vmatprep.subr.mxu0 0.0
    %2263 = vmatpush1.xpose.msra.mxu0 0.0
    %2264 = vmatprep.subr.mxu0 0.0
    %2265 = vmatpush1.xpose.msra.mxu0 0.0
    %2266 = vmatprep.subr.mxu0 0.0
    %2267 = vmatpush1.xpose.msra.mxu0 0.0
    %2268 = vmatprep.subr.mxu0 0.0
    %2269 = vmatpush1.xpose.msra.mxu0 0.0
    %2270 = vmatprep.subr.mxu0 0.0
    %2271 = vmatpush1.xpose.msra.mxu0 0.0
    %2272 = vmatprep.subr.mxu0 0.0
    %2273 = vmatpush1.xpose.msra.mxu0 0.0
    %2274 = vmatprep.subr.mxu0 0.0
    %2275 = vmatpush1.xpose.msra.mxu0 0.0
    %2276 = vmatprep.subr.mxu0 0.0
    %2277 = vmatpush1.xpose.msra.mxu0 0.0
    %2278 = vmatprep.subr.mxu0 0.0
    %2279 = vmatpush1.xpose.msra.mxu0 0.0
    %2280 = vmatprep.subr.mxu0 0.0
    %2281 = vmatpush1.xpose.msra.mxu0 0.0
    %2282 = vmatprep.mubr.f32.mxu0 0.0
    %2283 = vmatmul.mubr.f32.gmra.mrb[0].mxu0 %v2186
    %v2284 = vpop.f32.mrb[0].mxu0
    %v2285 = vadd.f32 0.0, %v2284
    %v2286 = vpop.f32.mrb[0].mxu0
    %2287 = vmatprep.mubr.f32.mxu0 0.0
    %2288 = vmatmul.mubr.f32.gmra.mrb[0].mxu0 %v2188
    %v2289 = vpop.f32.mrb[0].mxu0
    %v2290 = vadd.f32 0.0, %v2289
    %v2291 = vpop.f32.mrb[0].mxu0
    %2292 = vmatprep.mubr.f32.mxu0 0.0
    %2293 = vmatmul.mubr.f32.gmra.mrb[0].mxu0 %v2190
    %v2294 = vpop.f32.mrb[0].mxu0
    %v2295 = vadd.f32 0.0, %v2294
    %v2296 = vpop.f32.mrb[0].mxu0
    %2297 = vmatprep.mubr.f32.mxu0 0.0
    %2298 = vmatmul.mubr.f32.gmra.mrb[0].mxu0 %v2192
    %v2299 = vpop.f32.mrb[0].mxu0
    %v2300 = vadd.f32 0.0, %v2299
    %v2301 = vpop.f32.mrb[0].mxu0
    %2302 = vmatprep.mubr.f32.mxu0 0.0
    %2303 = vmatmul.mubr.f32.gmra.mrb[0].mxu0 %v2194
    %v2304 = vpop.f32.mrb[0].mxu0
    %v2305 = vadd.f32 0.0, %v2304
    %v2306 = vpop.f32.mrb[0].mxu0
    %2307 = vmatprep.mubr.f32.mxu0 0.0
    %2308 = vmatmul.mubr.f32.gmra.mrb[0].mxu0 %v2196
    %v2309 = vpop.f32.mrb[0].mxu0
    %v2310 = vadd.f32 0.0, %v2309
    %v2311 = vpop.f32.mrb[0].mxu0
    %2312 = vmatprep.mubr.f32.mxu0 0.0
    %2313 = vmatmul.mubr.f32.gmra.mrb[0].mxu0 %v2198
    %v2314 = vpop.f32.mrb[0].mxu0
    %v2315 = vadd.f32 0.0, %v2314
    %v2316 = vpop.f32.mrb[0].mxu0
    %2317 = vmatprep.mubr.f32.mxu0 0.0
    %2318 = vmatmul.mubr.f32.gmra.mrb[0].mxu0 %v2200
    %v2319 = vpop.f32.mrb[0].mxu0
    %v2320 = vadd.f32 0.0, %v2319
    %v2321 = vpop.f32.mrb[0].mxu0
    %2322 = vdwg.mxu0
    %v2323 = vmul.f32 %v2285, 0.25
    %v2324 = vmul.f32 %v2290, 0.25
    %v2325 = vmul.f32 %v2295, 0.25
    %v2326 = vmul.f32 %v2300, 0.25
    %v2327 = vmul.f32 %v2305, 0.25
    %v2328 = vmul.f32 %v2310, 0.25
    %v2329 = vmul.f32 %v2315, 0.25
    %v2330 = vmul.f32 %v2320, 0.25
    %v2331 = vadd.f32 %v2323, %v64
    %v2332 = vadd.f32 %v2324, %v65
    %v2333 = vadd.f32 %v2325, %v66
    %v2334 = vadd.f32 %v2326, %v67
    %v2335 = vadd.f32 %v2327, %v68
    %v2336 = vadd.f32 %v2328, %v69
    %v2337 = vadd.f32 %v2329, %v70
    %v2338 = vadd.f32 %v2330, %v71
    %v2339 = vsel %vm527, %v2331, -inf
    %2340 = vmax.xlane.f32.xlu0 %v2339
    %v2341 = vpop.xlane.xlu0 %2340
    %v2342 = vsel %vm527, %v2332, -inf
    %2343 = vmax.xlane.f32.xlu0 %v2342
    %v2344 = vpop.xlane.xlu0 %2343
    %v2345 = vsel %vm527, %v2333, -inf
    %2346 = vmax.xlane.f32.xlu0 %v2345
    %v2347 = vpop.xlane.xlu0 %2346
    %v2348 = vsel %vm527, %v2334, -inf
    %2349 = vmax.xlane.f32.xlu0 %v2348
    %v2350 = vpop.xlane.xlu0 %2349
    %v2351 = vsel %vm527, %v2335, -inf
    %2352 = vmax.xlane.f32.xlu0 %v2351
    %v2353 = vpop.xlane.xlu0 %2352
    %v2354 = vsel %vm527, %v2336, -inf
    %2355 = vmax.xlane.f32.xlu0 %v2354
    %v2356 = vpop.xlane.xlu0 %2355
    %v2357 = vsel %vm527, %v2337, -inf
    %2358 = vmax.xlane.f32.xlu0 %v2357
    %v2359 = vpop.xlane.xlu0 %2358
    %v2360 = vsel %vm527, %v2338, -inf
    %2361 = vmax.xlane.f32.xlu0 %v2360
    %v2362 = vpop.xlane.xlu0 %2361
    %v2363 = vsub.f32 %v2331, %v2341
    %v2364 = vsub.f32 %v2332, %v2344
    %v2365 = vsub.f32 %v2333, %v2347
    %v2366 = vsub.f32 %v2334, %v2350
    %v2367 = vsub.f32 %v2335, %v2353
    %v2368 = vsub.f32 %v2336, %v2356
    %v2369 = vsub.f32 %v2337, %v2359
    %v2370 = vsub.f32 %v2338, %v2362
    %v2371 = vmul.f32 %v2363, 1.442695
    %v2372 = vpow.pop %v2371
    %v2373 = vmul.f32 %v2364, 1.442695
    %v2374 = vpow.pop %v2373
    %v2375 = vmul.f32 %v2365, 1.442695
    %v2376 = vpow.pop %v2375
    %v2377 = vmul.f32 %v2366, 1.442695
    %v2378 = vpow.pop %v2377
    %v2379 = vmul.f32 %v2367, 1.442695
    %v2380 = vpow.pop %v2379
    %v2381 = vmul.f32 %v2368, 1.442695
    %v2382 = vpow.pop %v2381
    %v2383 = vmul.f32 %v2369, 1.442695
    %v2384 = vpow.pop %v2383
    %v2385 = vmul.f32 %v2370, 1.442695
    %v2386 = vpow.pop %v2385
    %v2387 = vsel %vm527, %v2372, 0.0
    %2388 = vadd.xlane.f32.xlu0 %v2387
    %v2389 = vpop.xlane.xlu0 %2388
    %v2390 = vsel %vm527, %v2374, 0.0
    %2391 = vadd.xlane.f32.xlu0 %v2390
    %v2392 = vpop.xlane.xlu0 %2391
    %v2393 = vsel %vm527, %v2376, 0.0
    %2394 = vadd.xlane.f32.xlu0 %v2393
    %v2395 = vpop.xlane.xlu0 %2394
    %v2396 = vsel %vm527, %v2378, 0.0
    %2397 = vadd.xlane.f32.xlu0 %v2396
    %v2398 = vpop.xlane.xlu0 %2397
    %v2399 = vsel %vm527, %v2380, 0.0
    %2400 = vadd.xlane.f32.xlu0 %v2399
    %v2401 = vpop.xlane.xlu0 %2400
    %v2402 = vsel %vm527, %v2382, 0.0
    %2403 = vadd.xlane.f32.xlu0 %v2402
    %v2404 = vpop.xlane.xlu0 %2403
    %v2405 = vsel %vm527, %v2384, 0.0
    %2406 = vadd.xlane.f32.xlu0 %v2405
    %v2407 = vpop.xlane.xlu0 %2406
    %v2408 = vsel %vm527, %v2386, 0.0
    %2409 = vadd.xlane.f32.xlu0 %v2408
    %v2410 = vpop.xlane.xlu0 %2409
    %v2411 = vrcp.pop %v2389
    %v2412 = vrcp.pop %v2392
    %v2413 = vrcp.pop %v2395
    %v2414 = vrcp.pop %v2398
    %v2415 = vrcp.pop %v2401
    %v2416 = vrcp.pop %v2404
    %v2417 = vrcp.pop %v2407
    %v2418 = vrcp.pop %v2410
    %v2419 = vmul.f32 %v2372, %v2411
    %v2420 = vmul.f32 %v2374, %v2412
    %v2421 = vmul.f32 %v2376, %v2413
    %v2422 = vmul.f32 %v2378, %v2414
    %v2423 = vmul.f32 %v2380, %v2415
    %v2424 = vmul.f32 %v2382, %v2416
    %v2425 = vmul.f32 %v2384, %v2417
    %v2426 = vmul.f32 %v2386, %v2418
    %2427 = vrot.lane.b32.xlu0 %v2124, 64
    %v2428 = vpop.permute.xlu0 %2427
    %2429 = vrot.lane.b32.xlu0 %v2129, 64
    %v2430 = vpop.permute.xlu0 %2429
    %2431 = vrot.lane.b32.xlu0 %v2134, 64
    %v2432 = vpop.permute.xlu0 %2431
    %2433 = vrot.lane.b32.xlu0 %v2139, 64
    %v2434 = vpop.permute.xlu0 %2433
    %2435 = vrot.lane.b32.xlu0 %v2144, 64
    %v2436 = vpop.permute.xlu0 %2435
    %2437 = vrot.lane.b32.xlu0 %v2149, 64
    %v2438 = vpop.permute.xlu0 %2437
    %2439 = vrot.lane.b32.xlu0 %v2154, 64
    %v2440 = vpop.permute.xlu0 %2439
    %2441 = vrot.lane.b32.xlu0 %v2159, 64
    %v2442 = vpop.permute.xlu0 %2441
    %v2452 = vsel %vm527, %v2419, 0
    %v2455 = vsel %vm527, %v2420, 0
    %v2458 = vsel %vm527, %v2421, 0
    %v2461 = vsel %vm527, %v2422, 0
    %v2464 = vsel %vm527, %v2423, 0
    %v2467 = vsel %vm527, %v2424, 0
    %v2470 = vsel %vm527, %v2425, 0
    %v2473 = vsel %vm527, %v2426, 0
    %2475 = vmatprep.subr.mxu0 0.0
    %2476 = vmatpush1.msra.mxu0 %v2428
    %2477 = vmatprep.subr.mxu0 0.0
    %2478 = vmatpush1.msra.mxu0 %v2430
    %2479 = vmatprep.subr.mxu0 0.0
    %2480 = vmatpush1.msra.mxu0 %v2432
    %2481 = vmatprep.subr.mxu0 0.0
    %2482 = vmatpush1.msra.mxu0 %v2434
    %2483 = vmatprep.subr.mxu0 0.0
    %2484 = vmatpush1.msra.mxu0 %v2436
    %2485 = vmatprep.subr.mxu0 0.0
    %2486 = vmatpush1.msra.mxu0 %v2438
    %2487 = vmatprep.subr.mxu0 0.0
    %2488 = vmatpush1.msra.mxu0 %v2440
    %2489 = vmatprep.subr.mxu0 0.0
    %2490 = vmatpush1.msra.mxu0 %v2442
    %2491 = vmatprep.subr.mxu0 0.0
    %2492 = vmatpush1.msra.mxu0 0.0
    %2493 = vmatprep.subr.mxu0 0.0
    %2494 = vmatpush1.msra.mxu0 0.0
    %2495 = vmatprep.subr.mxu0 0.0
    %2496 = vmatpush1.msra.mxu0 0.0
    %2497 = vmatprep.subr.mxu0 0.0
    %2498 = vmatpush1.msra.mxu0 0.0
    %2499 = vmatprep.subr.mxu0 0.0
    %2500 = vmatpush1.msra.mxu0 0.0
    %2501 = vmatprep.subr.mxu0 0.0
    %2502 = vmatpush1.msra.mxu0 0.0
    %2503 = vmatprep.subr.mxu0 0.0
    %2504 = vmatpush1.msra.mxu0 0.0
    %2505 = vmatprep.subr.mxu0 0.0
    %2506 = vmatpush1.msra.mxu0 0.0
    %2507 = vmatprep.subr.mxu0 0.0
    %2508 = vmatpush1.msra.mxu0 0.0
    %2509 = vmatprep.subr.mxu0 0.0
    %2510 = vmatpush1.msra.mxu0 0.0
    %2511 = vmatprep.subr.mxu0 0.0
    %2512 = vmatpush1.msra.mxu0 0.0
    %2513 = vmatprep.subr.mxu0 0.0
    %2514 = vmatpush1.msra.mxu0 0.0
    %2515 = vmatprep.subr.mxu0 0.0
    %2516 = vmatpush1.msra.mxu0 0.0
    %2517 = vmatprep.subr.mxu0 0.0
    %2518 = vmatpush1.msra.mxu0 0.0
    %2519 = vmatprep.subr.mxu0 0.0
    %2520 = vmatpush1.msra.mxu0 0.0
    %2521 = vmatprep.subr.mxu0 0.0
    %2522 = vmatpush1.msra.mxu0 0.0
    %2523 = vmatprep.subr.mxu0 0.0
    %2524 = vmatpush1.msra.mxu0 0.0
    %2525 = vmatprep.subr.mxu0 0.0
    %2526 = vmatpush1.msra.mxu0 0.0
    %2527 = vmatprep.subr.mxu0 0.0
    %2528 = vmatpush1.msra.mxu0 0.0
    %2529 = vmatprep.subr.mxu0 0.0
    %2530 = vmatpush1.msra.mxu0 0.0
    %2531 = vmatprep.subr.mxu0 0.0
    %2532 = vmatpush1.msra.mxu0 0.0
    %2533 = vmatprep.subr.mxu0 0.0
    %2534 = vmatpush1.msra.mxu0 0.0
    %2535 = vmatprep.subr.mxu0 0.0
    %2536 = vmatpush1.msra.mxu0 0.0
    %2537 = vmatprep.subr.mxu0 0.0
    %2538 = vmatpush1.msra.mxu0 0.0
    %2539 = vmatprep.mubr.f32.mxu0 0.0
    %2540 = vmatmul.mubr.f32.gmra.mrb[0].mxu0 %v2452
    %v2541 = vpop.f32.mrb[0].mxu0
    %v2542 = vadd.f32 0.0, %v2541
    %v2543 = vpop.f32.mrb[0].mxu0
    %2544 = vmatprep.mubr.f32.mxu0 0.0
    %2545 = vmatmul.mubr.f32.gmra.mrb[0].mxu0 %v2455
    %v2546 = vpop.f32.mrb[0].mxu0
    %v2547 = vadd.f32 0.0, %v2546
    %v2548 = vpop.f32.mrb[0].mxu0
    %2549 = vmatprep.mubr.f32.mxu0 0.0
    %2550 = vmatmul.mubr.f32.gmra.mrb[0].mxu0 %v2458
    %v2551 = vpop.f32.mrb[0].mxu0
    %v2552 = vadd.f32 0.0, %v2551
    %v2553 = vpop.f32.mrb[0].mxu0
    %2554 = vmatprep.mubr.f32.mxu0 0.0
    %2555 = vmatmul.mubr.f32.gmra.mrb[0].mxu0 %v2461
    %v2556 = vpop.f32.mrb[0].mxu0
    %v2557 = vadd.f32 0.0, %v2556
    %v2558 = vpop.f32.mrb[0].mxu0
    %2559 = vmatprep.mubr.f32.mxu0 0.0
    %2560 = vmatmul.mubr.f32.gmra.mrb[0].mxu0 %v2464
    %v2561 = vpop.f32.mrb[0].mxu0
    %v2562 = vadd.f32 0.0, %v2561
    %v2563 = vpop.f32.mrb[0].mxu0
    %2564 = vmatprep.mubr.f32.mxu0 0.0
    %2565 = vmatmul.mubr.f32.gmra.mrb[0].mxu0 %v2467
    %v2566 = vpop.f32.mrb[0].mxu0
    %v2567 = vadd.f32 0.0, %v2566
    %v2568 = vpop.f32.mrb[0].mxu0
    %2569 = vmatprep.mubr.f32.mxu0 0.0
    %2570 = vmatmul.mubr.f32.gmra.mrb[0].mxu0 %v2470
    %v2571 = vpop.f32.mrb[0].mxu0
    %v2572 = vadd.f32 0.0, %v2571
    %v2573 = vpop.f32.mrb[0].mxu0
    %2574 = vmatprep.mubr.f32.mxu0 0.0
    %2575 = vmatmul.mubr.f32.gmra.mrb[0].mxu0 %v2473
    %v2576 = vpop.f32.mrb[0].mxu0
    %v2577 = vadd.f32 0.0, %v2576
    %v2578 = vpop.f32.mrb[0].mxu0
    %2579 = vdwg.mxu0
    %2580 = vrot.lane.b32.xlu0 %v2124, 112
    %v2581 = vpop.permute.xlu0 %2580
    %2582 = vrot.lane.b32.xlu0 %v2129, 112
    %v2583 = vpop.permute.xlu0 %2582
    %2584 = vrot.lane.b32.xlu0 %v2134, 112
    %v2585 = vpop.permute.xlu0 %2584
    %2586 = vrot.lane.b32.xlu0 %v2139, 112
    %v2587 = vpop.permute.xlu0 %2586
    %2588 = vrot.lane.b32.xlu0 %v2144, 112
    %v2589 = vpop.permute.xlu0 %2588
    %2590 = vrot.lane.b32.xlu0 %v2149, 112
    %v2591 = vpop.permute.xlu0 %2590
    %2592 = vrot.lane.b32.xlu0 %v2154, 112
    %v2593 = vpop.permute.xlu0 %2592
    %2594 = vrot.lane.b32.xlu0 %v2159, 112
    %v2595 = vpop.permute.xlu0 %2594
    %2596 = vrot.lane.b32.xlu0 %v2124, 80
    %v2597 = vpop.permute.xlu0 %2596
    %2598 = vrot.lane.b32.xlu0 %v2129, 80
    %v2599 = vpop.permute.xlu0 %2598
    %2600 = vrot.lane.b32.xlu0 %v2134, 80
    %v2601 = vpop.permute.xlu0 %2600
    %2602 = vrot.lane.b32.xlu0 %v2139, 80
    %v2603 = vpop.permute.xlu0 %2602
    %2604 = vrot.lane.b32.xlu0 %v2144, 80
    %v2605 = vpop.permute.xlu0 %2604
    %2606 = vrot.lane.b32.xlu0 %v2149, 80
    %v2607 = vpop.permute.xlu0 %2606
    %2608 = vrot.lane.b32.xlu0 %v2154, 80
    %v2609 = vpop.permute.xlu0 %2608
    %2610 = vrot.lane.b32.xlu0 %v2159, 80
    %v2611 = vpop.permute.xlu0 %2610
    %v2612 = vsel %vm373, %v2581, 0
    %v2614 = vsel %vm373, %v2583, 0
    %v2616 = vsel %vm373, %v2585, 0
    %v2618 = vsel %vm373, %v2587, 0
    %v2620 = vsel %vm373, %v2589, 0
    %v2622 = vsel %vm373, %v2591, 0
    %v2624 = vsel %vm373, %v2593, 0
    %v2626 = vsel %vm373, %v2595, 0
    %v2628 = vsel %vm373, %v2597, 0
    %v2630 = vsel %vm373, %v2599, 0
    %v2632 = vsel %vm373, %v2601, 0
    %v2634 = vsel %vm373, %v2603, 0
    %v2636 = vsel %vm373, %v2605, 0
    %v2638 = vsel %vm373, %v2607, 0
    %v2640 = vsel %vm373, %v2609, 0
    %v2642 = vsel %vm373, %v2611, 0
    %2644 = vmatprep.subr.mxu0 0.0
    %2645 = vmatpush1.xpose.msra.mxu0 %v2628
    %2646 = vmatprep.subr.mxu0 0.0
    %2647 = vmatpush1.xpose.msra.mxu0 %v2630
    %2648 = vmatprep.subr.mxu0 0.0
    %2649 = vmatpush1.xpose.msra.mxu0 %v2632
    %2650 = vmatprep.subr.mxu0 0.0
    %2651 = vmatpush1.xpose.msra.mxu0 %v2634
    %2652 = vmatprep.subr.mxu0 0.0
    %2653 = vmatpush1.xpose.msra.mxu0 %v2636
    %2654 = vmatprep.subr.mxu0 0.0
    %2655 = vmatpush1.xpose.msra.mxu0 %v2638
    %2656 = vmatprep.subr.mxu0 0.0
    %2657 = vmatpush1.xpose.msra.mxu0 %v2640
    %2658 = vmatprep.subr.mxu0 0.0
    %2659 = vmatpush1.xpose.msra.mxu0 %v2642
    %2660 = vmatprep.subr.mxu0 0.0
    %2661 = vmatpush1.xpose.msra.mxu0 0.0
    %2662 = vmatprep.subr.mxu0 0.0
    %2663 = vmatpush1.xpose.msra.mxu0 0.0
    %2664 = vmatprep.subr.mxu0 0.0
    %2665 = vmatpush1.xpose.msra.mxu0 0.0
    %2666 = vmatprep.subr.mxu0 0.0
    %2667 = vmatpush1.xpose.msra.mxu0 0.0
    %2668 = vmatprep.subr.mxu0 0.0
    %2669 = vmatpush1.xpose.msra.mxu0 0.0
    %2670 = vmatprep.subr.mxu0 0.0
    %2671 = vmatpush1.xpose.msra.mxu0 0.0
    %2672 = vmatprep.subr.mxu0 0.0
    %2673 = vmatpush1.xpose.msra.mxu0 0.0
    %2674 = vmatprep.subr.mxu0 0.0
    %2675 = vmatpush1.xpose.msra.mxu0 0.0
    %2676 = vmatprep.subr.mxu0 0.0
    %2677 = vmatpush1.xpose.msra.mxu0 0.0
    %2678 = vmatprep.subr.mxu0 0.0
    %2679 = vmatpush1.xpose.msra.mxu0 0.0
    %2680 = vmatprep.subr.mxu0 0.0
    %2681 = vmatpush1.xpose.msra.mxu0 0.0
    %2682 = vmatprep.subr.mxu0 0.0
    %2683 = vmatpush1.xpose.msra.mxu0 0.0
    %2684 = vmatprep.subr.mxu0 0.0
    %2685 = vmatpush1.xpose.msra.mxu0 0.0
    %2686 = vmatprep.subr.mxu0 0.0
    %2687 = vmatpush1.xpose.msra.mxu0 0.0
    %2688 = vmatprep.subr.mxu0 0.0
    %2689 = vmatpush1.xpose.msra.mxu0 0.0
    %2690 = vmatprep.subr.mxu0 0.0
    %2691 = vmatpush1.xpose.msra.mxu0 0.0
    %2692 = vmatprep.subr.mxu0 0.0
    %2693 = vmatpush1.xpose.msra.mxu0 0.0
    %2694 = vmatprep.subr.mxu0 0.0
    %2695 = vmatpush1.xpose.msra.mxu0 0.0
    %2696 = vmatprep.subr.mxu0 0.0
    %2697 = vmatpush1.xpose.msra.mxu0 0.0
    %2698 = vmatprep.subr.mxu0 0.0
    %2699 = vmatpush1.xpose.msra.mxu0 0.0
    %2700 = vmatprep.subr.mxu0 0.0
    %2701 = vmatpush1.xpose.msra.mxu0 0.0
    %2702 = vmatprep.subr.mxu0 0.0
    %2703 = vmatpush1.xpose.msra.mxu0 0.0
    %2704 = vmatprep.subr.mxu0 0.0
    %2705 = vmatpush1.xpose.msra.mxu0 0.0
    %2706 = vmatprep.subr.mxu0 0.0
    %2707 = vmatpush1.xpose.msra.mxu0 0.0
    %2708 = vmatprep.mubr.f32.mxu0 0.0
    %2709 = vmatmul.mubr.f32.gmra.mrb[0].mxu0 %v2612
    %v2710 = vpop.f32.mrb[0].mxu0
    %v2711 = vadd.f32 0.0, %v2710
    %v2712 = vpop.f32.mrb[0].mxu0
    %2713 = vmatprep.mubr.f32.mxu0 0.0
    %2714 = vmatmul.mubr.f32.gmra.mrb[0].mxu0 %v2614
    %v2715 = vpop.f32.mrb[0].mxu0
    %v2716 = vadd.f32 0.0, %v2715
    %v2717 = vpop.f32.mrb[0].mxu0
    %2718 = vmatprep.mubr.f32.mxu0 0.0
    %2719 = vmatmul.mubr.f32.gmra.mrb[0].mxu0 %v2616
    %v2720 = vpop.f32.mrb[0].mxu0
    %v2721 = vadd.f32 0.0, %v2720
    %v2722 = vpop.f32.mrb[0].mxu0
    %2723 = vmatprep.mubr.f32.mxu0 0.0
    %2724 = vmatmul.mubr.f32.gmra.mrb[0].mxu0 %v2618
    %v2725 = vpop.f32.mrb[0].mxu0
    %v2726 = vadd.f32 0.0, %v2725
    %v2727 = vpop.f32.mrb[0].mxu0
    %2728 = vmatprep.mubr.f32.mxu0 0.0
    %2729 = vmatmul.mubr.f32.gmra.mrb[0].mxu0 %v2620
    %v2730 = vpop.f32.mrb[0].mxu0
    %v2731 = vadd.f32 0.0, %v2730
    %v2732 = vpop.f32.mrb[0].mxu0
    %2733 = vmatprep.mubr.f32.mxu0 0.0
    %2734 = vmatmul.mubr.f32.gmra.mrb[0].mxu0 %v2622
    %v2735 = vpop.f32.mrb[0].mxu0
    %v2736 = vadd.f32 0.0, %v2735
    %v2737 = vpop.f32.mrb[0].mxu0
    %2738 = vmatprep.mubr.f32.mxu0 0.0
    %2739 = vmatmul.mubr.f32.gmra.mrb[0].mxu0 %v2624
    %v2740 = vpop.f32.mrb[0].mxu0
    %v2741 = vadd.f32 0.0, %v2740
    %v2742 = vpop.f32.mrb[0].mxu0
    %2743 = vmatprep.mubr.f32.mxu0 0.0
    %2744 = vmatmul.mubr.f32.gmra.mrb[0].mxu0 %v2626
    %v2745 = vpop.f32.mrb[0].mxu0
    %v2746 = vadd.f32 0.0, %v2745
    %v2747 = vpop.f32.mrb[0].mxu0
    %2748 = vdwg.mxu0
    %v2749 = vmul.f32 %v2711, 0.25
    %v2750 = vmul.f32 %v2716, 0.25
    %v2751 = vmul.f32 %v2721, 0.25
    %v2752 = vmul.f32 %v2726, 0.25
    %v2753 = vmul.f32 %v2731, 0.25
    %v2754 = vmul.f32 %v2736, 0.25
    %v2755 = vmul.f32 %v2741, 0.25
    %v2756 = vmul.f32 %v2746, 0.25
    %v2757 = vadd.f32 %v2749, %v64
    %v2758 = vadd.f32 %v2750, %v65
    %v2759 = vadd.f32 %v2751, %v66
    %v2760 = vadd.f32 %v2752, %v67
    %v2761 = vadd.f32 %v2753, %v68
    %v2762 = vadd.f32 %v2754, %v69
    %v2763 = vadd.f32 %v2755, %v70
    %v2764 = vadd.f32 %v2756, %v71
    %v2765 = vsel %vm527, %v2757, -inf
    %2766 = vmax.xlane.f32.xlu0 %v2765
    %v2767 = vpop.xlane.xlu0 %2766
    %v2768 = vsel %vm527, %v2758, -inf
    %2769 = vmax.xlane.f32.xlu0 %v2768
    %v2770 = vpop.xlane.xlu0 %2769
    %v2771 = vsel %vm527, %v2759, -inf
    %2772 = vmax.xlane.f32.xlu0 %v2771
    %v2773 = vpop.xlane.xlu0 %2772
    %v2774 = vsel %vm527, %v2760, -inf
    %2775 = vmax.xlane.f32.xlu0 %v2774
    %v2776 = vpop.xlane.xlu0 %2775
    %v2777 = vsel %vm527, %v2761, -inf
    %2778 = vmax.xlane.f32.xlu0 %v2777
    %v2779 = vpop.xlane.xlu0 %2778
    %v2780 = vsel %vm527, %v2762, -inf
    %2781 = vmax.xlane.f32.xlu0 %v2780
    %v2782 = vpop.xlane.xlu0 %2781
    %v2783 = vsel %vm527, %v2763, -inf
    %2784 = vmax.xlane.f32.xlu0 %v2783
    %v2785 = vpop.xlane.xlu0 %2784
    %v2786 = vsel %vm527, %v2764, -inf
    %2787 = vmax.xlane.f32.xlu0 %v2786
    %v2788 = vpop.xlane.xlu0 %2787
    %v2789 = vsub.f32 %v2757, %v2767
    %v2790 = vsub.f32 %v2758, %v2770
    %v2791 = vsub.f32 %v2759, %v2773
    %v2792 = vsub.f32 %v2760, %v2776
    %v2793 = vsub.f32 %v2761, %v2779
    %v2794 = vsub.f32 %v2762, %v2782
    %v2795 = vsub.f32 %v2763, %v2785
    %v2796 = vsub.f32 %v2764, %v2788
    %v2797 = vmul.f32 %v2789, 1.442695
    %v2798 = vpow.pop %v2797
    %v2799 = vmul.f32 %v2790, 1.442695
    %v2800 = vpow.pop %v2799
    %v2801 = vmul.f32 %v2791, 1.442695
    %v2802 = vpow.pop %v2801
    %v2803 = vmul.f32 %v2792, 1.442695
    %v2804 = vpow.pop %v2803
    %v2805 = vmul.f32 %v2793, 1.442695
    %v2806 = vpow.pop %v2805
    %v2807 = vmul.f32 %v2794, 1.442695
    %v2808 = vpow.pop %v2807
    %v2809 = vmul.f32 %v2795, 1.442695
    %v2810 = vpow.pop %v2809
    %v2811 = vmul.f32 %v2796, 1.442695
    %v2812 = vpow.pop %v2811
    %v2813 = vsel %vm527, %v2798, 0.0
    %2814 = vadd.xlane.f32.xlu0 %v2813
    %v2815 = vpop.xlane.xlu0 %2814
    %v2816 = vsel %vm527, %v2800, 0.0
    %2817 = vadd.xlane.f32.xlu0 %v2816
    %v2818 = vpop.xlane.xlu0 %2817
    %v2819 = vsel %vm527, %v2802, 0.0
    %2820 = vadd.xlane.f32.xlu0 %v2819
    %v2821 = vpop.xlane.xlu0 %2820
    %v2822 = vsel %vm527, %v2804, 0.0
    %2823 = vadd.xlane.f32.xlu0 %v2822
    %v2824 = vpop.xlane.xlu0 %2823
    %v2825 = vsel %vm527, %v2806, 0.0
    %2826 = vadd.xlane.f32.xlu0 %v2825
    %v2827 = vpop.xlane.xlu0 %2826
    %v2828 = vsel %vm527, %v2808, 0.0
    %2829 = vadd.xlane.f32.xlu0 %v2828
    %v2830 = vpop.xlane.xlu0 %2829
    %v2831 = vsel %vm527, %v2810, 0.0
    %2832 = vadd.xlane.f32.xlu0 %v2831
    %v2833 = vpop.xlane.xlu0 %2832
    %v2834 = vsel %vm527, %v2812, 0.0
    %2835 = vadd.xlane.f32.xlu0 %v2834
    %v2836 = vpop.xlane.xlu0 %2835
    %v2837 = vrcp.pop %v2815
    %v2838 = vrcp.pop %v2818
    %v2839 = vrcp.pop %v2821
    %v2840 = vrcp.pop %v2824
    %v2841 = vrcp.pop %v2827
    %v2842 = vrcp.pop %v2830
    %v2843 = vrcp.pop %v2833
    %v2844 = vrcp.pop %v2836
    %v2845 = vmul.f32 %v2798, %v2837
    %v2846 = vmul.f32 %v2800, %v2838
    %v2847 = vmul.f32 %v2802, %v2839
    %v2848 = vmul.f32 %v2804, %v2840
    %v2849 = vmul.f32 %v2806, %v2841
    %v2850 = vmul.f32 %v2808, %v2842
    %v2851 = vmul.f32 %v2810, %v2843
    %v2852 = vmul.f32 %v2812, %v2844
    %2853 = vrot.lane.b32.xlu0 %v2124, 48
    %v2854 = vpop.permute.xlu0 %2853
    %2855 = vrot.lane.b32.xlu0 %v2129, 48
    %v2856 = vpop.permute.xlu0 %2855
    %2857 = vrot.lane.b32.xlu0 %v2134, 48
    %v2858 = vpop.permute.xlu0 %2857
    %2859 = vrot.lane.b32.xlu0 %v2139, 48
    %v2860 = vpop.permute.xlu0 %2859
    %2861 = vrot.lane.b32.xlu0 %v2144, 48
    %v2862 = vpop.permute.xlu0 %2861
    %2863 = vrot.lane.b32.xlu0 %v2149, 48
    %v2864 = vpop.permute.xlu0 %2863
    %2865 = vrot.lane.b32.xlu0 %v2154, 48
    %v2866 = vpop.permute.xlu0 %2865
    %2867 = vrot.lane.b32.xlu0 %v2159, 48
    %v2868 = vpop.permute.xlu0 %2867
    %v2878 = vsel %vm527, %v2845, 0
    %v2881 = vsel %vm527, %v2846, 0
    %v2884 = vsel %vm527, %v2847, 0
    %v2887 = vsel %vm527, %v2848, 0
    %v2890 = vsel %vm527, %v2849, 0
    %v2893 = vsel %vm527, %v2850, 0
    %v2896 = vsel %vm527, %v2851, 0
    %v2899 = vsel %vm527, %v2852, 0
    %2901 = vmatprep.subr.mxu0 0.0
    %2902 = vmatpush1.msra.mxu0 %v2854
    %2903 = vmatprep.subr.mxu0 0.0
    %2904 = vmatpush1.msra.mxu0 %v2856
    %2905 = vmatprep.subr.mxu0 0.0
    %2906 = vmatpush1.msra.mxu0 %v2858
    %2907 = vmatprep.subr.mxu0 0.0
    %2908 = vmatpush1.msra.mxu0 %v2860
    %2909 = vmatprep.subr.mxu0 0.0
    %2910 = vmatpush1.msra.mxu0 %v2862
    %2911 = vmatprep.subr.mxu0 0.0
    %2912 = vmatpush1.msra.mxu0 %v2864
    %2913 = vmatprep.subr.mxu0 0.0
    %2914 = vmatpush1.msra.mxu0 %v2866
    %2915 = vmatprep.subr.mxu0 0.0
    %2916 = vmatpush1.msra.mxu0 %v2868
    %2917 = vmatprep.subr.mxu0 0.0
    %2918 = vmatpush1.msra.mxu0 0.0
    %2919 = vmatprep.subr.mxu0 0.0
    %2920 = vmatpush1.msra.mxu0 0.0
    %2921 = vmatprep.subr.mxu0 0.0
    %2922 = vmatpush1.msra.mxu0 0.0
    %2923 = vmatprep.subr.mxu0 0.0
    %2924 = vmatpush1.msra.mxu0 0.0
    %2925 = vmatprep.subr.mxu0 0.0
    %2926 = vmatpush1.msra.mxu0 0.0
    %2927 = vmatprep.subr.mxu0 0.0
    %2928 = vmatpush1.msra.mxu0 0.0
    %2929 = vmatprep.subr.mxu0 0.0
    %2930 = vmatpush1.msra.mxu0 0.0
    %2931 = vmatprep.subr.mxu0 0.0
    %2932 = vmatpush1.msra.mxu0 0.0
    %2933 = vmatprep.subr.mxu0 0.0
    %2934 = vmatpush1.msra.mxu0 0.0
    %2935 = vmatprep.subr.mxu0 0.0
    %2936 = vmatpush1.msra.mxu0 0.0
    %2937 = vmatprep.subr.mxu0 0.0
    %2938 = vmatpush1.msra.mxu0 0.0
    %2939 = vmatprep.subr.mxu0 0.0
    %2940 = vmatpush1.msra.mxu0 0.0
    %2941 = vmatprep.subr.mxu0 0.0
    %2942 = vmatpush1.msra.mxu0 0.0
    %2943 = vmatprep.subr.mxu0 0.0
    %2944 = vmatpush1.msra.mxu0 0.0
    %2945 = vmatprep.subr.mxu0 0.0
    %2946 = vmatpush1.msra.mxu0 0.0
    %2947 = vmatprep.subr.mxu0 0.0
    %2948 = vmatpush1.msra.mxu0 0.0
    %2949 = vmatprep.subr.mxu0 0.0
    %2950 = vmatpush1.msra.mxu0 0.0
    %2951 = vmatprep.subr.mxu0 0.0
    %2952 = vmatpush1.msra.mxu0 0.0
    %2953 = vmatprep.subr.mxu0 0.0
    %2954 = vmatpush1.msra.mxu0 0.0
    %2955 = vmatprep.subr.mxu0 0.0
    %2956 = vmatpush1.msra.mxu0 0.0
    %2957 = vmatprep.subr.mxu0 0.0
    %2958 = vmatpush1.msra.mxu0 0.0
    %2959 = vmatprep.subr.mxu0 0.0
    %2960 = vmatpush1.msra.mxu0 0.0
    %2961 = vmatprep.subr.mxu0 0.0
    %2962 = vmatpush1.msra.mxu0 0.0
    %2963 = vmatprep.subr.mxu0 0.0
    %2964 = vmatpush1.msra.mxu0 0.0
    %2965 = vmatprep.mubr.f32.mxu0 0.0
    %2966 = vmatmul.mubr.f32.gmra.mrb[0].mxu0 %v2878
    %v2967 = vpop.f32.mrb[0].mxu0
    %v2968 = vadd.f32 0.0, %v2967
    %v2969 = vpop.f32.mrb[0].mxu0
    %2970 = vmatprep.mubr.f32.mxu0 0.0
    %2971 = vmatmul.mubr.f32.gmra.mrb[0].mxu0 %v2881
    %v2972 = vpop.f32.mrb[0].mxu0
    %v2973 = vadd.f32 0.0, %v2972
    %v2974 = vpop.f32.mrb[0].mxu0
    %2975 = vmatprep.mubr.f32.mxu0 0.0
    %2976 = vmatmul.mubr.f32.gmra.mrb[0].mxu0 %v2884
    %v2977 = vpop.f32.mrb[0].mxu0
    %v2978 = vadd.f32 0.0, %v2977
    %v2979 = vpop.f32.mrb[0].mxu0
    %2980 = vmatprep.mubr.f32.mxu0 0.0
    %2981 = vmatmul.mubr.f32.gmra.mrb[0].mxu0 %v2887
    %v2982 = vpop.f32.mrb[0].mxu0
    %v2983 = vadd.f32 0.0, %v2982
    %v2984 = vpop.f32.mrb[0].mxu0
    %2985 = vmatprep.mubr.f32.mxu0 0.0
    %2986 = vmatmul.mubr.f32.gmra.mrb[0].mxu0 %v2890
    %v2987 = vpop.f32.mrb[0].mxu0
    %v2988 = vadd.f32 0.0, %v2987
    %v2989 = vpop.f32.mrb[0].mxu0
    %2990 = vmatprep.mubr.f32.mxu0 0.0
    %2991 = vmatmul.mubr.f32.gmra.mrb[0].mxu0 %v2893
    %v2992 = vpop.f32.mrb[0].mxu0
    %v2993 = vadd.f32 0.0, %v2992
    %v2994 = vpop.f32.mrb[0].mxu0
    %2995 = vmatprep.mubr.f32.mxu0 0.0
    %2996 = vmatmul.mubr.f32.gmra.mrb[0].mxu0 %v2896
    %v2997 = vpop.f32.mrb[0].mxu0
    %v2998 = vadd.f32 0.0, %v2997
    %v2999 = vpop.f32.mrb[0].mxu0
    %3000 = vmatprep.mubr.f32.mxu0 0.0
    %3001 = vmatmul.mubr.f32.gmra.mrb[0].mxu0 %v2899
    %v3002 = vpop.f32.mrb[0].mxu0
    %v3003 = vadd.f32 0.0, %v3002
    %v3004 = vpop.f32.mrb[0].mxu0
    %3005 = vdwg.mxu0
    %3014 = vrot.lane.b32.xlu0 %v2968, 16
    %v3015 = vpop.permute.xlu0 %3014
    %3016 = vrot.lane.b32.xlu0 %v2973, 16
    %v3017 = vpop.permute.xlu0 %3016
    %3018 = vrot.lane.b32.xlu0 %v2978, 16
    %v3019 = vpop.permute.xlu0 %3018
    %3020 = vrot.lane.b32.xlu0 %v2983, 16
    %v3021 = vpop.permute.xlu0 %3020
    %3022 = vrot.lane.b32.xlu0 %v2988, 16
    %v3023 = vpop.permute.xlu0 %3022
    %3024 = vrot.lane.b32.xlu0 %v2993, 16
    %v3025 = vpop.permute.xlu0 %3024
    %3026 = vrot.lane.b32.xlu0 %v2998, 16
    %v3027 = vpop.permute.xlu0 %3026
    %3028 = vrot.lane.b32.xlu0 %v3003, 16
    %v3029 = vpop.permute.xlu0 %3028
    %v3038 = vsel %vm373, %v2542, %v3015
    %v3039 = vsel %vm373, %v2547, %v3017
    %v3040 = vsel %vm373, %v2552, %v3019
    %v3041 = vsel %vm373, %v2557, %v3021
    %v3042 = vsel %vm373, %v2562, %v3023
    %v3043 = vsel %vm373, %v2567, %v3025
    %v3044 = vsel %vm373, %v2572, %v3027
    %v3045 = vsel %vm373, %v2577, %v3029
    %s3046 = scalar_lea.vmem %s5, 32
    %v3047 = vld [vmem:[%s3046] sm:$0xff]
    %v3048 = vld [vmem:[%s3046 + $0x8] sm:$0xff]
    %v3049 = vld [vmem:[%s3046 + $0x10] sm:$0xff]
    %v3050 = vld [vmem:[%s3046 + $0x18] sm:$0xff]
    %s3051 = scalar_lea.vmem %s6, 1
    %v3052 = vld [vmem:[%s3051] sm:$0x1]
    %v3054 = vlaneseq
    %v3055 = vshrl.u32 %v3054, 7
    %v3056 = vsub.s32 0, %v3055
    %v3057 = vrot.slane %v3052, %v3056
    %v3060 = vsel %vm75, %v3038, 0
    %v3063 = vsel %vm75, %v3039, 0
    %v3066 = vsel %vm75, %v3040, 0
    %v3069 = vsel %vm75, %v3041, 0
    %v3072 = vsel %vm75, %v3042, 0
    %v3075 = vsel %vm75, %v3043, 0
    %v3078 = vsel %vm75, %v3044, 0
    %v3081 = vsel %vm75, %v3045, 0
    %3083 = vmatprep.subr.mxu0 0.0
    %3084 = vmatpush1.msra.mxu0 %v3047
    %3085 = vmatprep.subr.mxu0 0.0
    %3086 = vmatpush1.msra.mxu0 %v3048
    %3087 = vmatprep.subr.mxu0 0.0
    %3088 = vmatpush1.msra.mxu0 %v3049
    %3089 = vmatprep.subr.mxu0 0.0
    %3090 = vmatpush1.msra.mxu0 %v3050
    %3091 = vmatprep.subr.mxu0 0.0
    %3092 = vmatpush1.msra.mxu0 0.0
    %3093 = vmatprep.subr.mxu0 0.0
    %3094 = vmatpush1.msra.mxu0 0.0
    %3095 = vmatprep.subr.mxu0 0.0
    %3096 = vmatpush1.msra.mxu0 0.0
    %3097 = vmatprep.subr.mxu0 0.0
    %3098 = vmatpush1.msra.mxu0 0.0
    %3099 = vmatprep.subr.mxu0 0.0
    %3100 = vmatpush1.msra.mxu0 0.0
    %3101 = vmatprep.subr.mxu0 0.0
    %3102 = vmatpush1.msra.mxu0 0.0
    %3103 = vmatprep.subr.mxu0 0.0
    %3104 = vmatpush1.msra.mxu0 0.0
    %3105 = vmatprep.subr.mxu0 0.0
    %3106 = vmatpush1.msra.mxu0 0.0
    %3107 = vmatprep.subr.mxu0 0.0
    %3108 = vmatpush1.msra.mxu0 0.0
    %3109 = vmatprep.subr.mxu0 0.0
    %3110 = vmatpush1.msra.mxu0 0.0
    %3111 = vmatprep.subr.mxu0 0.0
    %3112 = vmatpush1.msra.mxu0 0.0
    %3113 = vmatprep.subr.mxu0 0.0
    %3114 = vmatpush1.msra.mxu0 0.0
    %3115 = vmatprep.subr.mxu0 0.0
    %3116 = vmatpush1.msra.mxu0 0.0
    %3117 = vmatprep.subr.mxu0 0.0
    %3118 = vmatpush1.msra.mxu0 0.0
    %3119 = vmatprep.subr.mxu0 0.0
    %3120 = vmatpush1.msra.mxu0 0.0
    %3121 = vmatprep.subr.mxu0 0.0
    %3122 = vmatpush1.msra.mxu0 0.0
    %3123 = vmatprep.subr.mxu0 0.0
    %3124 = vmatpush1.msra.mxu0 0.0
    %3125 = vmatprep.subr.mxu0 0.0
    %3126 = vmatpush1.msra.mxu0 0.0
    %3127 = vmatprep.subr.mxu0 0.0
    %3128 = vmatpush1.msra.mxu0 0.0
    %3129 = vmatprep.subr.mxu0 0.0
    %3130 = vmatpush1.msra.mxu0 0.0
    %3131 = vmatprep.subr.mxu0 0.0
    %3132 = vmatpush1.msra.mxu0 0.0
    %3133 = vmatprep.subr.mxu0 0.0
    %3134 = vmatpush1.msra.mxu0 0.0
    %3135 = vmatprep.subr.mxu0 0.0
    %3136 = vmatpush1.msra.mxu0 0.0
    %3137 = vmatprep.subr.mxu0 0.0
    %3138 = vmatpush1.msra.mxu0 0.0
    %3139 = vmatprep.subr.mxu0 0.0
    %3140 = vmatpush1.msra.mxu0 0.0
    %3141 = vmatprep.subr.mxu0 0.0
    %3142 = vmatpush1.msra.mxu0 0.0
    %3143 = vmatprep.subr.mxu0 0.0
    %3144 = vmatpush1.msra.mxu0 0.0
    %3145 = vmatprep.subr.mxu0 0.0
    %3146 = vmatpush1.msra.mxu0 0.0
    %3147 = vmatprep.mubr.f32.mxu0 0.0
    %3148 = vmatmul.mubr.f32.gmra.mrb[0].mxu0 %v3060
    %v3149 = vpop.f32.mrb[0].mxu0
    %v3150 = vadd.f32 %v3057, %v3149
    %v3151 = vpop.f32.mrb[0].mxu0
    %3152 = vmatprep.mubr.f32.mxu0 0.0
    %3153 = vmatmul.mubr.f32.gmra.mrb[0].mxu0 %v3063
    %v3154 = vpop.f32.mrb[0].mxu0
    %v3155 = vadd.f32 %v3057, %v3154
    %v3156 = vpop.f32.mrb[0].mxu0
    %3157 = vmatprep.mubr.f32.mxu0 0.0
    %3158 = vmatmul.mubr.f32.gmra.mrb[0].mxu0 %v3066
    %v3159 = vpop.f32.mrb[0].mxu0
    %v3160 = vadd.f32 %v3057, %v3159
    %v3161 = vpop.f32.mrb[0].mxu0
    %3162 = vmatprep.mubr.f32.mxu0 0.0
    %3163 = vmatmul.mubr.f32.gmra.mrb[0].mxu0 %v3069
    %v3164 = vpop.f32.mrb[0].mxu0
    %v3165 = vadd.f32 %v3057, %v3164
    %v3166 = vpop.f32.mrb[0].mxu0
    %3167 = vmatprep.mubr.f32.mxu0 0.0
    %3168 = vmatmul.mubr.f32.gmra.mrb[0].mxu0 %v3072
    %v3169 = vpop.f32.mrb[0].mxu0
    %v3170 = vadd.f32 %v3057, %v3169
    %v3171 = vpop.f32.mrb[0].mxu0
    %3172 = vmatprep.mubr.f32.mxu0 0.0
    %3173 = vmatmul.mubr.f32.gmra.mrb[0].mxu0 %v3075
    %v3174 = vpop.f32.mrb[0].mxu0
    %v3175 = vadd.f32 %v3057, %v3174
    %v3176 = vpop.f32.mrb[0].mxu0
    %3177 = vmatprep.mubr.f32.mxu0 0.0
    %3178 = vmatmul.mubr.f32.gmra.mrb[0].mxu0 %v3078
    %v3179 = vpop.f32.mrb[0].mxu0
    %v3180 = vadd.f32 %v3057, %v3179
    %v3181 = vpop.f32.mrb[0].mxu0
    %3182 = vmatprep.mubr.f32.mxu0 0.0
    %3183 = vmatmul.mubr.f32.gmra.mrb[0].mxu0 %v3081
    %v3184 = vpop.f32.mrb[0].mxu0
    %v3185 = vadd.f32 %v3057, %v3184
    %v3186 = vpop.f32.mrb[0].mxu0
    %3187 = vdwg.mxu0
    %v3188 = vadd.f32 %v2012, %v3150
    %v3189 = vadd.f32 %v2013, %v3155
    %v3190 = vadd.f32 %v2014, %v3160
    %v3191 = vadd.f32 %v2015, %v3165
    %v3192 = vadd.f32 %v2016, %v3170
    %v3193 = vadd.f32 %v2017, %v3175
    %v3194 = vadd.f32 %v2018, %v3180
    %v3195 = vadd.f32 %v2019, %v3185
    %s3196 = scalar_lea.vmem %s2, 3
    %v3197 = vld [vmem:[%s3196] sm:$0x1]
    %s3198 = scalar_lea.vmem %s2, 8
    %v3199 = vld [vmem:[%s3198] sm:$0x1]
    %v3200 = vsel %vm75, %v3188, 0.0
    %3201 = vadd.xlane.f32.xlu0 %v3200
    %v3202 = vpop.xlane.xlu0 %3201
    %v3203 = vsel %vm75, %v3189, 0.0
    %3204 = vadd.xlane.f32.xlu0 %v3203
    %v3205 = vpop.xlane.xlu0 %3204
    %v3206 = vsel %vm75, %v3190, 0.0
    %3207 = vadd.xlane.f32.xlu0 %v3206
    %v3208 = vpop.xlane.xlu0 %3207
    %v3209 = vsel %vm75, %v3191, 0.0
    %3210 = vadd.xlane.f32.xlu0 %v3209
    %v3211 = vpop.xlane.xlu0 %3210
    %v3212 = vsel %vm75, %v3192, 0.0
    %3213 = vadd.xlane.f32.xlu0 %v3212
    %v3214 = vpop.xlane.xlu0 %3213
    %v3215 = vsel %vm75, %v3193, 0.0
    %3216 = vadd.xlane.f32.xlu0 %v3215
    %v3217 = vpop.xlane.xlu0 %3216
    %v3218 = vsel %vm75, %v3194, 0.0
    %3219 = vadd.xlane.f32.xlu0 %v3218
    %v3220 = vpop.xlane.xlu0 %3219
    %v3221 = vsel %vm75, %v3195, 0.0
    %3222 = vadd.xlane.f32.xlu0 %v3221
    %v3223 = vpop.xlane.xlu0 %3222
    %v3224 = vmul.f32 %v3202, %v100
    %v3225 = vmul.f32 %v3205, %v100
    %v3226 = vmul.f32 %v3208, %v100
    %v3227 = vmul.f32 %v3211, %v100
    %v3228 = vmul.f32 %v3214, %v100
    %v3229 = vmul.f32 %v3217, %v100
    %v3230 = vmul.f32 %v3220, %v100
    %v3231 = vmul.f32 %v3223, %v100
    %v3232 = vsub.f32 %v3188, %v3224
    %v3233 = vsub.f32 %v3189, %v3225
    %v3234 = vsub.f32 %v3190, %v3226
    %v3235 = vsub.f32 %v3191, %v3227
    %v3236 = vsub.f32 %v3192, %v3228
    %v3237 = vsub.f32 %v3193, %v3229
    %v3238 = vsub.f32 %v3194, %v3230
    %v3239 = vsub.f32 %v3195, %v3231
    %v3240 = vmul.f32 %v3232, %v3232
    %v3241 = vmul.f32 %v3233, %v3233
    %v3242 = vmul.f32 %v3234, %v3234
    %v3243 = vmul.f32 %v3235, %v3235
    %v3244 = vmul.f32 %v3236, %v3236
    %v3245 = vmul.f32 %v3237, %v3237
    %v3246 = vmul.f32 %v3238, %v3238
    %v3247 = vmul.f32 %v3239, %v3239
    %v3248 = vsel %vm75, %v3240, 0.0
    %3249 = vadd.xlane.f32.xlu0 %v3248
    %v3250 = vpop.xlane.xlu0 %3249
    %v3251 = vsel %vm75, %v3241, 0.0
    %3252 = vadd.xlane.f32.xlu0 %v3251
    %v3253 = vpop.xlane.xlu0 %3252
    %v3254 = vsel %vm75, %v3242, 0.0
    %3255 = vadd.xlane.f32.xlu0 %v3254
    %v3256 = vpop.xlane.xlu0 %3255
    %v3257 = vsel %vm75, %v3243, 0.0
    %3258 = vadd.xlane.f32.xlu0 %v3257
    %v3259 = vpop.xlane.xlu0 %3258
    %v3260 = vsel %vm75, %v3244, 0.0
    %3261 = vadd.xlane.f32.xlu0 %v3260
    %v3262 = vpop.xlane.xlu0 %3261
    %v3263 = vsel %vm75, %v3245, 0.0
    %3264 = vadd.xlane.f32.xlu0 %v3263
    %v3265 = vpop.xlane.xlu0 %3264
    %v3266 = vsel %vm75, %v3246, 0.0
    %3267 = vadd.xlane.f32.xlu0 %v3266
    %v3268 = vpop.xlane.xlu0 %3267
    %v3269 = vsel %vm75, %v3247, 0.0
    %3270 = vadd.xlane.f32.xlu0 %v3269
    %v3271 = vpop.xlane.xlu0 %3270
    %v3272 = vmul.f32 %v3250, %v100
    %v3273 = vmul.f32 %v3253, %v100
    %v3274 = vmul.f32 %v3256, %v100
    %v3275 = vmul.f32 %v3259, %v100
    %v3276 = vmul.f32 %v3262, %v100
    %v3277 = vmul.f32 %v3265, %v100
    %v3278 = vmul.f32 %v3268, %v100
    %v3279 = vmul.f32 %v3271, %v100
    %v3280 = vadd.f32 %v3272, 1e-12
    %v3281 = vadd.f32 %v3273, 1e-12
    %v3282 = vadd.f32 %v3274, 1e-12
    %v3283 = vadd.f32 %v3275, 1e-12
    %v3284 = vadd.f32 %v3276, 1e-12
    %v3285 = vadd.f32 %v3277, 1e-12
    %v3286 = vadd.f32 %v3278, 1e-12
    %v3287 = vadd.f32 %v3279, 1e-12
    %v3288 = vrsqrt.pop %v3280
    %v3289 = vrsqrt.pop %v3281
    %v3290 = vrsqrt.pop %v3282
    %v3291 = vrsqrt.pop %v3283
    %v3292 = vrsqrt.pop %v3284
    %v3293 = vrsqrt.pop %v3285
    %v3294 = vrsqrt.pop %v3286
    %v3295 = vrsqrt.pop %v3287
    %v3296 = vmul.f32 %v3232, %v3288
    %v3297 = vmul.f32 %v3233, %v3289
    %v3298 = vmul.f32 %v3234, %v3290
    %v3299 = vmul.f32 %v3235, %v3291
    %v3300 = vmul.f32 %v3236, %v3292
    %v3301 = vmul.f32 %v3237, %v3293
    %v3302 = vmul.f32 %v3238, %v3294
    %v3303 = vmul.f32 %v3239, %v3295
    %v3305 = vlaneseq
    %v3306 = vshrl.u32 %v3305, 7
    %v3307 = vsub.s32 0, %v3306
    %v3308 = vrot.slane %v3197, %v3307
    %v3310 = vmul.f32 %v3296, %v3308
    %v3311 = vmul.f32 %v3297, %v3308
    %v3312 = vmul.f32 %v3298, %v3308
    %v3313 = vmul.f32 %v3299, %v3308
    %v3314 = vmul.f32 %v3300, %v3308
    %v3315 = vmul.f32 %v3301, %v3308
    %v3316 = vmul.f32 %v3302, %v3308
    %v3317 = vmul.f32 %v3303, %v3308
    %v3319 = vlaneseq
    %v3320 = vshrl.u32 %v3319, 7
    %v3321 = vsub.s32 0, %v3320
    %v3322 = vrot.slane %v3199, %v3321
    %v3324 = vadd.f32 %v3310, %v3322
    %v3325 = vadd.f32 %v3311, %v3322
    %v3326 = vadd.f32 %v3312, %v3322
    %v3327 = vadd.f32 %v3313, %v3322
    %v3328 = vadd.f32 %v3314, %v3322
    %v3329 = vadd.f32 %v3315, %v3322
    %v3330 = vadd.f32 %v3316, %v3322
    %v3331 = vadd.f32 %v3317, %v3322
    %s3332 = scalar_lea.vmem [#allocation2], 32
    %v3333 = vld [vmem:[%s3332] sm:$0xff]
    %v3334 = vld [vmem:[%s3332 + $0x8] sm:$0xff]
    %v3335 = vld [vmem:[%s3332 + $0x10] sm:$0xff]
    %v3336 = vld [vmem:[%s3332 + $0x18] sm:$0xff]
    %s3337 = scalar_lea.vmem %s8, 1
    %v3338 = vld [vmem:[%s3337] sm:$0x1]
    %v3340 = vlaneseq
    %v3341 = vshrl.u32 %v3340, 7
    %v3342 = vsub.s32 0, %v3341
    %v3343 = vrot.slane %v3338, %v3342
    %v3346 = vsel %vm75, %v3324, 0
    %v3349 = vsel %vm75, %v3325, 0
    %v3352 = vsel %vm75, %v3326, 0
    %v3355 = vsel %vm75, %v3327, 0
    %v3358 = vsel %vm75, %v3328, 0
    %v3361 = vsel %vm75, %v3329, 0
    %v3364 = vsel %vm75, %v3330, 0
    %v3367 = vsel %vm75, %v3331, 0
    %3369 = vmatprep.subr.mxu0 0.0
    %3370 = vmatpush1.msra.mxu0 %v3333
    %3371 = vmatprep.subr.mxu0 0.0
    %3372 = vmatpush1.msra.mxu0 %v3334
    %3373 = vmatprep.subr.mxu0 0.0
    %3374 = vmatpush1.msra.mxu0 %v3335
    %3375 = vmatprep.subr.mxu0 0.0
    %3376 = vmatpush1.msra.mxu0 %v3336
    %3377 = vmatprep.subr.mxu0 0.0
    %3378 = vmatpush1.msra.mxu0 0.0
    %3379 = vmatprep.subr.mxu0 0.0
    %3380 = vmatpush1.msra.mxu0 0.0
    %3381 = vmatprep.subr.mxu0 0.0
    %3382 = vmatpush1.msra.mxu0 0.0
    %3383 = vmatprep.subr.mxu0 0.0
    %3384 = vmatpush1.msra.mxu0 0.0
    %3385 = vmatprep.subr.mxu0 0.0
    %3386 = vmatpush1.msra.mxu0 0.0
    %3387 = vmatprep.subr.mxu0 0.0
    %3388 = vmatpush1.msra.mxu0 0.0
    %3389 = vmatprep.subr.mxu0 0.0
    %3390 = vmatpush1.msra.mxu0 0.0
    %3391 = vmatprep.subr.mxu0 0.0
    %3392 = vmatpush1.msra.mxu0 0.0
    %3393 = vmatprep.subr.mxu0 0.0
    %3394 = vmatpush1.msra.mxu0 0.0
    %3395 = vmatprep.subr.mxu0 0.0
    %3396 = vmatpush1.msra.mxu0 0.0
    %3397 = vmatprep.subr.mxu0 0.0
    %3398 = vmatpush1.msra.mxu0 0.0
    %3399 = vmatprep.subr.mxu0 0.0
    %3400 = vmatpush1.msra.mxu0 0.0
    %3401 = vmatprep.subr.mxu0 0.0
    %3402 = vmatpush1.msra.mxu0 0.0
    %3403 = vmatprep.subr.mxu0 0.0
    %3404 = vmatpush1.msra.mxu0 0.0
    %3405 = vmatprep.subr.mxu0 0.0
    %3406 = vmatpush1.msra.mxu0 0.0
    %3407 = vmatprep.subr.mxu0 0.0
    %3408 = vmatpush1.msra.mxu0 0.0
    %3409 = vmatprep.subr.mxu0 0.0
    %3410 = vmatpush1.msra.mxu0 0.0
    %3411 = vmatprep.subr.mxu0 0.0
    %3412 = vmatpush1.msra.mxu0 0.0
    %3413 = vmatprep.subr.mxu0 0.0
    %3414 = vmatpush1.msra.mxu0 0.0
    %3415 = vmatprep.subr.mxu0 0.0
    %3416 = vmatpush1.msra.mxu0 0.0
    %3417 = vmatprep.subr.mxu0 0.0
    %3418 = vmatpush1.msra.mxu0 0.0
    %3419 = vmatprep.subr.mxu0 0.0
    %3420 = vmatpush1.msra.mxu0 0.0
    %3421 = vmatprep.subr.mxu0 0.0
    %3422 = vmatpush1.msra.mxu0 0.0
    %3423 = vmatprep.subr.mxu0 0.0
    %3424 = vmatpush1.msra.mxu0 0.0
    %3425 = vmatprep.subr.mxu0 0.0
    %3426 = vmatpush1.msra.mxu0 0.0
    %3427 = vmatprep.subr.mxu0 0.0
    %3428 = vmatpush1.msra.mxu0 0.0
    %3429 = vmatprep.subr.mxu0 0.0
    %3430 = vmatpush1.msra.mxu0 0.0
    %3431 = vmatprep.subr.mxu0 0.0
    %3432 = vmatpush1.msra.mxu0 0.0
    %3433 = vmatprep.mubr.f32.mxu0 0.0
    %3434 = vmatmul.mubr.f32.gmra.mrb[0].mxu0 %v3346
    %v3435 = vpop.f32.mrb[0].mxu0
    %v3436 = vadd.f32 %v3343, %v3435
    %v3437 = vpop.f32.mrb[0].mxu0
    %3438 = vmatprep.mubr.f32.mxu0 0.0
    %3439 = vmatmul.mubr.f32.gmra.mrb[0].mxu0 %v3349
    %v3440 = vpop.f32.mrb[0].mxu0
    %v3441 = vadd.f32 %v3343, %v3440
    %v3442 = vpop.f32.mrb[0].mxu0
    %3443 = vmatprep.mubr.f32.mxu0 0.0
    %3444 = vmatmul.mubr.f32.gmra.mrb[0].mxu0 %v3352
    %v3445 = vpop.f32.mrb[0].mxu0
    %v3446 = vadd.f32 %v3343, %v3445
    %v3447 = vpop.f32.mrb[0].mxu0
    %3448 = vmatprep.mubr.f32.mxu0 0.0
    %3449 = vmatmul.mubr.f32.gmra.mrb[0].mxu0 %v3355
    %v3450 = vpop.f32.mrb[0].mxu0
    %v3451 = vadd.f32 %v3343, %v3450
    %v3452 = vpop.f32.mrb[0].mxu0
    %3453 = vmatprep.mubr.f32.mxu0 0.0
    %3454 = vmatmul.mubr.f32.gmra.mrb[0].mxu0 %v3358
    %v3455 = vpop.f32.mrb[0].mxu0
    %v3456 = vadd.f32 %v3343, %v3455
    %v3457 = vpop.f32.mrb[0].mxu0
    %3458 = vmatprep.mubr.f32.mxu0 0.0
    %3459 = vmatmul.mubr.f32.gmra.mrb[0].mxu0 %v3361
    %v3460 = vpop.f32.mrb[0].mxu0
    %v3461 = vadd.f32 %v3343, %v3460
    %v3462 = vpop.f32.mrb[0].mxu0
    %3463 = vmatprep.mubr.f32.mxu0 0.0
    %3464 = vmatmul.mubr.f32.gmra.mrb[0].mxu0 %v3364
    %v3465 = vpop.f32.mrb[0].mxu0
    %v3466 = vadd.f32 %v3343, %v3465
    %v3467 = vpop.f32.mrb[0].mxu0
    %3468 = vmatprep.mubr.f32.mxu0 0.0
    %3469 = vmatmul.mubr.f32.gmra.mrb[0].mxu0 %v3367
    %v3470 = vpop.f32.mrb[0].mxu0
    %v3471 = vadd.f32 %v3343, %v3470
    %v3472 = vpop.f32.mrb[0].mxu0
    %3473 = vdwg.mxu0
    %v3474 = vmul.f32 %v3436, %v3436
    %v3475 = vmul.f32 %v3441, %v3441
    %v3476 = vmul.f32 %v3446, %v3446
    %v3477 = vmul.f32 %v3451, %v3451
    %v3478 = vmul.f32 %v3456, %v3456
    %v3479 = vmul.f32 %v3461, %v3461
    %v3480 = vmul.f32 %v3466, %v3466
    %v3481 = vmul.f32 %v3471, %v3471
    %v3482 = vmul.f32 %v3436, %v3474
    %v3483 = vmul.f32 %v3441, %v3475
    %v3484 = vmul.f32 %v3446, %v3476
    %v3485 = vmul.f32 %v3451, %v3477
    %v3486 = vmul.f32 %v3456, %v3478
    %v3487 = vmul.f32 %v3461, %v3479
    %v3488 = vmul.f32 %v3466, %v3480
    %v3489 = vmul.f32 %v3471, %v3481
    %v3490 = vmul.f32 %v3482, 0.044715
    %v3491 = vmul.f32 %v3483, 0.044715
    %v3492 = vmul.f32 %v3484, 0.044715
    %v3493 = vmul.f32 %v3485, 0.044715
    %v3494 = vmul.f32 %v3486, 0.044715
    %v3495 = vmul.f32 %v3487, 0.044715
    %v3496 = vmul.f32 %v3488, 0.044715
    %v3497 = vmul.f32 %v3489, 0.044715
    %v3498 = vadd.f32 %v3436, %v3490
    %v3499 = vadd.f32 %v3441, %v3491
    %v3500 = vadd.f32 %v3446, %v3492
    %v3501 = vadd.f32 %v3451, %v3493
    %v3502 = vadd.f32 %v3456, %v3494
    %v3503 = vadd.f32 %v3461, %v3495
    %v3504 = vadd.f32 %v3466, %v3496
    %v3505 = vadd.f32 %v3471, %v3497
    %v3506 = vmul.f32 %v3498, 0.7978846
    %v3507 = vmul.f32 %v3499, 0.7978846
    %v3508 = vmul.f32 %v3500, 0.7978846
    %v3509 = vmul.f32 %v3501, 0.7978846
    %v3510 = vmul.f32 %v3502, 0.7978846
    %v3511 = vmul.f32 %v3503, 0.7978846
    %v3512 = vmul.f32 %v3504, 0.7978846
    %v3513 = vmul.f32 %v3505, 0.7978846
    %v3514 = vtanh.pop %v3506
    %v3515 = vtanh.pop %v3507
    %v3516 = vtanh.pop %v3508
    %v3517 = vtanh.pop %v3509
    %v3518 = vtanh.pop %v3510
    %v3519 = vtanh.pop %v3511
    %v3520 = vtanh.pop %v3512
    %v3521 = vtanh.pop %v3513
    %v3522 = vadd.f32 %v3514, 1.0
    %v3523 = vadd.f32 %v3515, 1.0
    %v3524 = vadd.f32 %v3516, 1.0
    %v3525 = vadd.f32 %v3517, 1.0
    %v3526 = vadd.f32 %v3518, 1.0
    %v3527 = vadd.f32 %v3519, 1.0
    %v3528 = vadd.f32 %v3520, 1.0
    %v3529 = vadd.f32 %v3521, 1.0
    %v3530 = vmul.f32 %v3522, 0.5
    %v3531 = vmul.f32 %v3523, 0.5
    %v3532 = vmul.f32 %v3524, 0.5
    %v3533 = vmul.f32 %v3525, 0.5
    %v3534 = vmul.f32 %v3526, 0.5
    %v3535 = vmul.f32 %v3527, 0.5
    %v3536 = vmul.f32 %v3528, 0.5
    %v3537 = vmul.f32 %v3529, 0.5
    %v3538 = vmul.f32 %v3436, %v3530
    %v3539 = vmul.f32 %v3441, %v3531
    %v3540 = vmul.f32 %v3446, %v3532
    %v3541 = vmul.f32 %v3451, %v3533
    %v3542 = vmul.f32 %v3456, %v3534
    %v3543 = vmul.f32 %v3461, %v3535
    %v3544 = vmul.f32 %v3466, %v3536
    %v3545 = vmul.f32 %v3471, %v3537
    %s3546 = scalar_lea.vmem %s9, 64
    %v3547 = vld [vmem:[%s3546] sm:$0xff]
    %v3548 = vld [vmem:[%s3546 + $0x8] sm:$0xff]
    %v3549 = vld [vmem:[%s3546 + $0x10] sm:$0xff]
    %v3550 = vld [vmem:[%s3546 + $0x18] sm:$0xff]
    %v3551 = vld [vmem:[%s3546 + $0x20] sm:$0xff]
    %v3552 = vld [vmem:[%s3546 + $0x28] sm:$0xff]
    %v3553 = vld [vmem:[%s3546 + $0x30] sm:$0xff]
    %v3554 = vld [vmem:[%s3546 + $0x38] sm:$0xff]
    %s3555 = scalar_lea.vmem %s6, 3
    %v3556 = vld [vmem:[%s3555] sm:$0x1]
    %v3558 = vlaneseq
    %v3559 = vshrl.u32 %v3558, 7
    %v3560 = vsub.s32 0, %v3559
    %v3561 = vrot.slane %v3556, %v3560
    %v3564 = vsel %vm527, %v3538, 0
    %v3567 = vsel %vm527, %v3539, 0
    %v3570 = vsel %vm527, %v3540, 0
    %v3573 = vsel %vm527, %v3541, 0
    %v3576 = vsel %vm527, %v3542, 0
    %v3579 = vsel %vm527, %v3543, 0
    %v3582 = vsel %vm527, %v3544, 0
    %v3585 = vsel %vm527, %v3545, 0
    %3587 = vmatprep.subr.mxu0 0.0
    %3588 = vmatpush1.msra.mxu0 %v3547
    %3589 = vmatprep.subr.mxu0 0.0
    %3590 = vmatpush1.msra.mxu0 %v3548
    %3591 = vmatprep.subr.mxu0 0.0
    %3592 = vmatpush1.msra.mxu0 %v3549
    %3593 = vmatprep.subr.mxu0 0.0
    %3594 = vmatpush1.msra.mxu0 %v3550
    %3595 = vmatprep.subr.mxu0 0.0
    %3596 = vmatpush1.msra.mxu0 %v3551
    %3597 = vmatprep.subr.mxu0 0.0
    %3598 = vmatpush1.msra.mxu0 %v3552
    %3599 = vmatprep.subr.mxu0 0.0
    %3600 = vmatpush1.msra.mxu0 %v3553
    %3601 = vmatprep.subr.mxu0 0.0
    %3602 = vmatpush1.msra.mxu0 %v3554
    %3603 = vmatprep.subr.mxu0 0.0
    %3604 = vmatpush1.msra.mxu0 0.0
    %3605 = vmatprep.subr.mxu0 0.0
    %3606 = vmatpush1.msra.mxu0 0.0
    %3607 = vmatprep.subr.mxu0 0.0
    %3608 = vmatpush1.msra.mxu0 0.0
    %3609 = vmatprep.subr.mxu0 0.0
    %3610 = vmatpush1.msra.mxu0 0.0
    %3611 = vmatprep.subr.mxu0 0.0
    %3612 = vmatpush1.msra.mxu0 0.0
    %3613 = vmatprep.subr.mxu0 0.0
    %3614 = vmatpush1.msra.mxu0 0.0
    %3615 = vmatprep.subr.mxu0 0.0
    %3616 = vmatpush1.msra.mxu0 0.0
    %3617 = vmatprep.subr.mxu0 0.0
    %3618 = vmatpush1.msra.mxu0 0.0
    %3619 = vmatprep.subr.mxu0 0.0
    %3620 = vmatpush1.msra.mxu0 0.0
    %3621 = vmatprep.subr.mxu0 0.0
    %3622 = vmatpush1.msra.mxu0 0.0
    %3623 = vmatprep.subr.mxu0 0.0
    %3624 = vmatpush1.msra.mxu0 0.0
    %3625 = vmatprep.subr.mxu0 0.0
    %3626 = vmatpush1.msra.mxu0 0.0
    %3627 = vmatprep.subr.mxu0 0.0
    %3628 = vmatpush1.msra.mxu0 0.0
    %3629 = vmatprep.subr.mxu0 0.0
    %3630 = vmatpush1.msra.mxu0 0.0
    %3631 = vmatprep.subr.mxu0 0.0
    %3632 = vmatpush1.msra.mxu0 0.0
    %3633 = vmatprep.subr.mxu0 0.0
    %3634 = vmatpush1.msra.mxu0 0.0
    %3635 = vmatprep.subr.mxu0 0.0
    %3636 = vmatpush1.msra.mxu0 0.0
    %3637 = vmatprep.subr.mxu0 0.0
    %3638 = vmatpush1.msra.mxu0 0.0
    %3639 = vmatprep.subr.mxu0 0.0
    %3640 = vmatpush1.msra.mxu0 0.0
    %3641 = vmatprep.subr.mxu0 0.0
    %3642 = vmatpush1.msra.mxu0 0.0
    %3643 = vmatprep.subr.mxu0 0.0
    %3644 = vmatpush1.msra.mxu0 0.0
    %3645 = vmatprep.subr.mxu0 0.0
    %3646 = vmatpush1.msra.mxu0 0.0
    %3647 = vmatprep.subr.mxu0 0.0
    %3648 = vmatpush1.msra.mxu0 0.0
    %3649 = vmatprep.subr.mxu0 0.0
    %3650 = vmatpush1.msra.mxu0 0.0
    %3651 = vmatprep.mubr.f32.mxu0 0.0
    %3652 = vmatmul.mubr.f32.gmra.mrb[0].mxu0 %v3564
    %v3653 = vpop.f32.mrb[0].mxu0
    %v3654 = vadd.f32 %v3561, %v3653
    %v3655 = vpop.f32.mrb[0].mxu0
    %3656 = vmatprep.mubr.f32.mxu0 0.0
    %3657 = vmatmul.mubr.f32.gmra.mrb[0].mxu0 %v3567
    %v3658 = vpop.f32.mrb[0].mxu0
    %v3659 = vadd.f32 %v3561, %v3658
    %v3660 = vpop.f32.mrb[0].mxu0
    %3661 = vmatprep.mubr.f32.mxu0 0.0
    %3662 = vmatmul.mubr.f32.gmra.mrb[0].mxu0 %v3570
    %v3663 = vpop.f32.mrb[0].mxu0
    %v3664 = vadd.f32 %v3561, %v3663
    %v3665 = vpop.f32.mrb[0].mxu0
    %3666 = vmatprep.mubr.f32.mxu0 0.0
    %3667 = vmatmul.mubr.f32.gmra.mrb[0].mxu0 %v3573
    %v3668 = vpop.f32.mrb[0].mxu0
    %v3669 = vadd.f32 %v3561, %v3668
    %v3670 = vpop.f32.mrb[0].mxu0
    %3671 = vmatprep.mubr.f32.mxu0 0.0
    %3672 = vmatmul.mubr.f32.gmra.mrb[0].mxu0 %v3576
    %v3673 = vpop.f32.mrb[0].mxu0
    %v3674 = vadd.f32 %v3561, %v3673
    %v3675 = vpop.f32.mrb[0].mxu0
    %3676 = vmatprep.mubr.f32.mxu0 0.0
    %3677 = vmatmul.mubr.f32.gmra.mrb[0].mxu0 %v3579
    %v3678 = vpop.f32.mrb[0].mxu0
    %v3679 = vadd.f32 %v3561, %v3678
    %v3680 = vpop.f32.mrb[0].mxu0
    %3681 = vmatprep.mubr.f32.mxu0 0.0
    %3682 = vmatmul.mubr.f32.gmra.mrb[0].mxu0 %v3582
    %v3683 = vpop.f32.mrb[0].mxu0
    %v3684 = vadd.f32 %v3561, %v3683
    %v3685 = vpop.f32.mrb[0].mxu0
    %3686 = vmatprep.mubr.f32.mxu0 0.0
    %3687 = vmatmul.mubr.f32.gmra.mrb[0].mxu0 %v3585
    %v3688 = vpop.f32.mrb[0].mxu0
    %v3689 = vadd.f32 %v3561, %v3688
    %v3690 = vpop.f32.mrb[0].mxu0
    %3691 = vdwg.mxu0
    %v3692 = vadd.f32 %v3324, %v3654
    %v3693 = vadd.f32 %v3325, %v3659
    %v3694 = vadd.f32 %v3326, %v3664
    %v3695 = vadd.f32 %v3327, %v3669
    %v3696 = vadd.f32 %v3328, %v3674
    %v3697 = vadd.f32 %v3329, %v3679
    %v3698 = vadd.f32 %v3330, %v3684
    %v3699 = vadd.f32 %v3331, %v3689
    %s3700 = scalar_lea.vmem %s2, 4
    %v3701 = vld [vmem:[%s3700] sm:$0x1]
    %s3702 = scalar_lea.vmem %s2, 9
    %v3703 = vld [vmem:[%s3702] sm:$0x1]
    %v3704 = vsel %vm75, %v3692, 0.0
    %3705 = vadd.xlane.f32.xlu0 %v3704
    %v3706 = vpop.xlane.xlu0 %3705
    %v3707 = vsel %vm75, %v3693, 0.0
    %3708 = vadd.xlane.f32.xlu0 %v3707
    %v3709 = vpop.xlane.xlu0 %3708
    %v3710 = vsel %vm75, %v3694, 0.0
    %3711 = vadd.xlane.f32.xlu0 %v3710
    %v3712 = vpop.xlane.xlu0 %3711
    %v3713 = vsel %vm75, %v3695, 0.0
    %3714 = vadd.xlane.f32.xlu0 %v3713
    %v3715 = vpop.xlane.xlu0 %3714
    %v3716 = vsel %vm75, %v3696, 0.0
    %3717 = vadd.xlane.f32.xlu0 %v3716
    %v3718 = vpop.xlane.xlu0 %3717
    %v3719 = vsel %vm75, %v3697, 0.0
    %3720 = vadd.xlane.f32.xlu0 %v3719
    %v3721 = vpop.xlane.xlu0 %3720
    %v3722 = vsel %vm75, %v3698, 0.0
    %3723 = vadd.xlane.f32.xlu0 %v3722
    %v3724 = vpop.xlane.xlu0 %3723
    %v3725 = vsel %vm75, %v3699, 0.0
    %3726 = vadd.xlane.f32.xlu0 %v3725
    %v3727 = vpop.xlane.xlu0 %3726
    %v3728 = vmul.f32 %v3706, %v100
    %v3729 = vmul.f32 %v3709, %v100
    %v3730 = vmul.f32 %v3712, %v100
    %v3731 = vmul.f32 %v3715, %v100
    %v3732 = vmul.f32 %v3718, %v100
    %v3733 = vmul.f32 %v3721, %v100
    %v3734 = vmul.f32 %v3724, %v100
    %v3735 = vmul.f32 %v3727, %v100
    %v3736 = vsub.f32 %v3692, %v3728
    %v3737 = vsub.f32 %v3693, %v3729
    %v3738 = vsub.f32 %v3694, %v3730
    %v3739 = vsub.f32 %v3695, %v3731
    %v3740 = vsub.f32 %v3696, %v3732
    %v3741 = vsub.f32 %v3697, %v3733
    %v3742 = vsub.f32 %v3698, %v3734
    %v3743 = vsub.f32 %v3699, %v3735
    %v3744 = vmul.f32 %v3736, %v3736
    %v3745 = vmul.f32 %v3737, %v3737
    %v3746 = vmul.f32 %v3738, %v3738
    %v3747 = vmul.f32 %v3739, %v3739
    %v3748 = vmul.f32 %v3740, %v3740
    %v3749 = vmul.f32 %v3741, %v3741
    %v3750 = vmul.f32 %v3742, %v3742
    %v3751 = vmul.f32 %v3743, %v3743
    %v3752 = vsel %vm75, %v3744, 0.0
    %3753 = vadd.xlane.f32.xlu0 %v3752
    %v3754 = vpop.xlane.xlu0 %3753
    %v3755 = vsel %vm75, %v3745, 0.0
    %3756 = vadd.xlane.f32.xlu0 %v3755
    %v3757 = vpop.xlane.xlu0 %3756
    %v3758 = vsel %vm75, %v3746, 0.0
    %3759 = vadd.xlane.f32.xlu0 %v3758
    %v3760 = vpop.xlane.xlu0 %3759
    %v3761 = vsel %vm75, %v3747, 0.0
    %3762 = vadd.xlane.f32.xlu0 %v3761
    %v3763 = vpop.xlane.xlu0 %3762
    %v3764 = vsel %vm75, %v3748, 0.0
    %3765 = vadd.xlane.f32.xlu0 %v3764
    %v3766 = vpop.xlane.xlu0 %3765
    %v3767 = vsel %vm75, %v3749, 0.0
    %3768 = vadd.xlane.f32.xlu0 %v3767
    %v3769 = vpop.xlane.xlu0 %3768
    %v3770 = vsel %vm75, %v3750, 0.0
    %3771 = vadd.xlane.f32.xlu0 %v3770
    %v3772 = vpop.xlane.xlu0 %3771
    %v3773 = vsel %vm75, %v3751, 0.0
    %3774 = vadd.xlane.f32.xlu0 %v3773
    %v3775 = vpop.xlane.xlu0 %3774
    %v3776 = vmul.f32 %v3754, %v100
    %v3777 = vmul.f32 %v3757, %v100
    %v3778 = vmul.f32 %v3760, %v100
    %v3779 = vmul.f32 %v3763, %v100
    %v3780 = vmul.f32 %v3766, %v100
    %v3781 = vmul.f32 %v3769, %v100
    %v3782 = vmul.f32 %v3772, %v100
    %v3783 = vmul.f32 %v3775, %v100
    %v3784 = vadd.f32 %v3776, 1e-12
    %v3785 = vadd.f32 %v3777, 1e-12
    %v3786 = vadd.f32 %v3778, 1e-12
    %v3787 = vadd.f32 %v3779, 1e-12
    %v3788 = vadd.f32 %v3780, 1e-12
    %v3789 = vadd.f32 %v3781, 1e-12
    %v3790 = vadd.f32 %v3782, 1e-12
    %v3791 = vadd.f32 %v3783, 1e-12
    %v3792 = vrsqrt.pop %v3784
    %v3793 = vrsqrt.pop %v3785
    %v3794 = vrsqrt.pop %v3786
    %v3795 = vrsqrt.pop %v3787
    %v3796 = vrsqrt.pop %v3788
    %v3797 = vrsqrt.pop %v3789
    %v3798 = vrsqrt.pop %v3790
    %v3799 = vrsqrt.pop %v3791
    %v3800 = vmul.f32 %v3736, %v3792
    %v3801 = vmul.f32 %v3737, %v3793
    %v3802 = vmul.f32 %v3738, %v3794
    %v3803 = vmul.f32 %v3739, %v3795
    %v3804 = vmul.f32 %v3740, %v3796
    %v3805 = vmul.f32 %v3741, %v3797
    %v3806 = vmul.f32 %v3742, %v3798
    %v3807 = vmul.f32 %v3743, %v3799
    %v3809 = vlaneseq
    %v3810 = vshrl.u32 %v3809, 7
    %v3811 = vsub.s32 0, %v3810
    %v3812 = vrot.slane %v3701, %v3811
    %v3814 = vmul.f32 %v3800, %v3812
    %v3815 = vmul.f32 %v3801, %v3812
    %v3816 = vmul.f32 %v3802, %v3812
    %v3817 = vmul.f32 %v3803, %v3812
    %v3818 = vmul.f32 %v3804, %v3812
    %v3819 = vmul.f32 %v3805, %v3812
    %v3820 = vmul.f32 %v3806, %v3812
    %v3821 = vmul.f32 %v3807, %v3812
    %v3823 = vlaneseq
    %v3824 = vshrl.u32 %v3823, 7
    %v3825 = vsub.s32 0, %v3824
    %v3826 = vrot.slane %v3703, %v3825
    %v3828 = vadd.f32 %v3814, %v3826
    %v3829 = vadd.f32 %v3815, %v3826
    %v3830 = vadd.f32 %v3816, %v3826
    %v3831 = vadd.f32 %v3817, %v3826
    %v3832 = vadd.f32 %v3818, %v3826
    %v3833 = vadd.f32 %v3819, %v3826
    %v3834 = vadd.f32 %v3820, %v3826
    %v3835 = vadd.f32 %v3821, %v3826
    %v3836 = vld [vmem:[%s11] sm:$0x7f]
    %v3838 = vsel %vm75, %v3836, 0
    %3840 = vmatprep.subr.mxu0 0.0
    %3841 = vmatpush1.msra.mxu0 %v3828
    %3842 = vmatprep.subr.mxu0 0.0
    %3843 = vmatpush1.msra.mxu0 %v3829
    %3844 = vmatprep.subr.mxu0 0.0
    %3845 = vmatpush1.msra.mxu0 %v3830
    %3846 = vmatprep.subr.mxu0 0.0
    %3847 = vmatpush1.msra.mxu0 %v3831
    %3848 = vmatprep.subr.mxu0 0.0
    %3849 = vmatpush1.msra.mxu0 0.0
    %3850 = vmatprep.subr.mxu0 0.0
    %3851 = vmatpush1.msra.mxu0 0.0
    %3852 = vmatprep.subr.mxu0 0.0
    %3853 = vmatpush1.msra.mxu0 0.0
    %3854 = vmatprep.subr.mxu0 0.0
    %3855 = vmatpush1.msra.mxu0 0.0
    %3856 = vmatprep.subr.mxu0 0.0
    %3857 = vmatpush1.msra.mxu0 0.0
    %3858 = vmatprep.subr.mxu0 0.0
    %3859 = vmatpush1.msra.mxu0 0.0
    %3860 = vmatprep.subr.mxu0 0.0
    %3861 = vmatpush1.msra.mxu0 0.0
    %3862 = vmatprep.subr.mxu0 0.0
    %3863 = vmatpush1.msra.mxu0 0.0
    %3864 = vmatprep.subr.mxu0 0.0
    %3865 = vmatpush1.msra.mxu0 0.0
    %3866 = vmatprep.subr.mxu0 0.0
    %3867 = vmatpush1.msra.mxu0 0.0
    %3868 = vmatprep.subr.mxu0 0.0
    %3869 = vmatpush1.msra.mxu0 0.0
    %3870 = vmatprep.subr.mxu0 0.0
    %3871 = vmatpush1.msra.mxu0 0.0
    %3872 = vmatprep.subr.mxu0 0.0
    %3873 = vmatpush1.msra.mxu0 0.0
    %3874 = vmatprep.subr.mxu0 0.0
    %3875 = vmatpush1.msra.mxu0 0.0
    %3876 = vmatprep.subr.mxu0 0.0
    %3877 = vmatpush1.msra.mxu0 0.0
    %3878 = vmatprep.subr.mxu0 0.0
    %3879 = vmatpush1.msra.mxu0 0.0
    %3880 = vmatprep.subr.mxu0 0.0
    %3881 = vmatpush1.msra.mxu0 0.0
    %3882 = vmatprep.subr.mxu0 0.0
    %3883 = vmatpush1.msra.mxu0 0.0
    %3884 = vmatprep.subr.mxu0 0.0
    %3885 = vmatpush1.msra.mxu0 0.0
    %3886 = vmatprep.subr.mxu0 0.0
    %3887 = vmatpush1.msra.mxu0 0.0
    %3888 = vmatprep.subr.mxu0 0.0
    %3889 = vmatpush1.msra.mxu0 0.0
    %3890 = vmatprep.subr.mxu0 0.0
    %3891 = vmatpush1.msra.mxu0 0.0
    %3892 = vmatprep.subr.mxu0 0.0
    %3893 = vmatpush1.msra.mxu0 0.0
    %3894 = vmatprep.subr.mxu0 0.0
    %3895 = vmatpush1.msra.mxu0 0.0
    %3896 = vmatprep.subr.mxu0 0.0
    %3897 = vmatpush1.msra.mxu0 0.0
    %3898 = vmatprep.subr.mxu0 0.0
    %3899 = vmatpush1.msra.mxu0 0.0
    %3900 = vmatprep.subr.mxu0 0.0
    %3901 = vmatpush1.msra.mxu0 0.0
    %3902 = vmatprep.subr.mxu0 0.0
    %3903 = vmatpush1.msra.mxu0 0.0
    %3904 = vmatprep.mubr.f32.mxu0 0.0
    %3905 = vmatmul.mubr.f32.gmra.mrb[0].mxu0 %v3838
    %v3906 = vpop.f32.mrb[0].mxu0
    %v3907 = vadd.f32 0.0, %v3906
    %v3908 = vpop.f32.mrb[0].mxu0
    %3909 = vdwg.mxu0
    %v3910 = vld [vmem:[%s10] sm:$0x1]
    %v3912 = vsel %vm75, %v3910, 0
    %v3915 = vsel %vm75, %v3907, 0
    %3917 = vmatprep.subr.mxu0 0.0
    %3918 = vmatpush1.xpose.msra.mxu0 %v3915
    %3919 = vmatprep.subr.mxu0 0.0
    %3920 = vmatpush1.xpose.msra.mxu0 0.0
    %3921 = vmatprep.subr.mxu0 0.0
    %3922 = vmatpush1.xpose.msra.mxu0 0.0
    %3923 = vmatprep.subr.mxu0 0.0
    %3924 = vmatpush1.xpose.msra.mxu0 0.0
    %3925 = vmatprep.subr.mxu0 0.0
    %3926 = vmatpush1.xpose.msra.mxu0 0.0
    %3927 = vmatprep.subr.mxu0 0.0
    %3928 = vmatpush1.xpose.msra.mxu0 0.0
    %3929 = vmatprep.subr.mxu0 0.0
    %3930 = vmatpush1.xpose.msra.mxu0 0.0
    %3931 = vmatprep.subr.mxu0 0.0
    %3932 = vmatpush1.xpose.msra.mxu0 0.0
    %3933 = vmatprep.subr.mxu0 0.0
    %3934 = vmatpush1.xpose.msra.mxu0 0.0
    %3935 = vmatprep.subr.mxu0 0.0
    %3936 = vmatpush1.xpose.msra.mxu0 0.0
    %3937 = vmatprep.subr.mxu0 0.0
    %3938 = vmatpush1.xpose.msra.mxu0 0.0
    %3939 = vmatprep.subr.mxu0 0.0
    %3940 = vmatpush1.xpose.msra.mxu0 0.0
    %3941 = vmatprep.subr.mxu0 0.0
    %3942 = vmatpush1.xpose.msra.mxu0 0.0
    %3943 = vmatprep.subr.mxu0 0.0
    %3944 = vmatpush1.xpose.msra.mxu0 0.0
    %3945 = vmatprep.subr.mxu0 0.0
    %3946 = vmatpush1.xpose.msra.mxu0 0.0
    %3947 = vmatprep.subr.mxu0 0.0
    %3948 = vmatpush1.xpose.msra.mxu0 0.0
    %3949 = vmatprep.subr.mxu0 0.0
    %3950 = vmatpush1.xpose.msra.mxu0 0.0
    %3951 = vmatprep.subr.mxu0 0.0
    %3952 = vmatpush1.xpose.msra.mxu0 0.0
    %3953 = vmatprep.subr.mxu0 0.0
    %3954 = vmatpush1.xpose.msra.mxu0 0.0
    %3955 = vmatprep.subr.mxu0 0.0
    %3956 = vmatpush1.xpose.msra.mxu0 0.0
    %3957 = vmatprep.subr.mxu0 0.0
    %3958 = vmatpush1.xpose.msra.mxu0 0.0
    %3959 = vmatprep.subr.mxu0 0.0
    %3960 = vmatpush1.xpose.msra.mxu0 0.0
    %3961 = vmatprep.subr.mxu0 0.0
    %3962 = vmatpush1.xpose.msra.mxu0 0.0
    %3963 = vmatprep.subr.mxu0 0.0
    %3964 = vmatpush1.xpose.msra.mxu0 0.0
    %3965 = vmatprep.subr.mxu0 0.0
    %3966 = vmatpush1.xpose.msra.mxu0 0.0
    %3967 = vmatprep.subr.mxu0 0.0
    %3968 = vmatpush1.xpose.msra.mxu0 0.0
    %3969 = vmatprep.subr.mxu0 0.0
    %3970 = vmatpush1.xpose.msra.mxu0 0.0
    %3971 = vmatprep.subr.mxu0 0.0
    %3972 = vmatpush1.xpose.msra.mxu0 0.0
    %3973 = vmatprep.subr.mxu0 0.0
    %3974 = vmatpush1.xpose.msra.mxu0 0.0
    %3975 = vmatprep.subr.mxu0 0.0
    %3976 = vmatpush1.xpose.msra.mxu0 0.0
    %3977 = vmatprep.subr.mxu0 0.0
    %3978 = vmatpush1.xpose.msra.mxu0 0.0
    %3979 = vmatprep.subr.mxu0 0.0
    %3980 = vmatpush1.xpose.msra.mxu0 0.0
    %3981 = vmatprep.mubr.f32.mxu0 0.0
    %3982 = vmatmul.mubr.f32.gmra.mrb[0].mxu0 %v3912
    %v3983 = vpop.f32.mrb[0].mxu0
    %v3984 = vadd.f32 0.0, %v3983
    %v3985 = vpop.f32.mrb[0].mxu0
    %3986 = vdwg.mxu0
    %vm3987 = vcmask 49152
    %v3988 = vsel %vm3987, %v3984, -inf
    %3989 = vmax.xlane.f32.xlu0 %v3988
    %v3990 = vpop.xlane.xlu0 %3989
    %v3991 = vsub.f32 %v3984, %v3990
    %v3992 = vmul.f32 %v3991, 1.442695
    %v3993 = vpow.pop %v3992
    %v3994 = vsel %vm3987, %v3993, 0.0
    %3995 = vadd.xlane.f32.xlu0 %v3994
    %v3996 = vpop.xlane.xlu0 %3995
    %v3997 = vlog2.pop %v3996
    %v3998 = vmul.f32 %v3997, 0.6931472
    %v3999 = vsub.f32 %v3991, %v3998
    %4000 = vmatprep.subr.mxu0 0.0
    %4001 = vmatpush1.msra.mxu0 %v3832
    %4002 = vmatprep.subr.mxu0 0.0
    %4003 = vmatpush1.msra.mxu0 %v3833
    %4004 = vmatprep.subr.mxu0 0.0
    %4005 = vmatpush1.msra.mxu0 %v3834
    %4006 = vmatprep.subr.mxu0 0.0
    %4007 = vmatpush1.msra.mxu0 %v3835
    %4008 = vmatprep.subr.mxu0 0.0
    %4009 = vmatpush1.msra.mxu0 0.0
    %4010 = vmatprep.subr.mxu0 0.0
    %4011 = vmatpush1.msra.mxu0 0.0
    %4012 = vmatprep.subr.mxu0 0.0
    %4013 = vmatpush1.msra.mxu0 0.0
    %4014 = vmatprep.subr.mxu0 0.0
    %4015 = vmatpush1.msra.mxu0 0.0
    %4016 = vmatprep.subr.mxu0 0.0
    %4017 = vmatpush1.msra.mxu0 0.0
    %4018 = vmatprep.subr.mxu0 0.0
    %4019 = vmatpush1.msra.mxu0 0.0
    %4020 = vmatprep.subr.mxu0 0.0
    %4021 = vmatpush1.msra.mxu0 0.0
    %4022 = vmatprep.subr.mxu0 0.0
    %4023 = vmatpush1.msra.mxu0 0.0
    %4024 = vmatprep.subr.mxu0 0.0
    %4025 = vmatpush1.msra.mxu0 0.0
    %4026 = vmatprep.subr.mxu0 0.0
    %4027 = vmatpush1.msra.mxu0 0.0
    %4028 = vmatprep.subr.mxu0 0.0
    %4029 = vmatpush1.msra.mxu0 0.0
    %4030 = vmatprep.subr.mxu0 0.0
    %4031 = vmatpush1.msra.mxu0 0.0
    %4032 = vmatprep.subr.mxu0 0.0
    %4033 = vmatpush1.msra.mxu0 0.0
    %4034 = vmatprep.subr.mxu0 0.0
    %4035 = vmatpush1.msra.mxu0 0.0
    %4036 = vmatprep.subr.mxu0 0.0
    %4037 = vmatpush1.msra.mxu0 0.0
    %4038 = vmatprep.subr.mxu0 0.0
    %4039 = vmatpush1.msra.mxu0 0.0
    %4040 = vmatprep.subr.mxu0 0.0
    %4041 = vmatpush1.msra.mxu0 0.0
    %4042 = vmatprep.subr.mxu0 0.0
    %4043 = vmatpush1.msra.mxu0 0.0
    %4044 = vmatprep.subr.mxu0 0.0
    %4045 = vmatpush1.msra.mxu0 0.0
    %4046 = vmatprep.subr.mxu0 0.0
    %4047 = vmatpush1.msra.mxu0 0.0
    %4048 = vmatprep.subr.mxu0 0.0
    %4049 = vmatpush1.msra.mxu0 0.0
    %4050 = vmatprep.subr.mxu0 0.0
    %4051 = vmatpush1.msra.mxu0 0.0
    %4052 = vmatprep.subr.mxu0 0.0
    %4053 = vmatpush1.msra.mxu0 0.0
    %4054 = vmatprep.subr.mxu0 0.0
    %4055 = vmatpush1.msra.mxu0 0.0
    %4056 = vmatprep.subr.mxu0 0.0
    %4057 = vmatpush1.msra.mxu0 0.0
    %4058 = vmatprep.subr.mxu0 0.0
    %4059 = vmatpush1.msra.mxu0 0.0
    %4060 = vmatprep.subr.mxu0 0.0
    %4061 = vmatpush1.msra.mxu0 0.0
    %4062 = vmatprep.subr.mxu0 0.0
    %4063 = vmatpush1.msra.mxu0 0.0
    %4064 = vmatprep.mubr.f32.mxu0 0.0
    %4065 = vmatmul.mubr.f32.gmra.mrb[0].mxu0 %v3838
    %v4066 = vpop.f32.mrb[0].mxu0
    %v4067 = vadd.f32 0.0, %v4066
    %v4068 = vpop.f32.mrb[0].mxu0
    %4069 = vdwg.mxu0
    %v4071 = vsel %vm75, %v4067, 0
    %4073 = vmatprep.subr.mxu0 0.0
    %4074 = vmatpush1.xpose.msra.mxu0 %v4071
    %4075 = vmatprep.subr.mxu0 0.0
    %4076 = vmatpush1.xpose.msra.mxu0 0.0
    %4077 = vmatprep.subr.mxu0 0.0
    %4078 = vmatpush1.xpose.msra.mxu0 0.0
    %4079 = vmatprep.subr.mxu0 0.0
    %4080 = vmatpush1.xpose.msra.mxu0 0.0
    %4081 = vmatprep.subr.mxu0 0.0
    %4082 = vmatpush1.xpose.msra.mxu0 0.0
    %4083 = vmatprep.subr.mxu0 0.0
    %4084 = vmatpush1.xpose.msra.mxu0 0.0
    %4085 = vmatprep.subr.mxu0 0.0
    %4086 = vmatpush1.xpose.msra.mxu0 0.0
    %4087 = vmatprep.subr.mxu0 0.0
    %4088 = vmatpush1.xpose.msra.mxu0 0.0
    %4089 = vmatprep.subr.mxu0 0.0
    %4090 = vmatpush1.xpose.msra.mxu0 0.0
    %4091 = vmatprep.subr.mxu0 0.0
    %4092 = vmatpush1.xpose.msra.mxu0 0.0
    %4093 = vmatprep.subr.mxu0 0.0
    %4094 = vmatpush1.xpose.msra.mxu0 0.0
    %4095 = vmatprep.subr.mxu0 0.0
    %4096 = vmatpush1.xpose.msra.mxu0 0.0
    %4097 = vmatprep.subr.mxu0 0.0
    %4098 = vmatpush1.xpose.msra.mxu0 0.0
    %4099 = vmatprep.subr.mxu0 0.0
    %4100 = vmatpush1.xpose.msra.mxu0 0.0
    %4101 = vmatprep.subr.mxu0 0.0
    %4102 = vmatpush1.xpose.msra.mxu0 0.0
    %4103 = vmatprep.subr.mxu0 0.0
    %4104 = vmatpush1.xpose.msra.mxu0 0.0
    %4105 = vmatprep.subr.mxu0 0.0
    %4106 = vmatpush1.xpose.msra.mxu0 0.0
    %4107 = vmatprep.subr.mxu0 0.0
    %4108 = vmatpush1.xpose.msra.mxu0 0.0
    %4109 = vmatprep.subr.mxu0 0.0
    %4110 = vmatpush1.xpose.msra.mxu0 0.0
    %4111 = vmatprep.subr.mxu0 0.0
    %4112 = vmatpush1.xpose.msra.mxu0 0.0
    %4113 = vmatprep.subr.mxu0 0.0
    %4114 = vmatpush1.xpose.msra.mxu0 0.0
    %4115 = vmatprep.subr.mxu0 0.0
    %4116 = vmatpush1.xpose.msra.mxu0 0.0
    %4117 = vmatprep.subr.mxu0 0.0
    %4118 = vmatpush1.xpose.msra.mxu0 0.0
    %4119 = vmatprep.subr.mxu0 0.0
    %4120 = vmatpush1.xpose.msra.mxu0 0.0
    %4121 = vmatprep.subr.mxu0 0.0
    %4122 = vmatpush1.xpose.msra.mxu0 0.0
    %4123 = vmatprep.subr.mxu0 0.0
    %4124 = vmatpush1.xpose.msra.mxu0 0.0
    %4125 = vmatprep.subr.mxu0 0.0
    %4126 = vmatpush1.xpose.msra.mxu0 0.0
    %4127 = vmatprep.subr.mxu0 0.0
    %4128 = vmatpush1.xpose.msra.mxu0 0.0
    %4129 = vmatprep.subr.mxu0 0.0
    %4130 = vmatpush1.xpose.msra.mxu0 0.0
    %4131 = vmatprep.subr.mxu0 0.0
    %4132 = vmatpush1.xpose.msra.mxu0 0.0
    %4133 = vmatprep.subr.mxu0 0.0
    %4134 = vmatpush1.xpose.msra.mxu0 0.0
    %4135 = vmatprep.subr.mxu0 0.0
    %4136 = vmatpush1.xpose.msra.mxu0 0.0
    %4137 = vmatprep.mubr.f32.mxu0 0.0
    %4138 = vmatmul.mubr.f32.gmra.mrb[0].mxu0 %v3912
    %v4139 = vpop.f32.mrb[0].mxu0
    %v4140 = vadd.f32 0.0, %v4139
    %v4141 = vpop.f32.mrb[0].mxu0
    %4142 = vdwg.mxu0
    %v4143 = vsel %vm3987, %v4140, -inf
    %4144 = vmax.xlane.f32.xlu0 %v4143
    %v4145 = vpop.xlane.xlu0 %4144
    %v4146 = vsub.f32 %v4140, %v4145
    %v4147 = vmul.f32 %v4146, 1.442695
    %v4148 = vpow.pop %v4147
    %v4149 = vsel %vm3987, %v4148, 0.0
    %4150 = vadd.xlane.f32.xlu0 %v4149
    %v4151 = vpop.xlane.xlu0 %4150
    %v4152 = vlog2.pop %v4151
    %v4153 = vmul.f32 %v4152, 0.6931472
    %v4154 = vsub.f32 %v4146, %v4153
    %v4156 = vrot.slane %v4154, 7
    %vm4158 = vcmask 1040384
    %v4159 = vsel %vm4158, %v3999, %v4156
    %vm4160 = vcmask 50176
    %4161 = vst.msk [vmem:[#allocation5] sm:$0x3] %vm4160, %v4159
    // Predicated region
    $region54: #{tpu_custom_call.1} parent=1 // pred_check
      _
    $region55: #{tpu_custom_call.1} parent=1 // pred_check_branch
      %4163 = sbr.rel (0) target = $region57
    $region56: #{tpu_custom_call.1} parent=1 // pred_region
      %s4165 = ssub.s32 32, 32
      %4166 = vsyncadd [#allocation4], %s4165
      %s4168 = sshll.u32 [#allocation5], 4
      %s4169 = int_to_ptr.vmem [resolvable:$true] %s4168
      %4171 = dma.vmem_to_hbm [thread:$0]  %s4169, 32, %s12, [#allocation4]
    $region57: #{tpu_custom_call.1} parent=1 // pred_fallthru
      _
    // Predicated region
    $region58: #{tpu_custom_call.1} parent=1 // pred_check
      _
    $region59: #{tpu_custom_call.1} parent=1 // pred_check_branch
      %4173 = sbr.rel (0) target = $region61
    $region60: #{tpu_custom_call.1} parent=1 // pred_region
      %4174 = dma.done [#allocation4], 32
    $region61: #{tpu_custom_call.1} parent=1 // pred_fallthru
      _
    %4175 = vsyncpa [#allocation3], 1
    %4176 = vsyncpa [#allocation4], 1

</llo_original>
